<compile_context>
chip_gen: v5e
topology: v5e:2x2
jax: 0.10.0
libtpu: 0.0.40
codegen_flags: <defaults>
</compile_context>

<pallas_src>
import math

import jax
import jax.numpy as jnp
from jax import lax
from jax.experimental import pallas as pl
from jax.experimental.pallas import tpu as pltpu

# ---------------------------------------------------------------------------
# Tiny llama-like config (synthetic, small shapes)
# ---------------------------------------------------------------------------
VOCAB = 64
HIDDEN = 32
N_HEADS = 2
HEAD_DIM = HIDDEN // N_HEADS
N_LAYERS = 2
MLP = 64
SEQ = 8
EPS = 1e-6
ATTN_SCALE = 1.0 / math.sqrt(HEAD_DIM)

B = 64            # batch of queries per pallas_call
B_TILE = 16       # sequences per grid step
ROWS = B_TILE * SEQ            # 128 rows per step -> full MXU rows
LOG2_SEQ = SEQ.bit_length() - 1
assert (1 << LOG2_SEQ) == SEQ


def _rmsnorm(x, w):
    var = jnp.mean(x * x, axis=-1, keepdims=True)
    return x * lax.rsqrt(var + EPS) * w


# flat indices into the packed weight slabs
def _aidx(li, slot, hi):      # slot: 0=q(scaled) 1=k 2=v 3=wo^T
    return (li * 4 + slot) * N_HEADS + hi


def _midx(li, slot):          # slot: 0=gate 1=up 2=down^T
    return li * 3 + slot


# ---------------------------------------------------------------------------
# Single fused Pallas kernel: whole forward pass for B_TILE sequences per step
# ---------------------------------------------------------------------------
def _fused_embed_kernel(tok_ref, embed_ref, norms_ref, wattn_ref, wmlp_ref,
                        out_ref):
    f32 = jnp.float32
    norms = norms_ref[...]                              # (2*N_LAYERS+1, HIDDEN)

    # ---- embedding lookup as one-hot matmul on the MXU (no XLA gather) ----
    tok = tok_ref[...]                                  # (ROWS, 1) int32
    vocab_iota = lax.broadcasted_iota(jnp.int32, (ROWS, VOCAB), 1)
    onehot = jnp.where(vocab_iota == tok, f32(1.0), f32(0.0))
    h = jnp.dot(onehot, embed_ref[...],
                preferred_element_type=f32)             # (ROWS, HIDDEN)

    # ---- block-diagonal causal additive bias, built once for all layers ----
    row = lax.broadcasted_iota(jnp.int32, (ROWS, ROWS), 0)
    col = lax.broadcasted_iota(jnp.int32, (ROWS, ROWS), 1)
    same_seq = jnp.right_shift(row, LOG2_SEQ) == jnp.right_shift(col, LOG2_SEQ)
    bias = jnp.where(same_seq & (col <= row), f32(0.0), f32(-1e30))

    # TODO(synk): rotary position embeddings of real llama2 are omitted in
    # this synthetic stand-in.
    first = None
    for li in range(N_LAYERS):                          # static unroll (2)
        # --- self-attention block: per-head weights, no lane slicing ---
        x = _rmsnorm(h, norms[li:li + 1, :])
        for hi in range(N_HEADS):
            q = jnp.dot(x, wattn_ref[_aidx(li, 0, hi)],   # scale pre-folded
                        preferred_element_type=f32)       # (ROWS, HEAD_DIM)
            k = jnp.dot(x, wattn_ref[_aidx(li, 1, hi)],
                        preferred_element_type=f32)
            v = jnp.dot(x, wattn_ref[_aidx(li, 2, hi)],
                        preferred_element_type=f32)
            s = lax.dot_general(q, k, (((1,), (1,)), ((), ())),
                                preferred_element_type=f32) + bias
            p = jnp.exp(s - jnp.max(s, axis=-1, keepdims=True))
            p = p * pl.reciprocal(jnp.sum(p, axis=-1, keepdims=True),
                                  approx=True)
            attn_h = jnp.dot(p, v, preferred_element_type=f32)
            # per-head output projection, wo stored transposed (HIDDEN, HEAD_DIM)
            h = h + lax.dot_general(attn_h, wattn_ref[_aidx(li, 3, hi)],
                                    (((1,), (1,)), ((), ())),
                                    preferred_element_type=f32)

        # --- SwiGLU MLP block ---
        x = _rmsnorm(h, norms[N_LAYERS + li:N_LAYERS + li + 1, :])
        gate = jnp.dot(x, wmlp_ref[_midx(li, 0)], preferred_element_type=f32)
        up = jnp.dot(x, wmlp_ref[_midx(li, 1)], preferred_element_type=f32)
        silu = gate * pl.reciprocal(1.0 + jnp.exp(-gate), approx=True)
        # down projection, wdown stored transposed (HIDDEN, MLP)
        h = h + lax.dot_general(silu * up, wmlp_ref[_midx(li, 2)],
                                (((1,), (1,)), ((), ())),
                                preferred_element_type=f32)

        if li == 0:
            first = h               # hidden_states[1] (output of layer 0)

    # hidden_states[-1] = final RMSNorm of the last layer output
    last = _rmsnorm(h, norms[2 * N_LAYERS:2 * N_LAYERS + 1, :])

    # fused epilogue: per-sequence mean of (first + last) via a pooling matmul
    prow = lax.broadcasted_iota(jnp.int32, (B_TILE, ROWS), 0)
    pcol = lax.broadcasted_iota(jnp.int32, (B_TILE, ROWS), 1)
    pool = jnp.where(jnp.right_shift(pcol, LOG2_SEQ) == prow,
                     f32(1.0 / SEQ), f32(0.0))
    out_ref[...] = jnp.dot(pool, first + last, preferred_element_type=f32)


def embed_forward(params, token_ids):
    """Batched forward: token_ids (B, SEQ) int -> (B, HIDDEN) f32."""
    batch = token_ids.shape[0]
    assert batch % B_TILE == 0
    tok2d = token_ids.astype(jnp.int32).reshape(batch * SEQ, 1)
    grid = (batch // B_TILE,)
    return pl.pallas_call(
        _fused_embed_kernel,
        out_shape=jax.ShapeDtypeStruct((batch, HIDDEN), jnp.float32),
        grid=grid,
        in_specs=[
            pl.BlockSpec((ROWS, 1), lambda b: (b, 0)),                 # tokens
            pl.BlockSpec((VOCAB, HIDDEN), lambda b: (0, 0)),           # embed
            pl.BlockSpec((2 * N_LAYERS + 1, HIDDEN), lambda b: (0, 0)),# norms
            pl.BlockSpec((N_LAYERS * 4 * N_HEADS, HIDDEN, HEAD_DIM),
                         lambda b: (0, 0, 0)),                         # attn W
            pl.BlockSpec((N_LAYERS * 3, HIDDEN, MLP),
                         lambda b: (0, 0, 0)),                         # mlp W
        ],
        out_specs=pl.BlockSpec((B_TILE, HIDDEN), lambda b: (b, 0)),
        compiler_params=pltpu.CompilerParams(
            dimension_semantics=("parallel",)),
    )(tok2d, params["embed"], params["norms"], params["wattn"],
      params["wmlp"])


# ---------------------------------------------------------------------------
# Deterministic parameter init (synthetic stand-in for llama2 weights),
# already in packed / per-head layout.
# ---------------------------------------------------------------------------
def init_params(key):
    def dense(k, shape):
        return (0.02 * jax.random.normal(k, shape)).astype(jnp.float32)

    keys = jax.random.split(key, 2 + N_LAYERS)
    embed_w = dense(keys[0], (VOCAB, HIDDEN))
    # RMSNorm weights ~1 with a small perturbation (keeps the check non-trivial)
    norms = (1.0 + 0.1 * jax.random.normal(
        keys[1], (2 * N_LAYERS + 1, HIDDEN))).astype(jnp.float32)

    attn_mats, mlp_mats = [], []
    for li in range(N_LAYERS):
        lk = jax.random.split(keys[2 + li], 7)
        wq = dense(lk[0], (HIDDEN, HIDDEN)) * jnp.float32(ATTN_SCALE)  # fold scale
        wk = dense(lk[1], (HIDDEN, HIDDEN))
        wv = dense(lk[2], (HIDDEN, HIDDEN))
        wo = dense(lk[3], (HIDDEN, HIDDEN))
        wg = dense(lk[4], (HIDDEN, MLP))
        wu = dense(lk[5], (HIDDEN, MLP))
        wd = dense(lk[6], (MLP, HIDDEN))

        def split_cols(w):
            return [w[:, hi * HEAD_DIM:(hi + 1) * HEAD_DIM]
                    for hi in range(N_HEADS)]

        woT = [wo[hi * HEAD_DIM:(hi + 1) * HEAD_DIM, :].T
               for hi in range(N_HEADS)]
        for slot_mats in (split_cols(wq), split_cols(wk), split_cols(wv), woT):
            attn_mats.extend(slot_mats)
        mlp_mats.extend([wg, wu, wd.T])

    return {
        "embed": embed_w,
        "norms": norms,
        "wattn": jnp.stack(attn_mats),   # (N_LAYERS*4*N_HEADS, HIDDEN, HEAD_DIM)
        "wmlp": jnp.stack(mlp_mats),     # (N_LAYERS*3, HIDDEN, MLP)
    }


# ---------------------------------------------------------------------------
# Pure-JAX reference (same math) for a correctness sanity check
# ---------------------------------------------------------------------------
def _embed_forward_ref_single(params, tokens):
    hp = lax.Precision.HIGHEST
    norms, wattn, wmlp = params["norms"], params["wattn"], params["wmlp"]
    h = params["embed"][tokens]                          # (SEQ, HIDDEN)
    row = lax.broadcasted_iota(jnp.int32, (SEQ, SEQ), 0)
    col = lax.broadcasted_iota(jnp.int32, (SEQ, SEQ), 1)
    causal = col <= row
    first = None
    for li in range(N_LAYERS):
        x = _rmsnorm(h, norms[li:li + 1, :])
        for hi in range(N_HEADS):
            q = jnp.dot(x, wattn[_aidx(li, 0, hi)], precision=hp)
            k = jnp.dot(x, wattn[_aidx(li, 1, hi)], precision=hp)
            v = jnp.dot(x, wattn[_aidx(li, 2, hi)], precision=hp)
            s = jnp.where(causal, jnp.dot(q, k.T, precision=hp),
                          jnp.float32(-1e30))
            p = jax.nn.softmax(s, axis=-1)
            h = h + jnp.dot(jnp.dot(p, v, precision=hp),
                            wattn[_aidx(li, 3, hi)].T, precision=hp)
        x = _rmsnorm(h, norms[N_LAYERS + li:N_LAYERS + li + 1, :])
        gate = jnp.dot(x, wmlp[_midx(li, 0)], precision=hp)
        up = jnp.dot(x, wmlp[_midx(li, 1)], precision=hp)
        h = h + jnp.dot(jax.nn.silu(gate) * up, wmlp[_midx(li, 2)].T,
                        precision=hp)
        if li == 0:
            first = h
    last = _rmsnorm(h, norms[2 * N_LAYERS:2 * N_LAYERS + 1, :])
    return jnp.mean(first + last, axis=0)


def embed_forward_ref(params, token_batch):
    return jax.vmap(lambda t: _embed_forward_ref_single(params, t))(token_batch)


# ---------------------------------------------------------------------------
if __name__ == "__main__":
    root = jax.random.PRNGKey(0)
    k_params, k_tokens = jax.random.split(root)

    params = init_params(k_params)
    # synthetic batch of "tokenized queries" (stand-in for the HF tokenizer)
    token_ids = jax.random.randint(k_tokens, (B, SEQ), 0, VOCAB)

    out = jax.jit(embed_forward)(params, token_ids)
    out = jax.block_until_ready(out)

    assert out.shape == (B, HIDDEN), out.shape
    assert out.dtype == jnp.float32, out.dtype
    assert bool(jnp.all(jnp.isfinite(out)))

    ref = embed_forward_ref(params, token_ids)
    assert bool(jnp.allclose(out, ref, rtol=2e-2, atol=5e-3)), (out, ref)

    print("KERNEL_OK")
</pallas_src>

<mosaic_0001>
module attributes {stable_mosaic.version = 11 : i64} {
  func.func @_fused_embed_kernel(%arg0: i32, %arg1: memref<128x1xi32, #tpu.memory_space<vmem>>, %arg2: memref<64x32xf32, #tpu.memory_space<vmem>>, %arg3: memref<5x32xf32, #tpu.memory_space<vmem>>, %arg4: memref<16x32x16xf32, #tpu.memory_space<vmem>>, %arg5: memref<6x32x64xf32, #tpu.memory_space<vmem>>, %arg6: memref<16x32xf32, #tpu.memory_space<vmem>>) attributes {dimension_semantics = [#tpu.dimension_semantics<parallel>], iteration_bounds = array<i64: 4>, scalar_prefetch = 0 : i64, scratch_operands = 0 : i64, tpu.core_type = #tpu.core_type<tc>, window_params = [{transform_indices = @transform_0, window_bounds = array<i64: 128, 1>}, {pipeline_mode = #tpu.pipeline_mode<synchronous>, transform_indices = @transform_1, window_bounds = array<i64: 64, 32>}, {pipeline_mode = #tpu.pipeline_mode<synchronous>, transform_indices = @transform_2, window_bounds = array<i64: 5, 32>}, {pipeline_mode = #tpu.pipeline_mode<synchronous>, transform_indices = @transform_3, window_bounds = array<i64: 16, 32, 16>}, {pipeline_mode = #tpu.pipeline_mode<synchronous>, transform_indices = @transform_4, window_bounds = array<i64: 6, 32, 64>}, {transform_indices = @transform_5, window_bounds = array<i64: 16, 32>}]} {
    %c0 = arith.constant 0 : index
    %c0_0 = arith.constant 0 : index
    %0 = vector.load %arg3[%c0, %c0_0] : memref<5x32xf32, #tpu.memory_space<vmem>>, vector<5x32xf32>
    %c0_1 = arith.constant 0 : index
    %c0_2 = arith.constant 0 : index
    %1 = vector.load %arg1[%c0_1, %c0_2] : memref<128x1xi32, #tpu.memory_space<vmem>>, vector<128x1xi32>
    %2 = tpu.iota {dimensions = array<i32: 1>} : vector<128x64xi32>
    %3 = vector.broadcast %1 : vector<128x1xi32> to vector<128x64xi32>
    %4 = arith.cmpi eq, %2, %3 : vector<128x64xi32>
    %cst = arith.constant 1.000000e+00 : f32
    %cst_3 = arith.constant 0.000000e+00 : f32
    %5 = vector.broadcast %cst : f32 to vector<128x64xf32>
    %6 = vector.broadcast %cst_3 : f32 to vector<128x64xf32>
    %7 = arith.select %4, %5, %6 : vector<128x64xi1>, vector<128x64xf32>
    %c0_4 = arith.constant 0 : index
    %c0_5 = arith.constant 0 : index
    %8 = vector.load %arg2[%c0_4, %c0_5] : memref<64x32xf32, #tpu.memory_space<vmem>>, vector<64x32xf32>
    %cst_6 = arith.constant dense<0.000000e+00> : vector<128x32xf32>
    %9 = tpu.matmul %7, %8, %cst_6 {dimension_numbers = #tpu.dot_dimension_numbers<[1], [0], [0], [1], [0, 0, 1, 1], [], []>} : vector<128x64xf32>, vector<64x32xf32>, vector<128x32xf32> -> vector<128x32xf32>
    %10 = tpu.iota {dimensions = array<i32: 0>} : vector<128x128xi32>
    %11 = tpu.iota {dimensions = array<i32: 1>} : vector<128x128xi32>
    %c3_i32 = arith.constant 3 : i32
    %12 = vector.broadcast %c3_i32 : i32 to vector<128x128xi32>
    %13 = arith.shrsi %10, %12 : vector<128x128xi32>
    %c3_i32_7 = arith.constant 3 : i32
    %14 = vector.broadcast %c3_i32_7 : i32 to vector<128x128xi32>
    %15 = arith.shrsi %11, %14 : vector<128x128xi32>
    %16 = arith.cmpi eq, %13, %15 : vector<128x128xi32>
    %17 = arith.cmpi sle, %11, %10 : vector<128x128xi32>
    %18 = arith.andi %16, %17 : vector<128x128xi1>
    %cst_8 = arith.constant 0.000000e+00 : f32
    %cst_9 = arith.constant -1.000000e+30 : f32
    %19 = vector.broadcast %cst_8 : f32 to vector<128x128xf32>
    %20 = vector.broadcast %cst_9 : f32 to vector<128x128xf32>
    %21 = arith.select %18, %19, %20 : vector<128x128xi1>, vector<128x128xf32>
    %22 = vector.extract_strided_slice %0 {offsets = [0, 0], sizes = [1, 32], strides = [1, 1]} : vector<5x32xf32> to vector<1x32xf32>
    %23 = arith.mulf %9, %9 : vector<128x32xf32>
    %cst_10 = arith.constant dense<0.000000e+00> : vector<128xf32>
    %24 = vector.multi_reduction <add>, %23, %cst_10 [1] : vector<128x32xf32> to vector<128xf32>
    %25 = vector.shape_cast %24 : vector<128xf32> to vector<128x1xf32>
    %cst_11 = arith.constant 3.200000e+01 : f32
    %26 = vector.broadcast %cst_11 : f32 to vector<128x1xf32>
    %27 = arith.divf %25, %26 : vector<128x1xf32>
    %cst_12 = arith.constant 9.99999997E-7 : f32
    %28 = vector.broadcast %cst_12 : f32 to vector<128x1xf32>
    %29 = arith.addf %27, %28 : vector<128x1xf32>
    %30 = math.rsqrt %29 : vector<128x1xf32>
    %31 = vector.broadcast %30 : vector<128x1xf32> to vector<128x32xf32>
    %32 = arith.mulf %9, %31 : vector<128x32xf32>
    %33 = vector.broadcast %22 : vector<1x32xf32> to vector<128x32xf32>
    %34 = arith.mulf %32, %33 : vector<128x32xf32>
    %c0_13 = arith.constant 0 : index
    %c0_14 = arith.constant 0 : index
    %c0_15 = arith.constant 0 : index
    %35 = vector.load %arg4[%c0_13, %c0_14, %c0_15] : memref<16x32x16xf32, #tpu.memory_space<vmem>>, vector<1x32x16xf32>
    %36 = vector.shape_cast %35 : vector<1x32x16xf32> to vector<32x16xf32>
    %cst_16 = arith.constant dense<0.000000e+00> : vector<128x16xf32>
    %37 = tpu.matmul %34, %36, %cst_16 {dimension_numbers = #tpu.dot_dimension_numbers<[1], [0], [0], [1], [0, 0, 1, 1], [], []>} : vector<128x32xf32>, vector<32x16xf32>, vector<128x16xf32> -> vector<128x16xf32>
    %c2 = arith.constant 2 : index
    %c0_17 = arith.constant 0 : index
    %c0_18 = arith.constant 0 : index
    %38 = vector.load %arg4[%c2, %c0_17, %c0_18] : memref<16x32x16xf32, #tpu.memory_space<vmem>>, vector<1x32x16xf32>
    %39 = vector.shape_cast %38 : vector<1x32x16xf32> to vector<32x16xf32>
    %cst_19 = arith.constant dense<0.000000e+00> : vector<128x16xf32>
    %40 = tpu.matmul %34, %39, %cst_19 {dimension_numbers = #tpu.dot_dimension_numbers<[1], [0], [0], [1], [0, 0, 1, 1], [], []>} : vector<128x32xf32>, vector<32x16xf32>, vector<128x16xf32> -> vector<128x16xf32>
    %c4 = arith.constant 4 : index
    %c0_20 = arith.constant 0 : index
    %c0_21 = arith.constant 0 : index
    %41 = vector.load %arg4[%c4, %c0_20, %c0_21] : memref<16x32x16xf32, #tpu.memory_space<vmem>>, vector<1x32x16xf32>
    %42 = vector.shape_cast %41 : vector<1x32x16xf32> to vector<32x16xf32>
    %cst_22 = arith.constant dense<0.000000e+00> : vector<128x16xf32>
    %43 = tpu.matmul %34, %42, %cst_22 {dimension_numbers = #tpu.dot_dimension_numbers<[1], [0], [0], [1], [0, 0, 1, 1], [], []>} : vector<128x32xf32>, vector<32x16xf32>, vector<128x16xf32> -> vector<128x16xf32>
    %cst_23 = arith.constant dense<0.000000e+00> : vector<128x128xf32>
    %44 = tpu.matmul %37, %40, %cst_23 {dimension_numbers = #tpu.dot_dimension_numbers<[1], [1], [0], [0], [0, 0, 1, 0], [], []>} : vector<128x16xf32>, vector<128x16xf32>, vector<128x128xf32> -> vector<128x128xf32>
    %45 = arith.addf %44, %21 : vector<128x128xf32>
    %cst_24 = arith.constant dense<0xFF800000> : vector<128xf32>
    %46 = vector.multi_reduction <maximumf>, %45, %cst_24 [1] : vector<128x128xf32> to vector<128xf32>
    %47 = vector.shape_cast %46 : vector<128xf32> to vector<128x1xf32>
    %48 = vector.broadcast %47 : vector<128x1xf32> to vector<128x128xf32>
    %49 = arith.subf %45, %48 : vector<128x128xf32>
    %50 = math.exp %49 : vector<128x128xf32>
    %cst_25 = arith.constant dense<0.000000e+00> : vector<128xf32>
    %51 = vector.multi_reduction <add>, %50, %cst_25 [1] : vector<128x128xf32> to vector<128xf32>
    %52 = vector.shape_cast %51 : vector<128xf32> to vector<128x1xf32>
    %53 = tpu.reciprocal %52 {approx = true} : vector<128x1xf32> -> vector<128x1xf32>
    %54 = vector.broadcast %53 : vector<128x1xf32> to vector<128x128xf32>
    %55 = arith.mulf %50, %54 : vector<128x128xf32>
    %cst_26 = arith.constant dense<0.000000e+00> : vector<128x16xf32>
    %56 = tpu.matmul %55, %43, %cst_26 {dimension_numbers = #tpu.dot_dimension_numbers<[1], [0], [0], [1], [0, 0, 1, 1], [], []>} : vector<128x128xf32>, vector<128x16xf32>, vector<128x16xf32> -> vector<128x16xf32>
    %c6 = arith.constant 6 : index
    %c0_27 = arith.constant 0 : index
    %c0_28 = arith.constant 0 : index
    %57 = vector.load %arg4[%c6, %c0_27, %c0_28] : memref<16x32x16xf32, #tpu.memory_space<vmem>>, vector<1x32x16xf32>
    %58 = vector.shape_cast %57 : vector<1x32x16xf32> to vector<32x16xf32>
    %cst_29 = arith.constant dense<0.000000e+00> : vector<128x32xf32>
    %59 = tpu.matmul %56, %58, %cst_29 {dimension_numbers = #tpu.dot_dimension_numbers<[1], [1], [0], [0], [0, 0, 1, 0], [], []>} : vector<128x16xf32>, vector<32x16xf32>, vector<128x32xf32> -> vector<128x32xf32>
    %60 = arith.addf %9, %59 : vector<128x32xf32>
    %c1 = arith.constant 1 : index
    %c0_30 = arith.constant 0 : index
    %c0_31 = arith.constant 0 : index
    %61 = vector.load %arg4[%c1, %c0_30, %c0_31] : memref<16x32x16xf32, #tpu.memory_space<vmem>>, vector<1x32x16xf32>
    %62 = vector.shape_cast %61 : vector<1x32x16xf32> to vector<32x16xf32>
    %cst_32 = arith.constant dense<0.000000e+00> : vector<128x16xf32>
    %63 = tpu.matmul %34, %62, %cst_32 {dimension_numbers = #tpu.dot_dimension_numbers<[1], [0], [0], [1], [0, 0, 1, 1], [], []>} : vector<128x32xf32>, vector<32x16xf32>, vector<128x16xf32> -> vector<128x16xf32>
    %c3 = arith.constant 3 : index
    %c0_33 = arith.constant 0 : index
    %c0_34 = arith.constant 0 : index
    %64 = vector.load %arg4[%c3, %c0_33, %c0_34] : memref<16x32x16xf32, #tpu.memory_space<vmem>>, vector<1x32x16xf32>
    %65 = vector.shape_cast %64 : vector<1x32x16xf32> to vector<32x16xf32>
    %cst_35 = arith.constant dense<0.000000e+00> : vector<128x16xf32>
    %66 = tpu.matmul %34, %65, %cst_35 {dimension_numbers = #tpu.dot_dimension_numbers<[1], [0], [0], [1], [0, 0, 1, 1], [], []>} : vector<128x32xf32>, vector<32x16xf32>, vector<128x16xf32> -> vector<128x16xf32>
    %c5 = arith.constant 5 : index
    %c0_36 = arith.constant 0 : index
    %c0_37 = arith.constant 0 : index
    %67 = vector.load %arg4[%c5, %c0_36, %c0_37] : memref<16x32x16xf32, #tpu.memory_space<vmem>>, vector<1x32x16xf32>
    %68 = vector.shape_cast %67 : vector<1x32x16xf32> to vector<32x16xf32>
    %cst_38 = arith.constant dense<0.000000e+00> : vector<128x16xf32>
    %69 = tpu.matmul %34, %68, %cst_38 {dimension_numbers = #tpu.dot_dimension_numbers<[1], [0], [0], [1], [0, 0, 1, 1], [], []>} : vector<128x32xf32>, vector<32x16xf32>, vector<128x16xf32> -> vector<128x16xf32>
    %cst_39 = arith.constant dense<0.000000e+00> : vector<128x128xf32>
    %70 = tpu.matmul %63, %66, %cst_39 {dimension_numbers = #tpu.dot_dimension_numbers<[1], [1], [0], [0], [0, 0, 1, 0], [], []>} : vector<128x16xf32>, vector<128x16xf32>, vector<128x128xf32> -> vector<128x128xf32>
    %71 = arith.addf %70, %21 : vector<128x128xf32>
    %cst_40 = arith.constant dense<0xFF800000> : vector<128xf32>
    %72 = vector.multi_reduction <maximumf>, %71, %cst_40 [1] : vector<128x128xf32> to vector<128xf32>
    %73 = vector.shape_cast %72 : vector<128xf32> to vector<128x1xf32>
    %74 = vector.broadcast %73 : vector<128x1xf32> to vector<128x128xf32>
    %75 = arith.subf %71, %74 : vector<128x128xf32>
    %76 = math.exp %75 : vector<128x128xf32>
    %cst_41 = arith.constant dense<0.000000e+00> : vector<128xf32>
    %77 = vector.multi_reduction <add>, %76, %cst_41 [1] : vector<128x128xf32> to vector<128xf32>
    %78 = vector.shape_cast %77 : vector<128xf32> to vector<128x1xf32>
    %79 = tpu.reciprocal %78 {approx = true} : vector<128x1xf32> -> vector<128x1xf32>
    %80 = vector.broadcast %79 : vector<128x1xf32> to vector<128x128xf32>
    %81 = arith.mulf %76, %80 : vector<128x128xf32>
    %cst_42 = arith.constant dense<0.000000e+00> : vector<128x16xf32>
    %82 = tpu.matmul %81, %69, %cst_42 {dimension_numbers = #tpu.dot_dimension_numbers<[1], [0], [0], [1], [0, 0, 1, 1], [], []>} : vector<128x128xf32>, vector<128x16xf32>, vector<128x16xf32> -> vector<128x16xf32>
    %c7 = arith.constant 7 : index
    %c0_43 = arith.constant 0 : index
    %c0_44 = arith.constant 0 : index
    %83 = vector.load %arg4[%c7, %c0_43, %c0_44] : memref<16x32x16xf32, #tpu.memory_space<vmem>>, vector<1x32x16xf32>
    %84 = vector.shape_cast %83 : vector<1x32x16xf32> to vector<32x16xf32>
    %cst_45 = arith.constant dense<0.000000e+00> : vector<128x32xf32>
    %85 = tpu.matmul %82, %84, %cst_45 {dimension_numbers = #tpu.dot_dimension_numbers<[1], [1], [0], [0], [0, 0, 1, 0], [], []>} : vector<128x16xf32>, vector<32x16xf32>, vector<128x32xf32> -> vector<128x32xf32>
    %86 = arith.addf %60, %85 : vector<128x32xf32>
    %87 = vector.extract_strided_slice %0 {offsets = [2, 0], sizes = [1, 32], strides = [1, 1]} : vector<5x32xf32> to vector<1x32xf32>
    %88 = arith.mulf %86, %86 : vector<128x32xf32>
    %cst_46 = arith.constant dense<0.000000e+00> : vector<128xf32>
    %89 = vector.multi_reduction <add>, %88, %cst_46 [1] : vector<128x32xf32> to vector<128xf32>
    %90 = vector.shape_cast %89 : vector<128xf32> to vector<128x1xf32>
    %cst_47 = arith.constant 3.200000e+01 : f32
    %91 = vector.broadcast %cst_47 : f32 to vector<128x1xf32>
    %92 = arith.divf %90, %91 : vector<128x1xf32>
    %cst_48 = arith.constant 9.99999997E-7 : f32
    %93 = vector.broadcast %cst_48 : f32 to vector<128x1xf32>
    %94 = arith.addf %92, %93 : vector<128x1xf32>
    %95 = math.rsqrt %94 : vector<128x1xf32>
    %96 = vector.broadcast %95 : vector<128x1xf32> to vector<128x32xf32>
    %97 = arith.mulf %86, %96 : vector<128x32xf32>
    %98 = vector.broadcast %87 : vector<1x32xf32> to vector<128x32xf32>
    %99 = arith.mulf %97, %98 : vector<128x32xf32>
    %c0_49 = arith.constant 0 : index
    %c0_50 = arith.constant 0 : index
    %c0_51 = arith.constant 0 : index
    %100 = vector.load %arg5[%c0_49, %c0_50, %c0_51] : memref<6x32x64xf32, #tpu.memory_space<vmem>>, vector<1x32x64xf32>
    %101 = vector.shape_cast %100 : vector<1x32x64xf32> to vector<32x64xf32>
    %cst_52 = arith.constant dense<0.000000e+00> : vector<128x64xf32>
    %102 = tpu.matmul %99, %101, %cst_52 {dimension_numbers = #tpu.dot_dimension_numbers<[1], [0], [0], [1], [0, 0, 1, 1], [], []>} : vector<128x32xf32>, vector<32x64xf32>, vector<128x64xf32> -> vector<128x64xf32>
    %c1_53 = arith.constant 1 : index
    %c0_54 = arith.constant 0 : index
    %c0_55 = arith.constant 0 : index
    %103 = vector.load %arg5[%c1_53, %c0_54, %c0_55] : memref<6x32x64xf32, #tpu.memory_space<vmem>>, vector<1x32x64xf32>
    %104 = vector.shape_cast %103 : vector<1x32x64xf32> to vector<32x64xf32>
    %cst_56 = arith.constant dense<0.000000e+00> : vector<128x64xf32>
    %105 = tpu.matmul %99, %104, %cst_56 {dimension_numbers = #tpu.dot_dimension_numbers<[1], [0], [0], [1], [0, 0, 1, 1], [], []>} : vector<128x32xf32>, vector<32x64xf32>, vector<128x64xf32> -> vector<128x64xf32>
    %cst_57 = arith.constant 0.000000e+00 : f32
    %106 = vector.broadcast %cst_57 : f32 to vector<128x64xf32>
    %107 = arith.subf %106, %102 : vector<128x64xf32>
    %108 = math.exp %107 : vector<128x64xf32>
    %cst_58 = arith.constant 1.000000e+00 : f32
    %109 = vector.broadcast %cst_58 : f32 to vector<128x64xf32>
    %110 = arith.addf %109, %108 : vector<128x64xf32>
    %111 = tpu.reciprocal %110 {approx = true} : vector<128x64xf32> -> vector<128x64xf32>
    %112 = arith.mulf %102, %111 : vector<128x64xf32>
    %113 = arith.mulf %112, %105 : vector<128x64xf32>
    %c2_59 = arith.constant 2 : index
    %c0_60 = arith.constant 0 : index
    %c0_61 = arith.constant 0 : index
    %114 = vector.load %arg5[%c2_59, %c0_60, %c0_61] : memref<6x32x64xf32, #tpu.memory_space<vmem>>, vector<1x32x64xf32>
    %115 = vector.shape_cast %114 : vector<1x32x64xf32> to vector<32x64xf32>
    %cst_62 = arith.constant dense<0.000000e+00> : vector<128x32xf32>
    %116 = tpu.matmul %113, %115, %cst_62 {dimension_numbers = #tpu.dot_dimension_numbers<[1], [1], [0], [0], [0, 0, 1, 0], [], []>} : vector<128x64xf32>, vector<32x64xf32>, vector<128x32xf32> -> vector<128x32xf32>
    %117 = arith.addf %86, %116 : vector<128x32xf32>
    %118 = vector.extract_strided_slice %0 {offsets = [1, 0], sizes = [1, 32], strides = [1, 1]} : vector<5x32xf32> to vector<1x32xf32>
    %119 = arith.mulf %117, %117 : vector<128x32xf32>
    %cst_63 = arith.constant dense<0.000000e+00> : vector<128xf32>
    %120 = vector.multi_reduction <add>, %119, %cst_63 [1] : vector<128x32xf32> to vector<128xf32>
    %121 = vector.shape_cast %120 : vector<128xf32> to vector<128x1xf32>
    %cst_64 = arith.constant 3.200000e+01 : f32
    %122 = vector.broadcast %cst_64 : f32 to vector<128x1xf32>
    %123 = arith.divf %121, %122 : vector<128x1xf32>
    %cst_65 = arith.constant 9.99999997E-7 : f32
    %124 = vector.broadcast %cst_65 : f32 to vector<128x1xf32>
    %125 = arith.addf %123, %124 : vector<128x1xf32>
    %126 = math.rsqrt %125 : vector<128x1xf32>
    %127 = vector.broadcast %126 : vector<128x1xf32> to vector<128x32xf32>
    %128 = arith.mulf %117, %127 : vector<128x32xf32>
    %129 = vector.broadcast %118 : vector<1x32xf32> to vector<128x32xf32>
    %130 = arith.mulf %128, %129 : vector<128x32xf32>
    %c8 = arith.constant 8 : index
    %c0_66 = arith.constant 0 : index
    %c0_67 = arith.constant 0 : index
    %131 = vector.load %arg4[%c8, %c0_66, %c0_67] : memref<16x32x16xf32, #tpu.memory_space<vmem>>, vector<1x32x16xf32>
    %132 = vector.shape_cast %131 : vector<1x32x16xf32> to vector<32x16xf32>
    %cst_68 = arith.constant dense<0.000000e+00> : vector<128x16xf32>
    %133 = tpu.matmul %130, %132, %cst_68 {dimension_numbers = #tpu.dot_dimension_numbers<[1], [0], [0], [1], [0, 0, 1, 1], [], []>} : vector<128x32xf32>, vector<32x16xf32>, vector<128x16xf32> -> vector<128x16xf32>
    %c10 = arith.constant 10 : index
    %c0_69 = arith.constant 0 : index
    %c0_70 = arith.constant 0 : index
    %134 = vector.load %arg4[%c10, %c0_69, %c0_70] : memref<16x32x16xf32, #tpu.memory_space<vmem>>, vector<1x32x16xf32>
    %135 = vector.shape_cast %134 : vector<1x32x16xf32> to vector<32x16xf32>
    %cst_71 = arith.constant dense<0.000000e+00> : vector<128x16xf32>
    %136 = tpu.matmul %130, %135, %cst_71 {dimension_numbers = #tpu.dot_dimension_numbers<[1], [0], [0], [1], [0, 0, 1, 1], [], []>} : vector<128x32xf32>, vector<32x16xf32>, vector<128x16xf32> -> vector<128x16xf32>
    %c12 = arith.constant 12 : index
    %c0_72 = arith.constant 0 : index
    %c0_73 = arith.constant 0 : index
    %137 = vector.load %arg4[%c12, %c0_72, %c0_73] : memref<16x32x16xf32, #tpu.memory_space<vmem>>, vector<1x32x16xf32>
    %138 = vector.shape_cast %137 : vector<1x32x16xf32> to vector<32x16xf32>
    %cst_74 = arith.constant dense<0.000000e+00> : vector<128x16xf32>
    %139 = tpu.matmul %130, %138, %cst_74 {dimension_numbers = #tpu.dot_dimension_numbers<[1], [0], [0], [1], [0, 0, 1, 1], [], []>} : vector<128x32xf32>, vector<32x16xf32>, vector<128x16xf32> -> vector<128x16xf32>
    %cst_75 = arith.constant dense<0.000000e+00> : vector<128x128xf32>
    %140 = tpu.matmul %133, %136, %cst_75 {dimension_numbers = #tpu.dot_dimension_numbers<[1], [1], [0], [0], [0, 0, 1, 0], [], []>} : vector<128x16xf32>, vector<128x16xf32>, vector<128x128xf32> -> vector<128x128xf32>
    %141 = arith.addf %140, %21 : vector<128x128xf32>
    %cst_76 = arith.constant dense<0xFF800000> : vector<128xf32>
    %142 = vector.multi_reduction <maximumf>, %141, %cst_76 [1] : vector<128x128xf32> to vector<128xf32>
    %143 = vector.shape_cast %142 : vector<128xf32> to vector<128x1xf32>
    %144 = vector.broadcast %143 : vector<128x1xf32> to vector<128x128xf32>
    %145 = arith.subf %141, %144 : vector<128x128xf32>
    %146 = math.exp %145 : vector<128x128xf32>
    %cst_77 = arith.constant dense<0.000000e+00> : vector<128xf32>
    %147 = vector.multi_reduction <add>, %146, %cst_77 [1] : vector<128x128xf32> to vector<128xf32>
    %148 = vector.shape_cast %147 : vector<128xf32> to vector<128x1xf32>
    %149 = tpu.reciprocal %148 {approx = true} : vector<128x1xf32> -> vector<128x1xf32>
    %150 = vector.broadcast %149 : vector<128x1xf32> to vector<128x128xf32>
    %151 = arith.mulf %146, %150 : vector<128x128xf32>
    %cst_78 = arith.constant dense<0.000000e+00> : vector<128x16xf32>
    %152 = tpu.matmul %151, %139, %cst_78 {dimension_numbers = #tpu.dot_dimension_numbers<[1], [0], [0], [1], [0, 0, 1, 1], [], []>} : vector<128x128xf32>, vector<128x16xf32>, vector<128x16xf32> -> vector<128x16xf32>
    %c14 = arith.constant 14 : index
    %c0_79 = arith.constant 0 : index
    %c0_80 = arith.constant 0 : index
    %153 = vector.load %arg4[%c14, %c0_79, %c0_80] : memref<16x32x16xf32, #tpu.memory_space<vmem>>, vector<1x32x16xf32>
    %154 = vector.shape_cast %153 : vector<1x32x16xf32> to vector<32x16xf32>
    %cst_81 = arith.constant dense<0.000000e+00> : vector<128x32xf32>
    %155 = tpu.matmul %152, %154, %cst_81 {dimension_numbers = #tpu.dot_dimension_numbers<[1], [1], [0], [0], [0, 0, 1, 0], [], []>} : vector<128x16xf32>, vector<32x16xf32>, vector<128x32xf32> -> vector<128x32xf32>
    %156 = arith.addf %117, %155 : vector<128x32xf32>
    %c9 = arith.constant 9 : index
    %c0_82 = arith.constant 0 : index
    %c0_83 = arith.constant 0 : index
    %157 = vector.load %arg4[%c9, %c0_82, %c0_83] : memref<16x32x16xf32, #tpu.memory_space<vmem>>, vector<1x32x16xf32>
    %158 = vector.shape_cast %157 : vector<1x32x16xf32> to vector<32x16xf32>
    %cst_84 = arith.constant dense<0.000000e+00> : vector<128x16xf32>
    %159 = tpu.matmul %130, %158, %cst_84 {dimension_numbers = #tpu.dot_dimension_numbers<[1], [0], [0], [1], [0, 0, 1, 1], [], []>} : vector<128x32xf32>, vector<32x16xf32>, vector<128x16xf32> -> vector<128x16xf32>
    %c11 = arith.constant 11 : index
    %c0_85 = arith.constant 0 : index
    %c0_86 = arith.constant 0 : index
    %160 = vector.load %arg4[%c11, %c0_85, %c0_86] : memref<16x32x16xf32, #tpu.memory_space<vmem>>, vector<1x32x16xf32>
    %161 = vector.shape_cast %160 : vector<1x32x16xf32> to vector<32x16xf32>
    %cst_87 = arith.constant dense<0.000000e+00> : vector<128x16xf32>
    %162 = tpu.matmul %130, %161, %cst_87 {dimension_numbers = #tpu.dot_dimension_numbers<[1], [0], [0], [1], [0, 0, 1, 1], [], []>} : vector<128x32xf32>, vector<32x16xf32>, vector<128x16xf32> -> vector<128x16xf32>
    %c13 = arith.constant 13 : index
    %c0_88 = arith.constant 0 : index
    %c0_89 = arith.constant 0 : index
    %163 = vector.load %arg4[%c13, %c0_88, %c0_89] : memref<16x32x16xf32, #tpu.memory_space<vmem>>, vector<1x32x16xf32>
    %164 = vector.shape_cast %163 : vector<1x32x16xf32> to vector<32x16xf32>
    %cst_90 = arith.constant dense<0.000000e+00> : vector<128x16xf32>
    %165 = tpu.matmul %130, %164, %cst_90 {dimension_numbers = #tpu.dot_dimension_numbers<[1], [0], [0], [1], [0, 0, 1, 1], [], []>} : vector<128x32xf32>, vector<32x16xf32>, vector<128x16xf32> -> vector<128x16xf32>
    %cst_91 = arith.constant dense<0.000000e+00> : vector<128x128xf32>
    %166 = tpu.matmul %159, %162, %cst_91 {dimension_numbers = #tpu.dot_dimension_numbers<[1], [1], [0], [0], [0, 0, 1, 0], [], []>} : vector<128x16xf32>, vector<128x16xf32>, vector<128x128xf32> -> vector<128x128xf32>
    %167 = arith.addf %166, %21 : vector<128x128xf32>
    %cst_92 = arith.constant dense<0xFF800000> : vector<128xf32>
    %168 = vector.multi_reduction <maximumf>, %167, %cst_92 [1] : vector<128x128xf32> to vector<128xf32>
    %169 = vector.shape_cast %168 : vector<128xf32> to vector<128x1xf32>
    %170 = vector.broadcast %169 : vector<128x1xf32> to vector<128x128xf32>
    %171 = arith.subf %167, %170 : vector<128x128xf32>
    %172 = math.exp %171 : vector<128x128xf32>
    %cst_93 = arith.constant dense<0.000000e+00> : vector<128xf32>
    %173 = vector.multi_reduction <add>, %172, %cst_93 [1] : vector<128x128xf32> to vector<128xf32>
    %174 = vector.shape_cast %173 : vector<128xf32> to vector<128x1xf32>
    %175 = tpu.reciprocal %174 {approx = true} : vector<128x1xf32> -> vector<128x1xf32>
    %176 = vector.broadcast %175 : vector<128x1xf32> to vector<128x128xf32>
    %177 = arith.mulf %172, %176 : vector<128x128xf32>
    %cst_94 = arith.constant dense<0.000000e+00> : vector<128x16xf32>
    %178 = tpu.matmul %177, %165, %cst_94 {dimension_numbers = #tpu.dot_dimension_numbers<[1], [0], [0], [1], [0, 0, 1, 1], [], []>} : vector<128x128xf32>, vector<128x16xf32>, vector<128x16xf32> -> vector<128x16xf32>
    %c15 = arith.constant 15 : index
    %c0_95 = arith.constant 0 : index
    %c0_96 = arith.constant 0 : index
    %179 = vector.load %arg4[%c15, %c0_95, %c0_96] : memref<16x32x16xf32, #tpu.memory_space<vmem>>, vector<1x32x16xf32>
    %180 = vector.shape_cast %179 : vector<1x32x16xf32> to vector<32x16xf32>
    %cst_97 = arith.constant dense<0.000000e+00> : vector<128x32xf32>
    %181 = tpu.matmul %178, %180, %cst_97 {dimension_numbers = #tpu.dot_dimension_numbers<[1], [1], [0], [0], [0, 0, 1, 0], [], []>} : vector<128x16xf32>, vector<32x16xf32>, vector<128x32xf32> -> vector<128x32xf32>
    %182 = arith.addf %156, %181 : vector<128x32xf32>
    %183 = vector.extract_strided_slice %0 {offsets = [3, 0], sizes = [1, 32], strides = [1, 1]} : vector<5x32xf32> to vector<1x32xf32>
    %184 = arith.mulf %182, %182 : vector<128x32xf32>
    %cst_98 = arith.constant dense<0.000000e+00> : vector<128xf32>
    %185 = vector.multi_reduction <add>, %184, %cst_98 [1] : vector<128x32xf32> to vector<128xf32>
    %186 = vector.shape_cast %185 : vector<128xf32> to vector<128x1xf32>
    %cst_99 = arith.constant 3.200000e+01 : f32
    %187 = vector.broadcast %cst_99 : f32 to vector<128x1xf32>
    %188 = arith.divf %186, %187 : vector<128x1xf32>
    %cst_100 = arith.constant 9.99999997E-7 : f32
    %189 = vector.broadcast %cst_100 : f32 to vector<128x1xf32>
    %190 = arith.addf %188, %189 : vector<128x1xf32>
    %191 = math.rsqrt %190 : vector<128x1xf32>
    %192 = vector.broadcast %191 : vector<128x1xf32> to vector<128x32xf32>
    %193 = arith.mulf %182, %192 : vector<128x32xf32>
    %194 = vector.broadcast %183 : vector<1x32xf32> to vector<128x32xf32>
    %195 = arith.mulf %193, %194 : vector<128x32xf32>
    %c3_101 = arith.constant 3 : index
    %c0_102 = arith.constant 0 : index
    %c0_103 = arith.constant 0 : index
    %196 = vector.load %arg5[%c3_101, %c0_102, %c0_103] : memref<6x32x64xf32, #tpu.memory_space<vmem>>, vector<1x32x64xf32>
    %197 = vector.shape_cast %196 : vector<1x32x64xf32> to vector<32x64xf32>
    %cst_104 = arith.constant dense<0.000000e+00> : vector<128x64xf32>
    %198 = tpu.matmul %195, %197, %cst_104 {dimension_numbers = #tpu.dot_dimension_numbers<[1], [0], [0], [1], [0, 0, 1, 1], [], []>} : vector<128x32xf32>, vector<32x64xf32>, vector<128x64xf32> -> vector<128x64xf32>
    %c4_105 = arith.constant 4 : index
    %c0_106 = arith.constant 0 : index
    %c0_107 = arith.constant 0 : index
    %199 = vector.load %arg5[%c4_105, %c0_106, %c0_107] : memref<6x32x64xf32, #tpu.memory_space<vmem>>, vector<1x32x64xf32>
    %200 = vector.shape_cast %199 : vector<1x32x64xf32> to vector<32x64xf32>
    %cst_108 = arith.constant dense<0.000000e+00> : vector<128x64xf32>
    %201 = tpu.matmul %195, %200, %cst_108 {dimension_numbers = #tpu.dot_dimension_numbers<[1], [0], [0], [1], [0, 0, 1, 1], [], []>} : vector<128x32xf32>, vector<32x64xf32>, vector<128x64xf32> -> vector<128x64xf32>
    %cst_109 = arith.constant 0.000000e+00 : f32
    %202 = vector.broadcast %cst_109 : f32 to vector<128x64xf32>
    %203 = arith.subf %202, %198 : vector<128x64xf32>
    %204 = math.exp %203 : vector<128x64xf32>
    %cst_110 = arith.constant 1.000000e+00 : f32
    %205 = vector.broadcast %cst_110 : f32 to vector<128x64xf32>
    %206 = arith.addf %205, %204 : vector<128x64xf32>
    %207 = tpu.reciprocal %206 {approx = true} : vector<128x64xf32> -> vector<128x64xf32>
    %208 = arith.mulf %198, %207 : vector<128x64xf32>
    %209 = arith.mulf %208, %201 : vector<128x64xf32>
    %c5_111 = arith.constant 5 : index
    %c0_112 = arith.constant 0 : index
    %c0_113 = arith.constant 0 : index
    %210 = vector.load %arg5[%c5_111, %c0_112, %c0_113] : memref<6x32x64xf32, #tpu.memory_space<vmem>>, vector<1x32x64xf32>
    %211 = vector.shape_cast %210 : vector<1x32x64xf32> to vector<32x64xf32>
    %cst_114 = arith.constant dense<0.000000e+00> : vector<128x32xf32>
    %212 = tpu.matmul %209, %211, %cst_114 {dimension_numbers = #tpu.dot_dimension_numbers<[1], [1], [0], [0], [0, 0, 1, 0], [], []>} : vector<128x64xf32>, vector<32x64xf32>, vector<128x32xf32> -> vector<128x32xf32>
    %213 = arith.addf %182, %212 : vector<128x32xf32>
    %214 = vector.extract_strided_slice %0 {offsets = [4, 0], sizes = [1, 32], strides = [1, 1]} : vector<5x32xf32> to vector<1x32xf32>
    %215 = arith.mulf %213, %213 : vector<128x32xf32>
    %cst_115 = arith.constant dense<0.000000e+00> : vector<128xf32>
    %216 = vector.multi_reduction <add>, %215, %cst_115 [1] : vector<128x32xf32> to vector<128xf32>
    %217 = vector.shape_cast %216 : vector<128xf32> to vector<128x1xf32>
    %cst_116 = arith.constant 3.200000e+01 : f32
    %218 = vector.broadcast %cst_116 : f32 to vector<128x1xf32>
    %219 = arith.divf %217, %218 : vector<128x1xf32>
    %cst_117 = arith.constant 9.99999997E-7 : f32
    %220 = vector.broadcast %cst_117 : f32 to vector<128x1xf32>
    %221 = arith.addf %219, %220 : vector<128x1xf32>
    %222 = math.rsqrt %221 : vector<128x1xf32>
    %223 = vector.broadcast %222 : vector<128x1xf32> to vector<128x32xf32>
    %224 = arith.mulf %213, %223 : vector<128x32xf32>
    %225 = vector.broadcast %214 : vector<1x32xf32> to vector<128x32xf32>
    %226 = arith.mulf %224, %225 : vector<128x32xf32>
    %227 = tpu.iota {dimensions = array<i32: 0>} : vector<16x128xi32>
    %228 = tpu.iota {dimensions = array<i32: 1>} : vector<16x128xi32>
    %c3_i32_118 = arith.constant 3 : i32
    %229 = vector.broadcast %c3_i32_118 : i32 to vector<16x128xi32>
    %230 = arith.shrsi %228, %229 : vector<16x128xi32>
    %231 = arith.cmpi eq, %230, %227 : vector<16x128xi32>
    %cst_119 = arith.constant 1.250000e-01 : f32
    %cst_120 = arith.constant 0.000000e+00 : f32
    %232 = vector.broadcast %cst_119 : f32 to vector<16x128xf32>
    %233 = vector.broadcast %cst_120 : f32 to vector<16x128xf32>
    %234 = arith.select %231, %232, %233 : vector<16x128xi1>, vector<16x128xf32>
    %235 = arith.addf %117, %226 : vector<128x32xf32>
    %cst_121 = arith.constant dense<0.000000e+00> : vector<16x32xf32>
    %236 = tpu.matmul %234, %235, %cst_121 {dimension_numbers = #tpu.dot_dimension_numbers<[1], [0], [0], [1], [0, 0, 1, 1], [], []>} : vector<16x128xf32>, vector<128x32xf32>, vector<16x32xf32> -> vector<16x32xf32>
    %c0_122 = arith.constant 0 : index
    %c0_123 = arith.constant 0 : index
    %237 = vector.load %arg6[%c0_122, %c0_123] : memref<16x32xf32, #tpu.memory_space<vmem>>, vector<16x32xf32>
    tpu.vector_store %arg6[%c0_122, %c0_123], %236 {strides = array<i32>} : memref<16x32xf32, #tpu.memory_space<vmem>>, vector<16x32xf32>,
    return
  }
  func.func @transform_0(%arg0: i32) -> (i32, i32) {
    %c0_i32 = arith.constant 0 : i32
    %c0_i32_0 = arith.constant 0 : i32
    return %arg0, %c0_i32 : i32, i32
  }
  func.func @transform_1(%arg0: i32) -> (i32, i32) {
    %c0_i32 = arith.constant 0 : i32
    %c0_i32_0 = arith.constant 0 : i32
    %c0_i32_1 = arith.constant 0 : i32
    return %c0_i32, %c0_i32_0 : i32, i32
  }
  func.func @transform_2(%arg0: i32) -> (i32, i32) {
    %c0_i32 = arith.constant 0 : i32
    %c0_i32_0 = arith.constant 0 : i32
    %c0_i32_1 = arith.constant 0 : i32
    return %c0_i32, %c0_i32_0 : i32, i32
  }
  func.func @transform_3(%arg0: i32) -> (i32, i32, i32) {
    %c0_i32 = arith.constant 0 : i32
    %c0_i32_0 = arith.constant 0 : i32
    %c0_i32_1 = arith.constant 0 : i32
    %c0_i32_2 = arith.constant 0 : i32
    return %c0_i32, %c0_i32_0, %c0_i32_1 : i32, i32, i32
  }
  func.func @transform_4(%arg0: i32) -> (i32, i32, i32) {
    %c0_i32 = arith.constant 0 : i32
    %c0_i32_0 = arith.constant 0 : i32
    %c0_i32_1 = arith.constant 0 : i32
    %c0_i32_2 = arith.constant 0 : i32
    return %c0_i32, %c0_i32_0, %c0_i32_1 : i32, i32, i32
  }
  func.func @transform_5(%arg0: i32) -> (i32, i32) {
    %c0_i32 = arith.constant 0 : i32
    %c0_i32_0 = arith.constant 0 : i32
    return %arg0, %c0_i32 : i32, i32
  }
}

</mosaic_0001>

<llo_original>
// kernel: embed_forward.1
$region0: #{embed_forward.1}
  #allocation0 [shape = 'u32[]', space=smem, size = 0x4, offset = 0x4, fixed_abs, tag = 'smem constant byte address 0x4 - core index']
  #allocation1 [shape = 'u32[72,128]{1,0:T(1,128)}', space=vmem, size = 0x9000, scoped, tag = 'internal scratch']
  %s0 = inlined_call_operand.vmem [shape: s32[512,1], index: 0, kind: input, shape index: {}]
  %s1 = inlined_call_operand.vmem [shape: f32[64,32], index: 1, kind: input, shape index: {}]
  %s2 = inlined_call_operand.vmem [shape: f32[5,32], index: 2, kind: input, shape index: {}]
  %s3 = inlined_call_operand.vmem [shape: f32[16,32,16], index: 3, kind: input, shape index: {}]
  %s4 = inlined_call_operand.vmem [shape: f32[6,32,64], index: 4, kind: input, shape index: {}]
  %s5 = inlined_call_operand.vmem [shape: f32[64,32], index: 5, kind: output, shape index: {}]
  %s6 = sld [smem:[#allocation0]]
  $region53: #{embed_forward.1} parent=0
    _
  %s8 = ssub.s32 1, %s6
  %s9 = scalar_select 0, %s8, %s6
  loop: start=0, step=1, limit=6
  $region2: #{embed_forward.1} parent=0 // loop_pre_header
    _
  $region3: #{embed_forward.1} parent=0 // loop_header
    %s11 = sphi 0, %s15
    %p12 = scmp.ge.s32.totalorder %s11, 6
    %s21 = sphi 0, %s23
    %s24 = sphi 0, %s21
    %s25 = sphi 0, %s24
    %s41 = sphi 0, %s25
    %s45 = sphi 0, %s45
    %s47 = sphi 0, %s45
    %s48 = sphi 0, %s47
    %s62 = sphi 0, %s48
    %s66 = sphi 0, %s66
    %s68 = sphi 0, %s66
    %s69 = sphi 0, %s68
    %s83 = sphi 0, %s69
    %s87 = sphi 0, %s87
    %s89 = sphi 0, %s87
    %s90 = sphi 0, %s89
    %s104 = sphi 0, %s90
    %s108 = sphi 0, %s108
    %s110 = sphi 0, %s108
    %s111 = sphi 0, %s110
    %s125 = sphi 0, %s111
    %s131 = sphi 0, %s133
    %s134 = sphi 0, %s131
    %s135 = sphi 0, %s134
    %s151 = sphi 0, %s135
  $region4: #{embed_forward.1} parent=0 // loop_header_branch
    %14 = sbr.rel (%p12) target = $region8
  $region5: #{embed_forward.1} parent=0 // loop_body
    %s16 = ssub.s32 %s11, 1
    %s17 = ssub.s32 %s11, 2
    %s18 = sadd.s32 %s11, 1
    %s19 = ssub.s32 %s11, %s18
    %p20 = scmp.eq.s32.totalorder %s19, 0
    %s22 = sadd.s32 %s21, 1
    %s23 = scalar_select %p20, %s21, %s22
    %p26 = pneg %p20
    %p27 = scmp.eq.s32.totalorder %s11, 3
    %p28 = por %p26, %p27
    %p29 = scmp.ne.s32.totalorder %s21, %s24
    %p30 = scmp.eq.s32.totalorder %s11, 0
    %p31 = por %p29, %p30
    %p32 = scmp.ne.s32.totalorder %s21, %s24
    %p33 = scmp.eq.s32.totalorder %s16, 3
    %p34 = por %p32, %p33
    %p35 = scmp.ne.s32.totalorder %s24, %s25
    %p36 = scmp.eq.s32.totalorder %s16, 0
    %p37 = por %p35, %p36
    %p38 = scmp.ne.s32.totalorder %s24, %s25
    %p39 = scmp.eq.s32.totalorder %s17, 3
    %p40 = por %p38, %p39
    %p42 = scmp.ne.s32.totalorder %s25, %s41
    %p43 = scmp.eq.s32.totalorder %s17, 0
    %p44 = por %p42, %p43
    %s46 = sadd.s32 %s45, 1
    %p49 = scmp.eq.s32.totalorder %s11, 3
    %p50 = scmp.ne.s32.totalorder %s45, %s47
    %p51 = scmp.eq.s32.totalorder %s11, 0
    %p52 = por %p50, %p51
    %p53 = scmp.ne.s32.totalorder %s45, %s47
    %p54 = scmp.eq.s32.totalorder %s16, 3
    %p55 = por %p53, %p54
    %p56 = scmp.ne.s32.totalorder %s47, %s48
    %p57 = scmp.eq.s32.totalorder %s16, 0
    %p58 = por %p56, %p57
    %p59 = scmp.ne.s32.totalorder %s47, %s48
    %p60 = scmp.eq.s32.totalorder %s17, 3
    %p61 = por %p59, %p60
    %p63 = scmp.ne.s32.totalorder %s48, %s62
    %p64 = scmp.eq.s32.totalorder %s17, 0
    %p65 = por %p63, %p64
    %s67 = sadd.s32 %s66, 1
    %p70 = scmp.eq.s32.totalorder %s11, 3
    %p71 = scmp.ne.s32.totalorder %s66, %s68
    %p72 = scmp.eq.s32.totalorder %s11, 0
    %p73 = por %p71, %p72
    %p74 = scmp.ne.s32.totalorder %s66, %s68
    %p75 = scmp.eq.s32.totalorder %s16, 3
    %p76 = por %p74, %p75
    %p77 = scmp.ne.s32.totalorder %s68, %s69
    %p78 = scmp.eq.s32.totalorder %s16, 0
    %p79 = por %p77, %p78
    %p80 = scmp.ne.s32.totalorder %s68, %s69
    %p81 = scmp.eq.s32.totalorder %s17, 3
    %p82 = por %p80, %p81
    %p84 = scmp.ne.s32.totalorder %s69, %s83
    %p85 = scmp.eq.s32.totalorder %s17, 0
    %p86 = por %p84, %p85
    %s88 = sadd.s32 %s87, 1
    %p91 = scmp.eq.s32.totalorder %s11, 3
    %p92 = scmp.ne.s32.totalorder %s87, %s89
    %p93 = scmp.eq.s32.totalorder %s11, 0
    %p94 = por %p92, %p93
    %p95 = scmp.ne.s32.totalorder %s87, %s89
    %p96 = scmp.eq.s32.totalorder %s16, 3
    %p97 = por %p95, %p96
    %p98 = scmp.ne.s32.totalorder %s89, %s90
    %p99 = scmp.eq.s32.totalorder %s16, 0
    %p100 = por %p98, %p99
    %p101 = scmp.ne.s32.totalorder %s89, %s90
    %p102 = scmp.eq.s32.totalorder %s17, 3
    %p103 = por %p101, %p102
    %p105 = scmp.ne.s32.totalorder %s90, %s104
    %p106 = scmp.eq.s32.totalorder %s17, 0
    %p107 = por %p105, %p106
    %s109 = sadd.s32 %s108, 1
    %p112 = scmp.eq.s32.totalorder %s11, 3
    %p113 = scmp.ne.s32.totalorder %s108, %s110
    %p114 = scmp.eq.s32.totalorder %s11, 0
    %p115 = por %p113, %p114
    %p116 = scmp.ne.s32.totalorder %s108, %s110
    %p117 = scmp.eq.s32.totalorder %s16, 3
    %p118 = por %p116, %p117
    %p119 = scmp.ne.s32.totalorder %s110, %s111
    %p120 = scmp.eq.s32.totalorder %s16, 0
    %p121 = por %p119, %p120
    %p122 = scmp.ne.s32.totalorder %s110, %s111
    %p123 = scmp.eq.s32.totalorder %s17, 3
    %p124 = por %p122, %p123
    %p126 = scmp.ne.s32.totalorder %s111, %s125
    %p127 = scmp.eq.s32.totalorder %s17, 0
    %p128 = por %p126, %p127
    %s129 = ssub.s32 %s11, %s18
    %p130 = scmp.eq.s32.totalorder %s129, 0
    %s132 = sadd.s32 %s131, 1
    %s133 = scalar_select %p130, %s131, %s132
    %p136 = pneg %p130
    %p137 = scmp.eq.s32.totalorder %s11, 3
    %p138 = por %p136, %p137
    %p139 = scmp.ne.s32.totalorder %s131, %s134
    %p140 = scmp.eq.s32.totalorder %s11, 0
    %p141 = por %p139, %p140
    %p142 = scmp.ne.s32.totalorder %s131, %s134
    %p143 = scmp.eq.s32.totalorder %s16, 3
    %p144 = por %p142, %p143
    %p145 = scmp.ne.s32.totalorder %s134, %s135
    %p146 = scmp.eq.s32.totalorder %s16, 0
    %p147 = por %p145, %p146
    %p148 = scmp.ne.s32.totalorder %s134, %s135
    %p149 = scmp.eq.s32.totalorder %s17, 3
    %p150 = por %p148, %p149
    %p152 = scmp.ne.s32.totalorder %s135, %s151
    %p153 = scmp.eq.s32.totalorder %s17, 0
    %p154 = por %p152, %p153
    %p155 = scmp.le.s32.totalorder 1, %s11
    %p156 = scmp.lt.s32.totalorder %s11, 5
    %p157 = pnand %p155, %p156
    %p158 = pneg %p157
    // Predicated region
    $region9: #{embed_forward.1} parent=5 // pred_check
      _
    $region10: #{embed_forward.1} parent=5 // pred_check_branch
      %160 = sbr.rel (%p157) target = $region12
    $region11: #{embed_forward.1} parent=5 // pred_region
      %s161 = ssub.s32 %s11, 1
      // Predicated region
      $region13: #{embed_forward.1} parent=11 // pred_check
        %p162 = pneg %p58
      $region14: #{embed_forward.1} parent=11 // pred_check_branch
        %164 = sbr.rel (%p162) target = $region16
      $region15: #{embed_forward.1} parent=11 // pred_region
        _
      $region16: #{embed_forward.1} parent=11 // pred_fallthru
        _
      // Predicated region
      $region17: #{embed_forward.1} parent=11 // pred_check
        %p165 = pneg %p79
      $region18: #{embed_forward.1} parent=11 // pred_check_branch
        %167 = sbr.rel (%p165) target = $region20
      $region19: #{embed_forward.1} parent=11 // pred_region
        _
      $region20: #{embed_forward.1} parent=11 // pred_fallthru
        _
      // Predicated region
      $region21: #{embed_forward.1} parent=11 // pred_check
        %p168 = pneg %p100
      $region22: #{embed_forward.1} parent=11 // pred_check_branch
        %170 = sbr.rel (%p168) target = $region24
      $region23: #{embed_forward.1} parent=11 // pred_region
        _
      $region24: #{embed_forward.1} parent=11 // pred_fallthru
        _
      // Predicated region
      $region25: #{embed_forward.1} parent=11 // pred_check
        %p171 = pneg %p121
      $region26: #{embed_forward.1} parent=11 // pred_check_branch
        %173 = sbr.rel (%p171) target = $region28
      $region27: #{embed_forward.1} parent=11 // pred_region
        _
      $region28: #{embed_forward.1} parent=11 // pred_fallthru
        _
    $region12: #{embed_forward.1} parent=5 // pred_fallthru
      _
    %p174 = scmp.lt.s32.totalorder %s11, 4
    // Predicated region
    $region29: #{embed_forward.1} parent=5 // pred_check
      %p175 = pneg %p174
    $region30: #{embed_forward.1} parent=5 // pred_check_branch
      %177 = sbr.rel (%p175) target = $region32
    $region31: #{embed_forward.1} parent=5 // pred_region
      // Predicated region
      $region33: #{embed_forward.1} parent=31 // pred_check
        %p178 = pneg %p31
      $region34: #{embed_forward.1} parent=31 // pred_check_branch
        %180 = sbr.rel (%p178) target = $region36
      $region35: #{embed_forward.1} parent=31 // pred_region
        %s181 = smul.u32 16, %s11
        %p182 = scmp.lt.s32.totalorder %s181, 63
        %s183 = scalar_select %p182, %s181, 63
        %s184 = smul.addr %s183, 8
        %s185 = scalar_lea.vmem %s0, %s184
        %s186 = smul.u32 16, %s11
      $region36: #{embed_forward.1} parent=31 // pred_fallthru
        _
    $region32: #{embed_forward.1} parent=5 // pred_fallthru
      _
    %p187 = scmp.le.s32.totalorder 1, %s11
    %p188 = scmp.lt.s32.totalorder %s11, 5
    %p189 = pnand %p187, %p188
    %p190 = pneg %p189
    // Predicated region
    $region37: #{embed_forward.1} parent=5 // pred_check
      _
    $region38: #{embed_forward.1} parent=5 // pred_check_branch
      %192 = sbr.rel (%p189) target = $region40
    $region39: #{embed_forward.1} parent=5 // pred_region
      %s193 = ssub.s32 %s11, 1
      %s194 = smul.u32 16, %s16
      %p195 = scmp.lt.s32.totalorder %s194, 63
      %s196 = scalar_select %p195, %s194, 63
      %s197 = smul.addr %s196, 8
      %s198 = scalar_lea.vmem %s0, %s197
      %p199 = pneg %p37
      %p200 = pneg %p34
      %p201 = pneg %p58
      %p202 = pneg %p55
      %p203 = pneg %p79
      %p204 = pneg %p76
      %p205 = pneg %p100
      %p206 = pneg %p97
      %p207 = pneg %p121
      %p208 = pneg %p118
      %p209 = pneg %p147
      %p210 = pneg %p144
      %s211 = smul.u32 2, %s16
      %p212 = scmp.lt.s32.totalorder %s211, 7
      %s213 = scalar_select %p212, %s211, 7
      %s214 = smul.addr %s213, 8
      %s215 = scalar_lea.vmem %s5, %s214
      %s216 = smul.u32 16, %s16
      %p217 = scmp.lt.s32.totalorder %s216, 63
      %s218 = scalar_select %p217, %s216, 63
      %s219 = smul.addr %s218, 8
      %s220 = scalar_lea.vmem %s0, %s219
      %s221 = smul.u32 16, %s16
      %s222 = smul.u32 2, %s16
      %p223 = scmp.lt.s32.totalorder %s222, 7
      %s224 = scalar_select %p223, %s222, 7
      %s225 = smul.addr %s224, 8
      %s226 = scalar_lea.vmem %s5, %s225
      %s227 = smul.u32 2, %s16
      %v228 = vld [vmem:[%s2] sm:$0x1f]
      %v229 = vld [vmem:[%s220] sm:$0xff]
      %v230 = vld [vmem:[%s220 + $0x8] sm:$0xff]
      %v231 = vld [vmem:[%s220 + $0x10] sm:$0xff]
      %v232 = vld [vmem:[%s220 + $0x18] sm:$0xff]
      %v233 = vld [vmem:[%s220 + $0x20] sm:$0xff]
      %v234 = vld [vmem:[%s220 + $0x28] sm:$0xff]
      %v235 = vld [vmem:[%s220 + $0x30] sm:$0xff]
      %v236 = vld [vmem:[%s220 + $0x38] sm:$0xff]
      %v237 = vld [vmem:[%s220 + $0x40] sm:$0xff]
      %v238 = vld [vmem:[%s220 + $0x48] sm:$0xff]
      %v239 = vld [vmem:[%s220 + $0x50] sm:$0xff]
      %v240 = vld [vmem:[%s220 + $0x58] sm:$0xff]
      %v241 = vld [vmem:[%s220 + $0x60] sm:$0xff]
      %v242 = vld [vmem:[%s220 + $0x68] sm:$0xff]
      %v243 = vld [vmem:[%s220 + $0x70] sm:$0xff]
      %v244 = vld [vmem:[%s220 + $0x78] sm:$0xff]
      %v245 = vlaneseq
      %v246 = vand.u32 %v245, 127
      %247 = vset.pattern.permute.xlu0 0
      %248 = vperm.xlu0 %247, %v229
      %v249 = vpop.permute.xlu0 %248
      %250 = vset.pattern.permute.xlu0 0
      %251 = vperm.xlu0 %250, %v230
      %v252 = vpop.permute.xlu0 %251
      %253 = vset.pattern.permute.xlu0 0
      %254 = vperm.xlu0 %253, %v231
      %v255 = vpop.permute.xlu0 %254
      %256 = vset.pattern.permute.xlu0 0
      %257 = vperm.xlu0 %256, %v232
      %v258 = vpop.permute.xlu0 %257
      %259 = vset.pattern.permute.xlu0 0
      %260 = vperm.xlu0 %259, %v233
      %v261 = vpop.permute.xlu0 %260
      %262 = vset.pattern.permute.xlu0 0
      %263 = vperm.xlu0 %262, %v234
      %v264 = vpop.permute.xlu0 %263
      %265 = vset.pattern.permute.xlu0 0
      %266 = vperm.xlu0 %265, %v235
      %v267 = vpop.permute.xlu0 %266
      %268 = vset.pattern.permute.xlu0 0
      %269 = vperm.xlu0 %268, %v236
      %v270 = vpop.permute.xlu0 %269
      %271 = vset.pattern.permute.xlu0 0
      %272 = vperm.xlu0 %271, %v237
      %v273 = vpop.permute.xlu0 %272
      %274 = vset.pattern.permute.xlu0 0
      %275 = vperm.xlu0 %274, %v238
      %v276 = vpop.permute.xlu0 %275
      %277 = vset.pattern.permute.xlu0 0
      %278 = vperm.xlu0 %277, %v239
      %v279 = vpop.permute.xlu0 %278
      %280 = vset.pattern.permute.xlu0 0
      %281 = vperm.xlu0 %280, %v240
      %v282 = vpop.permute.xlu0 %281
      %283 = vset.pattern.permute.xlu0 0
      %284 = vperm.xlu0 %283, %v241
      %v285 = vpop.permute.xlu0 %284
      %286 = vset.pattern.permute.xlu0 0
      %287 = vperm.xlu0 %286, %v242
      %v288 = vpop.permute.xlu0 %287
      %289 = vset.pattern.permute.xlu0 0
      %290 = vperm.xlu0 %289, %v243
      %v291 = vpop.permute.xlu0 %290
      %292 = vset.pattern.permute.xlu0 0
      %293 = vperm.xlu0 %292, %v244
      %v294 = vpop.permute.xlu0 %293
      %vm295 = vcmp.eq.s32.totalorder %v246, %v249
      %vm296 = vcmp.eq.s32.totalorder %v246, %v252
      %vm297 = vcmp.eq.s32.totalorder %v246, %v255
      %vm298 = vcmp.eq.s32.totalorder %v246, %v258
      %vm299 = vcmp.eq.s32.totalorder %v246, %v261
      %vm300 = vcmp.eq.s32.totalorder %v246, %v264
      %vm301 = vcmp.eq.s32.totalorder %v246, %v267
      %vm302 = vcmp.eq.s32.totalorder %v246, %v270
      %vm303 = vcmp.eq.s32.totalorder %v246, %v273
      %vm304 = vcmp.eq.s32.totalorder %v246, %v276
      %vm305 = vcmp.eq.s32.totalorder %v246, %v279
      %vm306 = vcmp.eq.s32.totalorder %v246, %v282
      %vm307 = vcmp.eq.s32.totalorder %v246, %v285
      %vm308 = vcmp.eq.s32.totalorder %v246, %v288
      %vm309 = vcmp.eq.s32.totalorder %v246, %v291
      %vm310 = vcmp.eq.s32.totalorder %v246, %v294
      %v311 = vsel %vm295, 1.0, 0.0
      %v312 = vsel %vm296, 1.0, 0.0
      %v313 = vsel %vm297, 1.0, 0.0
      %v314 = vsel %vm298, 1.0, 0.0
      %v315 = vsel %vm299, 1.0, 0.0
      %v316 = vsel %vm300, 1.0, 0.0
      %v317 = vsel %vm301, 1.0, 0.0
      %v318 = vsel %vm302, 1.0, 0.0
      %v319 = vsel %vm303, 1.0, 0.0
      %v320 = vsel %vm304, 1.0, 0.0
      %v321 = vsel %vm305, 1.0, 0.0
      %v322 = vsel %vm306, 1.0, 0.0
      %v323 = vsel %vm307, 1.0, 0.0
      %v324 = vsel %vm308, 1.0, 0.0
      %v325 = vsel %vm309, 1.0, 0.0
      %v326 = vsel %vm310, 1.0, 0.0
      %v327 = vld [vmem:[%s1] sm:$0xff]
      %v328 = vld [vmem:[%s1 + $0x8] sm:$0xff]
      %v329 = vld [vmem:[%s1 + $0x10] sm:$0xff]
      %v330 = vld [vmem:[%s1 + $0x18] sm:$0xff]
      %v331 = vld [vmem:[%s1 + $0x20] sm:$0xff]
      %v332 = vld [vmem:[%s1 + $0x28] sm:$0xff]
      %v333 = vld [vmem:[%s1 + $0x30] sm:$0xff]
      %v334 = vld [vmem:[%s1 + $0x38] sm:$0xff]
      %vm335 = vcmask 523264
      %v337 = vsel %vm335, %v311, 0
      %v340 = vsel %vm335, %v312, 0
      %v343 = vsel %vm335, %v313, 0
      %v346 = vsel %vm335, %v314, 0
      %v349 = vsel %vm335, %v315, 0
      %v352 = vsel %vm335, %v316, 0
      %v355 = vsel %vm335, %v317, 0
      %v358 = vsel %vm335, %v318, 0
      %v361 = vsel %vm335, %v319, 0
      %v364 = vsel %vm335, %v320, 0
      %v367 = vsel %vm335, %v321, 0
      %v370 = vsel %vm335, %v322, 0
      %v373 = vsel %vm335, %v323, 0
      %v376 = vsel %vm335, %v324, 0
      %v379 = vsel %vm335, %v325, 0
      %v382 = vsel %vm335, %v326, 0
      %384 = vmatpush.msra.mxu0 0.0
      %385 = vmatpush.msra.mxu0 0.0
      %386 = vmatpush.msra.mxu0 0.0
      %387 = vmatpush.msra.mxu0 0.0
      %388 = vmatpush.msra.mxu0 0.0
      %389 = vmatpush.msra.mxu0 0.0
      %390 = vmatpush.msra.mxu0 0.0
      %391 = vmatpush.msra.mxu0 0.0
      %392 = vmatpush.msra.mxu0 %v334
      %393 = vmatpush.msra.mxu0 %v333
      %394 = vmatpush.msra.mxu0 %v332
      %395 = vmatpush.msra.mxu0 %v331
      %396 = vmatpush.msra.mxu0 %v330
      %397 = vmatpush.msra.mxu0 %v329
      %398 = vmatpush.msra.mxu0 %v328
      %399 = vmatpush.msra.mxu0 %v327
      %400 = vmatmul.f32.gmra.mxu0 %v337
      %v401 = vpop.f32.mrf.mxu0
      %v402 = vadd.f32 0.0, %v401
      %403 = vmatmul.f32.gmra.mxu0 %v340
      %v404 = vpop.f32.mrf.mxu0
      %v405 = vadd.f32 0.0, %v404
      %406 = vmatmul.f32.gmra.mxu0 %v343
      %v407 = vpop.f32.mrf.mxu0
      %v408 = vadd.f32 0.0, %v407
      %409 = vmatmul.f32.gmra.mxu0 %v346
      %v410 = vpop.f32.mrf.mxu0
      %v411 = vadd.f32 0.0, %v410
      %412 = vmatmul.f32.gmra.mxu0 %v349
      %v413 = vpop.f32.mrf.mxu0
      %v414 = vadd.f32 0.0, %v413
      %415 = vmatmul.f32.gmra.mxu0 %v352
      %v416 = vpop.f32.mrf.mxu0
      %v417 = vadd.f32 0.0, %v416
      %418 = vmatmul.f32.gmra.mxu0 %v355
      %v419 = vpop.f32.mrf.mxu0
      %v420 = vadd.f32 0.0, %v419
      %421 = vmatmul.f32.gmra.mxu0 %v358
      %v422 = vpop.f32.mrf.mxu0
      %v423 = vadd.f32 0.0, %v422
      %424 = vmatmul.f32.gmra.mxu0 %v361
      %v425 = vpop.f32.mrf.mxu0
      %v426 = vadd.f32 0.0, %v425
      %427 = vmatmul.f32.gmra.mxu0 %v364
      %v428 = vpop.f32.mrf.mxu0
      %v429 = vadd.f32 0.0, %v428
      %430 = vmatmul.f32.gmra.mxu0 %v367
      %v431 = vpop.f32.mrf.mxu0
      %v432 = vadd.f32 0.0, %v431
      %433 = vmatmul.f32.gmra.mxu0 %v370
      %v434 = vpop.f32.mrf.mxu0
      %v435 = vadd.f32 0.0, %v434
      %436 = vmatmul.f32.gmra.mxu0 %v373
      %v437 = vpop.f32.mrf.mxu0
      %v438 = vadd.f32 0.0, %v437
      %439 = vmatmul.f32.gmra.mxu0 %v376
      %v440 = vpop.f32.mrf.mxu0
      %v441 = vadd.f32 0.0, %v440
      %442 = vmatmul.f32.gmra.mxu0 %v379
      %v443 = vpop.f32.mrf.mxu0
      %v444 = vadd.f32 0.0, %v443
      %445 = vmatmul.f32.gmra.mxu0 %v382
      %v446 = vpop.f32.mrf.mxu0
      %v447 = vadd.f32 0.0, %v446
      %448 = vdwg.mxu0
      %v449 = vlaneseq
      %v450 = vshrl.u32 %v449, 7
      %v451 = vadd.s32 %v450, 8
      %v452 = vadd.s32 %v450, 16
      %v453 = vadd.s32 %v450, 24
      %v454 = vadd.s32 %v450, 32
      %v455 = vadd.s32 %v450, 40
      %v456 = vadd.s32 %v450, 48
      %v457 = vadd.s32 %v450, 56
      %v458 = vadd.s32 %v450, 64
      %v459 = vadd.s32 %v450, 72
      %v460 = vadd.s32 %v450, 80
      %v461 = vadd.s32 %v450, 88
      %v462 = vadd.s32 %v450, 96
      %v463 = vadd.s32 %v450, 104
      %v464 = vadd.s32 %v450, 112
      %v465 = vadd.s32 %v450, 120
      %v466 = vshra.s32 %v450, 3
      %v467 = vshra.s32 %v451, 3
      %v468 = vshra.s32 %v452, 3
      %v469 = vshra.s32 %v453, 3
      %v470 = vshra.s32 %v454, 3
      %v471 = vshra.s32 %v455, 3
      %v472 = vshra.s32 %v456, 3
      %v473 = vshra.s32 %v457, 3
      %v474 = vshra.s32 %v458, 3
      %v475 = vshra.s32 %v459, 3
      %v476 = vshra.s32 %v460, 3
      %v477 = vshra.s32 %v461, 3
      %v478 = vshra.s32 %v462, 3
      %v479 = vshra.s32 %v463, 3
      %v480 = vshra.s32 %v464, 3
      %v481 = vshra.s32 %v465, 3
      %v482 = vshra.s32 %v246, 3
      %vm483 = vcmp.eq.s32.totalorder %v466, %v482
      %vm484 = vcmp.eq.s32.totalorder %v467, %v482
      %vm485 = vcmp.eq.s32.totalorder %v468, %v482
      %vm486 = vcmp.eq.s32.totalorder %v469, %v482
      %vm487 = vcmp.eq.s32.totalorder %v470, %v482
      %vm488 = vcmp.eq.s32.totalorder %v471, %v482
      %vm489 = vcmp.eq.s32.totalorder %v472, %v482
      %vm490 = vcmp.eq.s32.totalorder %v473, %v482
      %vm491 = vcmp.eq.s32.totalorder %v474, %v482
      %vm492 = vcmp.eq.s32.totalorder %v475, %v482
      %vm493 = vcmp.eq.s32.totalorder %v476, %v482
      %vm494 = vcmp.eq.s32.totalorder %v477, %v482
      %vm495 = vcmp.eq.s32.totalorder %v478, %v482
      %vm496 = vcmp.eq.s32.totalorder %v479, %v482
      %vm497 = vcmp.eq.s32.totalorder %v480, %v482
      %vm498 = vcmp.eq.s32.totalorder %v481, %v482
      %vm499 = vcmp.le.s32.totalorder %v246, %v450
      %vm500 = vcmp.le.s32.totalorder %v246, %v451
      %vm501 = vcmp.le.s32.totalorder %v246, %v452
      %vm502 = vcmp.le.s32.totalorder %v246, %v453
      %vm503 = vcmp.le.s32.totalorder %v246, %v454
      %vm504 = vcmp.le.s32.totalorder %v246, %v455
      %vm505 = vcmp.le.s32.totalorder %v246, %v456
      %vm506 = vcmp.le.s32.totalorder %v246, %v457
      %vm507 = vcmp.le.s32.totalorder %v246, %v458
      %vm508 = vcmp.le.s32.totalorder %v246, %v459
      %vm509 = vcmp.le.s32.totalorder %v246, %v460
      %vm510 = vcmp.le.s32.totalorder %v246, %v461
      %vm511 = vcmp.le.s32.totalorder %v246, %v462
      %vm512 = vcmp.le.s32.totalorder %v246, %v463
      %vm513 = vcmp.le.s32.totalorder %v246, %v464
      %vm514 = vcmp.le.s32.totalorder %v246, %v465
      %vm515 = vmand %vm483, %vm499
      %vm516 = vmand %vm484, %vm500
      %vm517 = vmand %vm485, %vm501
      %vm518 = vmand %vm486, %vm502
      %vm519 = vmand %vm487, %vm503
      %vm520 = vmand %vm488, %vm504
      %vm521 = vmand %vm489, %vm505
      %vm522 = vmand %vm490, %vm506
      %vm523 = vmand %vm491, %vm507
      %vm524 = vmand %vm492, %vm508
      %vm525 = vmand %vm493, %vm509
      %vm526 = vmand %vm494, %vm510
      %vm527 = vmand %vm495, %vm511
      %vm528 = vmand %vm496, %vm512
      %vm529 = vmand %vm497, %vm513
      %vm530 = vmand %vm498, %vm514
      %v531 = vsel %vm515, 0.0, -1e+30
      %v532 = vsel %vm516, 0.0, -1e+30
      %v533 = vsel %vm517, 0.0, -1e+30
      %v534 = vsel %vm518, 0.0, -1e+30
      %v535 = vsel %vm519, 0.0, -1e+30
      %v536 = vsel %vm520, 0.0, -1e+30
      %v537 = vsel %vm521, 0.0, -1e+30
      %v538 = vsel %vm522, 0.0, -1e+30
      %v539 = vsel %vm523, 0.0, -1e+30
      %v540 = vsel %vm524, 0.0, -1e+30
      %v541 = vsel %vm525, 0.0, -1e+30
      %v542 = vsel %vm526, 0.0, -1e+30
      %v543 = vsel %vm527, 0.0, -1e+30
      %v544 = vsel %vm528, 0.0, -1e+30
      %v545 = vsel %vm529, 0.0, -1e+30
      %v546 = vsel %vm530, 0.0, -1e+30
      %v547 = vmul.f32 %v402, %v402
      %v548 = vmul.f32 %v405, %v405
      %v549 = vmul.f32 %v408, %v408
      %v550 = vmul.f32 %v411, %v411
      %v551 = vmul.f32 %v414, %v414
      %v552 = vmul.f32 %v417, %v417
      %v553 = vmul.f32 %v420, %v420
      %v554 = vmul.f32 %v423, %v423
      %v555 = vmul.f32 %v426, %v426
      %v556 = vmul.f32 %v429, %v429
      %v557 = vmul.f32 %v432, %v432
      %v558 = vmul.f32 %v435, %v435
      %v559 = vmul.f32 %v438, %v438
      %v560 = vmul.f32 %v441, %v441
      %v561 = vmul.f32 %v444, %v444
      %v562 = vmul.f32 %v447, %v447
      %vm563 = vcmask 261120
      %v564 = vsel %vm563, %v547, 0.0
      %565 = vadd.xlane.f32.xlu0 %v564
      %v566 = vpop.xlane.xlu0 %565
      %v567 = vsel %vm563, %v548, 0.0
      %568 = vadd.xlane.f32.xlu0 %v567
      %v569 = vpop.xlane.xlu0 %568
      %v570 = vsel %vm563, %v549, 0.0
      %571 = vadd.xlane.f32.xlu0 %v570
      %v572 = vpop.xlane.xlu0 %571
      %v573 = vsel %vm563, %v550, 0.0
      %574 = vadd.xlane.f32.xlu0 %v573
      %v575 = vpop.xlane.xlu0 %574
      %v576 = vsel %vm563, %v551, 0.0
      %577 = vadd.xlane.f32.xlu0 %v576
      %v578 = vpop.xlane.xlu0 %577
      %v579 = vsel %vm563, %v552, 0.0
      %580 = vadd.xlane.f32.xlu0 %v579
      %v581 = vpop.xlane.xlu0 %580
      %v582 = vsel %vm563, %v553, 0.0
      %583 = vadd.xlane.f32.xlu0 %v582
      %v584 = vpop.xlane.xlu0 %583
      %v585 = vsel %vm563, %v554, 0.0
      %586 = vadd.xlane.f32.xlu0 %v585
      %v587 = vpop.xlane.xlu0 %586
      %v588 = vsel %vm563, %v555, 0.0
      %589 = vadd.xlane.f32.xlu0 %v588
      %v590 = vpop.xlane.xlu0 %589
      %v591 = vsel %vm563, %v556, 0.0
      %592 = vadd.xlane.f32.xlu0 %v591
      %v593 = vpop.xlane.xlu0 %592
      %v594 = vsel %vm563, %v557, 0.0
      %595 = vadd.xlane.f32.xlu0 %v594
      %v596 = vpop.xlane.xlu0 %595
      %v597 = vsel %vm563, %v558, 0.0
      %598 = vadd.xlane.f32.xlu0 %v597
      %v599 = vpop.xlane.xlu0 %598
      %v600 = vsel %vm563, %v559, 0.0
      %601 = vadd.xlane.f32.xlu0 %v600
      %v602 = vpop.xlane.xlu0 %601
      %v603 = vsel %vm563, %v560, 0.0
      %604 = vadd.xlane.f32.xlu0 %v603
      %v605 = vpop.xlane.xlu0 %604
      %v606 = vsel %vm563, %v561, 0.0
      %607 = vadd.xlane.f32.xlu0 %v606
      %v608 = vpop.xlane.xlu0 %607
      %v609 = vsel %vm563, %v562, 0.0
      %610 = vadd.xlane.f32.xlu0 %v609
      %v611 = vpop.xlane.xlu0 %610
      %v612 = vrcp.pop 32.0
      %v613 = vmul.f32 32.0, %v612
      %v614 = vsub.f32 1.0, %v613
      %v615 = vmul.f32 %v612, %v614
      %v616 = vadd.f32 %v612, %v615
      %vm617 = vweird.f32 %v612
      %v618 = vsel %vm617, %v612, %v616
      %v619 = vmul.f32 %v566, %v618
      %v620 = vmul.f32 %v569, %v618
      %v621 = vmul.f32 %v572, %v618
      %v622 = vmul.f32 %v575, %v618
      %v623 = vmul.f32 %v578, %v618
      %v624 = vmul.f32 %v581, %v618
      %v625 = vmul.f32 %v584, %v618
      %v626 = vmul.f32 %v587, %v618
      %v627 = vmul.f32 %v590, %v618
      %v628 = vmul.f32 %v593, %v618
      %v629 = vmul.f32 %v596, %v618
      %v630 = vmul.f32 %v599, %v618
      %v631 = vmul.f32 %v602, %v618
      %v632 = vmul.f32 %v605, %v618
      %v633 = vmul.f32 %v608, %v618
      %v634 = vmul.f32 %v611, %v618
      %v635 = vadd.f32 %v619, 1e-06
      %v636 = vadd.f32 %v620, 1e-06
      %v637 = vadd.f32 %v621, 1e-06
      %v638 = vadd.f32 %v622, 1e-06
      %v639 = vadd.f32 %v623, 1e-06
      %v640 = vadd.f32 %v624, 1e-06
      %v641 = vadd.f32 %v625, 1e-06
      %v642 = vadd.f32 %v626, 1e-06
      %v643 = vadd.f32 %v627, 1e-06
      %v644 = vadd.f32 %v628, 1e-06
      %v645 = vadd.f32 %v629, 1e-06
      %v646 = vadd.f32 %v630, 1e-06
      %v647 = vadd.f32 %v631, 1e-06
      %v648 = vadd.f32 %v632, 1e-06
      %v649 = vadd.f32 %v633, 1e-06
      %v650 = vadd.f32 %v634, 1e-06
      %v651 = vrsqrt.pop %v635
      %v652 = vmul.f32 %v651, %v635
      %v653 = vmul.f32 %v652, %v651
      %v654 = vmul.f32 0.5, %v653
      %v655 = vsub.f32 1.5, %v654
      %v656 = vmul.f32 %v651, %v655
      %vm657 = vweird.f32 %v635
      %vm658 = vweird.f32 %v651
      %vm659 = vmor %vm657, %vm658
      %v660 = vsel %vm659, %v651, %v656
      %v661 = vrsqrt.pop %v636
      %v662 = vmul.f32 %v661, %v636
      %v663 = vmul.f32 %v662, %v661
      %v664 = vmul.f32 0.5, %v663
      %v665 = vsub.f32 1.5, %v664
      %v666 = vmul.f32 %v661, %v665
      %vm667 = vweird.f32 %v636
      %vm668 = vweird.f32 %v661
      %vm669 = vmor %vm667, %vm668
      %v670 = vsel %vm669, %v661, %v666
      %v671 = vrsqrt.pop %v637
      %v672 = vmul.f32 %v671, %v637
      %v673 = vmul.f32 %v672, %v671
      %v674 = vmul.f32 0.5, %v673
      %v675 = vsub.f32 1.5, %v674
      %v676 = vmul.f32 %v671, %v675
      %vm677 = vweird.f32 %v637
      %vm678 = vweird.f32 %v671
      %vm679 = vmor %vm677, %vm678
      %v680 = vsel %vm679, %v671, %v676
      %v681 = vrsqrt.pop %v638
      %v682 = vmul.f32 %v681, %v638
      %v683 = vmul.f32 %v682, %v681
      %v684 = vmul.f32 0.5, %v683
      %v685 = vsub.f32 1.5, %v684
      %v686 = vmul.f32 %v681, %v685
      %vm687 = vweird.f32 %v638
      %vm688 = vweird.f32 %v681
      %vm689 = vmor %vm687, %vm688
      %v690 = vsel %vm689, %v681, %v686
      %v691 = vrsqrt.pop %v639
      %v692 = vmul.f32 %v691, %v639
      %v693 = vmul.f32 %v692, %v691
      %v694 = vmul.f32 0.5, %v693
      %v695 = vsub.f32 1.5, %v694
      %v696 = vmul.f32 %v691, %v695
      %vm697 = vweird.f32 %v639
      %vm698 = vweird.f32 %v691
      %vm699 = vmor %vm697, %vm698
      %v700 = vsel %vm699, %v691, %v696
      %v701 = vrsqrt.pop %v640
      %v702 = vmul.f32 %v701, %v640
      %v703 = vmul.f32 %v702, %v701
      %v704 = vmul.f32 0.5, %v703
      %v705 = vsub.f32 1.5, %v704
      %v706 = vmul.f32 %v701, %v705
      %vm707 = vweird.f32 %v640
      %vm708 = vweird.f32 %v701
      %vm709 = vmor %vm707, %vm708
      %v710 = vsel %vm709, %v701, %v706
      %v711 = vrsqrt.pop %v641
      %v712 = vmul.f32 %v711, %v641
      %v713 = vmul.f32 %v712, %v711
      %v714 = vmul.f32 0.5, %v713
      %v715 = vsub.f32 1.5, %v714
      %v716 = vmul.f32 %v711, %v715
      %vm717 = vweird.f32 %v641
      %vm718 = vweird.f32 %v711
      %vm719 = vmor %vm717, %vm718
      %v720 = vsel %vm719, %v711, %v716
      %v721 = vrsqrt.pop %v642
      %v722 = vmul.f32 %v721, %v642
      %v723 = vmul.f32 %v722, %v721
      %v724 = vmul.f32 0.5, %v723
      %v725 = vsub.f32 1.5, %v724
      %v726 = vmul.f32 %v721, %v725
      %vm727 = vweird.f32 %v642
      %vm728 = vweird.f32 %v721
      %vm729 = vmor %vm727, %vm728
      %v730 = vsel %vm729, %v721, %v726
      %v731 = vrsqrt.pop %v643
      %v732 = vmul.f32 %v731, %v643
      %v733 = vmul.f32 %v732, %v731
      %v734 = vmul.f32 0.5, %v733
      %v735 = vsub.f32 1.5, %v734
      %v736 = vmul.f32 %v731, %v735
      %vm737 = vweird.f32 %v643
      %vm738 = vweird.f32 %v731
      %vm739 = vmor %vm737, %vm738
      %v740 = vsel %vm739, %v731, %v736
      %v741 = vrsqrt.pop %v644
      %v742 = vmul.f32 %v741, %v644
      %v743 = vmul.f32 %v742, %v741
      %v744 = vmul.f32 0.5, %v743
      %v745 = vsub.f32 1.5, %v744
      %v746 = vmul.f32 %v741, %v745
      %vm747 = vweird.f32 %v644
      %vm748 = vweird.f32 %v741
      %vm749 = vmor %vm747, %vm748
      %v750 = vsel %vm749, %v741, %v746
      %v751 = vrsqrt.pop %v645
      %v752 = vmul.f32 %v751, %v645
      %v753 = vmul.f32 %v752, %v751
      %v754 = vmul.f32 0.5, %v753
      %v755 = vsub.f32 1.5, %v754
      %v756 = vmul.f32 %v751, %v755
      %vm757 = vweird.f32 %v645
      %vm758 = vweird.f32 %v751
      %vm759 = vmor %vm757, %vm758
      %v760 = vsel %vm759, %v751, %v756
      %v761 = vrsqrt.pop %v646
      %v762 = vmul.f32 %v761, %v646
      %v763 = vmul.f32 %v762, %v761
      %v764 = vmul.f32 0.5, %v763
      %v765 = vsub.f32 1.5, %v764
      %v766 = vmul.f32 %v761, %v765
      %vm767 = vweird.f32 %v646
      %vm768 = vweird.f32 %v761
      %vm769 = vmor %vm767, %vm768
      %v770 = vsel %vm769, %v761, %v766
      %v771 = vrsqrt.pop %v647
      %v772 = vmul.f32 %v771, %v647
      %v773 = vmul.f32 %v772, %v771
      %v774 = vmul.f32 0.5, %v773
      %v775 = vsub.f32 1.5, %v774
      %v776 = vmul.f32 %v771, %v775
      %vm777 = vweird.f32 %v647
      %vm778 = vweird.f32 %v771
      %vm779 = vmor %vm777, %vm778
      %v780 = vsel %vm779, %v771, %v776
      %v781 = vrsqrt.pop %v648
      %v782 = vmul.f32 %v781, %v648
      %v783 = vmul.f32 %v782, %v781
      %v784 = vmul.f32 0.5, %v783
      %v785 = vsub.f32 1.5, %v784
      %v786 = vmul.f32 %v781, %v785
      %vm787 = vweird.f32 %v648
      %vm788 = vweird.f32 %v781
      %vm789 = vmor %vm787, %vm788
      %v790 = vsel %vm789, %v781, %v786
      %v791 = vrsqrt.pop %v649
      %v792 = vmul.f32 %v791, %v649
      %v793 = vmul.f32 %v792, %v791
      %v794 = vmul.f32 0.5, %v793
      %v795 = vsub.f32 1.5, %v794
      %v796 = vmul.f32 %v791, %v795
      %vm797 = vweird.f32 %v649
      %vm798 = vweird.f32 %v791
      %vm799 = vmor %vm797, %vm798
      %v800 = vsel %vm799, %v791, %v796
      %v801 = vrsqrt.pop %v650
      %v802 = vmul.f32 %v801, %v650
      %v803 = vmul.f32 %v802, %v801
      %v804 = vmul.f32 0.5, %v803
      %v805 = vsub.f32 1.5, %v804
      %v806 = vmul.f32 %v801, %v805
      %vm807 = vweird.f32 %v650
      %vm808 = vweird.f32 %v801
      %vm809 = vmor %vm807, %vm808
      %v810 = vsel %vm809, %v801, %v806
      %v811 = vmul.f32 %v402, %v660
      %v812 = vmul.f32 %v405, %v670
      %v813 = vmul.f32 %v408, %v680
      %v814 = vmul.f32 %v411, %v690
      %v815 = vmul.f32 %v414, %v700
      %v816 = vmul.f32 %v417, %v710
      %v817 = vmul.f32 %v420, %v720
      %v818 = vmul.f32 %v423, %v730
      %v819 = vmul.f32 %v426, %v740
      %v820 = vmul.f32 %v429, %v750
      %v821 = vmul.f32 %v432, %v760
      %v822 = vmul.f32 %v435, %v770
      %v823 = vmul.f32 %v438, %v780
      %v824 = vmul.f32 %v441, %v790
      %v825 = vmul.f32 %v444, %v800
      %v826 = vmul.f32 %v447, %v810
      %v827 = vperm.slane %v228, 0
      %v828 = vmul.f32 %v811, %v827
      %v829 = vmul.f32 %v812, %v827
      %v830 = vmul.f32 %v813, %v827
      %v831 = vmul.f32 %v814, %v827
      %v832 = vmul.f32 %v815, %v827
      %v833 = vmul.f32 %v816, %v827
      %v834 = vmul.f32 %v817, %v827
      %v835 = vmul.f32 %v818, %v827
      %v836 = vmul.f32 %v819, %v827
      %v837 = vmul.f32 %v820, %v827
      %v838 = vmul.f32 %v821, %v827
      %v839 = vmul.f32 %v822, %v827
      %v840 = vmul.f32 %v823, %v827
      %v841 = vmul.f32 %v824, %v827
      %v842 = vmul.f32 %v825, %v827
      %v843 = vmul.f32 %v826, %v827
      %v844 = vld [vmem:[%s3] sm:$0xff]
      %v845 = vld [vmem:[%s3 + $0x8] sm:$0xff]
      %v846 = vld [vmem:[%s3 + $0x10] sm:$0xff]
      %v847 = vld [vmem:[%s3 + $0x18] sm:$0xff]
      %v849 = vsel %vm563, %v828, 0
      %v852 = vsel %vm563, %v829, 0
      %v855 = vsel %vm563, %v830, 0
      %v858 = vsel %vm563, %v831, 0
      %v861 = vsel %vm563, %v832, 0
      %v864 = vsel %vm563, %v833, 0
      %v867 = vsel %vm563, %v834, 0
      %v870 = vsel %vm563, %v835, 0
      %v873 = vsel %vm563, %v836, 0
      %v876 = vsel %vm563, %v837, 0
      %v879 = vsel %vm563, %v838, 0
      %v882 = vsel %vm563, %v839, 0
      %v885 = vsel %vm563, %v840, 0
      %v888 = vsel %vm563, %v841, 0
      %v891 = vsel %vm563, %v842, 0
      %v894 = vsel %vm563, %v843, 0
      %896 = vmatpush.msra.mxu0 0.0
      %897 = vmatpush.msra.mxu0 0.0
      %898 = vmatpush.msra.mxu0 0.0
      %899 = vmatpush.msra.mxu0 0.0
      %900 = vmatpush.msra.mxu0 0.0
      %901 = vmatpush.msra.mxu0 0.0
      %902 = vmatpush.msra.mxu0 0.0
      %903 = vmatpush.msra.mxu0 0.0
      %904 = vmatpush.msra.mxu0 0.0
      %905 = vmatpush.msra.mxu0 0.0
      %906 = vmatpush.msra.mxu0 0.0
      %907 = vmatpush.msra.mxu0 0.0
      %908 = vmatpush.msra.mxu0 %v847
      %909 = vmatpush.msra.mxu0 %v846
      %910 = vmatpush.msra.mxu0 %v845
      %911 = vmatpush.msra.mxu0 %v844
      %912 = vmatmul.f32.gmra.mxu0 %v849
      %v913 = vpop.f32.mrf.mxu0
      %v914 = vadd.f32 0.0, %v913
      %915 = vmatmul.f32.gmra.mxu0 %v852
      %v916 = vpop.f32.mrf.mxu0
      %v917 = vadd.f32 0.0, %v916
      %918 = vmatmul.f32.gmra.mxu0 %v855
      %v919 = vpop.f32.mrf.mxu0
      %v920 = vadd.f32 0.0, %v919
      %921 = vmatmul.f32.gmra.mxu0 %v858
      %v922 = vpop.f32.mrf.mxu0
      %v923 = vadd.f32 0.0, %v922
      %924 = vmatmul.f32.gmra.mxu0 %v861
      %v925 = vpop.f32.mrf.mxu0
      %v926 = vadd.f32 0.0, %v925
      %927 = vmatmul.f32.gmra.mxu0 %v864
      %v928 = vpop.f32.mrf.mxu0
      %v929 = vadd.f32 0.0, %v928
      %930 = vmatmul.f32.gmra.mxu0 %v867
      %v931 = vpop.f32.mrf.mxu0
      %v932 = vadd.f32 0.0, %v931
      %933 = vmatmul.f32.gmra.mxu0 %v870
      %v934 = vpop.f32.mrf.mxu0
      %v935 = vadd.f32 0.0, %v934
      %936 = vmatmul.f32.gmra.mxu0 %v873
      %v937 = vpop.f32.mrf.mxu0
      %v938 = vadd.f32 0.0, %v937
      %939 = vmatmul.f32.gmra.mxu0 %v876
      %v940 = vpop.f32.mrf.mxu0
      %v941 = vadd.f32 0.0, %v940
      %942 = vmatmul.f32.gmra.mxu0 %v879
      %v943 = vpop.f32.mrf.mxu0
      %v944 = vadd.f32 0.0, %v943
      %945 = vmatmul.f32.gmra.mxu0 %v882
      %v946 = vpop.f32.mrf.mxu0
      %v947 = vadd.f32 0.0, %v946
      %948 = vmatmul.f32.gmra.mxu0 %v885
      %v949 = vpop.f32.mrf.mxu0
      %v950 = vadd.f32 0.0, %v949
      %951 = vmatmul.f32.gmra.mxu0 %v888
      %v952 = vpop.f32.mrf.mxu0
      %v953 = vadd.f32 0.0, %v952
      %954 = vmatmul.f32.gmra.mxu0 %v891
      %v955 = vpop.f32.mrf.mxu0
      %v956 = vadd.f32 0.0, %v955
      %957 = vmatmul.f32.gmra.mxu0 %v894
      %v958 = vpop.f32.mrf.mxu0
      %v959 = vadd.f32 0.0, %v958
      %960 = vdwg.mxu0
      %s961 = scalar_lea.vmem %s3, 64
      %v962 = vld [vmem:[%s961] sm:$0xff]
      %v963 = vld [vmem:[%s961 + $0x8] sm:$0xff]
      %v964 = vld [vmem:[%s961 + $0x10] sm:$0xff]
      %v965 = vld [vmem:[%s961 + $0x18] sm:$0xff]
      %966 = vmatpush.msra.mxu0 0.0
      %967 = vmatpush.msra.mxu0 0.0
      %968 = vmatpush.msra.mxu0 0.0
      %969 = vmatpush.msra.mxu0 0.0
      %970 = vmatpush.msra.mxu0 0.0
      %971 = vmatpush.msra.mxu0 0.0
      %972 = vmatpush.msra.mxu0 0.0
      %973 = vmatpush.msra.mxu0 0.0
      %974 = vmatpush.msra.mxu0 0.0
      %975 = vmatpush.msra.mxu0 0.0
      %976 = vmatpush.msra.mxu0 0.0
      %977 = vmatpush.msra.mxu0 0.0
      %978 = vmatpush.msra.mxu0 %v965
      %979 = vmatpush.msra.mxu0 %v964
      %980 = vmatpush.msra.mxu0 %v963
      %981 = vmatpush.msra.mxu0 %v962
      %982 = vmatmul.f32.gmra.mxu0 %v849
      %v983 = vpop.f32.mrf.mxu0
      %v984 = vadd.f32 0.0, %v983
      %985 = vmatmul.f32.gmra.mxu0 %v852
      %v986 = vpop.f32.mrf.mxu0
      %v987 = vadd.f32 0.0, %v986
      %988 = vmatmul.f32.gmra.mxu0 %v855
      %v989 = vpop.f32.mrf.mxu0
      %v990 = vadd.f32 0.0, %v989
      %991 = vmatmul.f32.gmra.mxu0 %v858
      %v992 = vpop.f32.mrf.mxu0
      %v993 = vadd.f32 0.0, %v992
      %994 = vmatmul.f32.gmra.mxu0 %v861
      %v995 = vpop.f32.mrf.mxu0
      %v996 = vadd.f32 0.0, %v995
      %997 = vmatmul.f32.gmra.mxu0 %v864
      %v998 = vpop.f32.mrf.mxu0
      %v999 = vadd.f32 0.0, %v998
      %1000 = vmatmul.f32.gmra.mxu0 %v867
      %v1001 = vpop.f32.mrf.mxu0
      %v1002 = vadd.f32 0.0, %v1001
      %1003 = vmatmul.f32.gmra.mxu0 %v870
      %v1004 = vpop.f32.mrf.mxu0
      %v1005 = vadd.f32 0.0, %v1004
      %1006 = vmatmul.f32.gmra.mxu0 %v873
      %v1007 = vpop.f32.mrf.mxu0
      %v1008 = vadd.f32 0.0, %v1007
      %1009 = vmatmul.f32.gmra.mxu0 %v876
      %v1010 = vpop.f32.mrf.mxu0
      %v1011 = vadd.f32 0.0, %v1010
      %1012 = vmatmul.f32.gmra.mxu0 %v879
      %v1013 = vpop.f32.mrf.mxu0
      %v1014 = vadd.f32 0.0, %v1013
      %1015 = vmatmul.f32.gmra.mxu0 %v882
      %v1016 = vpop.f32.mrf.mxu0
      %v1017 = vadd.f32 0.0, %v1016
      %1018 = vmatmul.f32.gmra.mxu0 %v885
      %v1019 = vpop.f32.mrf.mxu0
      %v1020 = vadd.f32 0.0, %v1019
      %1021 = vmatmul.f32.gmra.mxu0 %v888
      %v1022 = vpop.f32.mrf.mxu0
      %v1023 = vadd.f32 0.0, %v1022
      %1024 = vmatmul.f32.gmra.mxu0 %v891
      %v1025 = vpop.f32.mrf.mxu0
      %v1026 = vadd.f32 0.0, %v1025
      %1027 = vmatmul.f32.gmra.mxu0 %v894
      %v1028 = vpop.f32.mrf.mxu0
      %v1029 = vadd.f32 0.0, %v1028
      %1030 = vdwg.mxu0
      %s1031 = scalar_lea.vmem %s3, 128
      %v1032 = vld [vmem:[%s1031] sm:$0xff]
      %v1033 = vld [vmem:[%s1031 + $0x8] sm:$0xff]
      %v1034 = vld [vmem:[%s1031 + $0x10] sm:$0xff]
      %v1035 = vld [vmem:[%s1031 + $0x18] sm:$0xff]
      %1036 = vmatpush.msra.mxu0 0.0
      %1037 = vmatpush.msra.mxu0 0.0
      %1038 = vmatpush.msra.mxu0 0.0
      %1039 = vmatpush.msra.mxu0 0.0
      %1040 = vmatpush.msra.mxu0 0.0
      %1041 = vmatpush.msra.mxu0 0.0
      %1042 = vmatpush.msra.mxu0 0.0
      %1043 = vmatpush.msra.mxu0 0.0
      %1044 = vmatpush.msra.mxu0 0.0
      %1045 = vmatpush.msra.mxu0 0.0
      %1046 = vmatpush.msra.mxu0 0.0
      %1047 = vmatpush.msra.mxu0 0.0
      %1048 = vmatpush.msra.mxu0 %v1035
      %1049 = vmatpush.msra.mxu0 %v1034
      %1050 = vmatpush.msra.mxu0 %v1033
      %1051 = vmatpush.msra.mxu0 %v1032
      %1052 = vmatmul.f32.gmra.mxu0 %v849
      %v1053 = vpop.f32.mrf.mxu0
      %v1054 = vadd.f32 0.0, %v1053
      %1055 = vmatmul.f32.gmra.mxu0 %v852
      %v1056 = vpop.f32.mrf.mxu0
      %v1057 = vadd.f32 0.0, %v1056
      %1058 = vmatmul.f32.gmra.mxu0 %v855
      %v1059 = vpop.f32.mrf.mxu0
      %v1060 = vadd.f32 0.0, %v1059
      %1061 = vmatmul.f32.gmra.mxu0 %v858
      %v1062 = vpop.f32.mrf.mxu0
      %v1063 = vadd.f32 0.0, %v1062
      %1064 = vmatmul.f32.gmra.mxu0 %v861
      %v1065 = vpop.f32.mrf.mxu0
      %v1066 = vadd.f32 0.0, %v1065
      %1067 = vmatmul.f32.gmra.mxu0 %v864
      %v1068 = vpop.f32.mrf.mxu0
      %v1069 = vadd.f32 0.0, %v1068
      %1070 = vmatmul.f32.gmra.mxu0 %v867
      %v1071 = vpop.f32.mrf.mxu0
      %v1072 = vadd.f32 0.0, %v1071
      %1073 = vmatmul.f32.gmra.mxu0 %v870
      %v1074 = vpop.f32.mrf.mxu0
      %v1075 = vadd.f32 0.0, %v1074
      %1076 = vmatmul.f32.gmra.mxu0 %v873
      %v1077 = vpop.f32.mrf.mxu0
      %v1078 = vadd.f32 0.0, %v1077
      %1079 = vmatmul.f32.gmra.mxu0 %v876
      %v1080 = vpop.f32.mrf.mxu0
      %v1081 = vadd.f32 0.0, %v1080
      %1082 = vmatmul.f32.gmra.mxu0 %v879
      %v1083 = vpop.f32.mrf.mxu0
      %v1084 = vadd.f32 0.0, %v1083
      %1085 = vmatmul.f32.gmra.mxu0 %v882
      %v1086 = vpop.f32.mrf.mxu0
      %v1087 = vadd.f32 0.0, %v1086
      %1088 = vmatmul.f32.gmra.mxu0 %v885
      %v1089 = vpop.f32.mrf.mxu0
      %v1090 = vadd.f32 0.0, %v1089
      %1091 = vmatmul.f32.gmra.mxu0 %v888
      %v1092 = vpop.f32.mrf.mxu0
      %v1093 = vadd.f32 0.0, %v1092
      %1094 = vmatmul.f32.gmra.mxu0 %v891
      %v1095 = vpop.f32.mrf.mxu0
      %v1096 = vadd.f32 0.0, %v1095
      %1097 = vmatmul.f32.gmra.mxu0 %v894
      %v1098 = vpop.f32.mrf.mxu0
      %v1099 = vadd.f32 0.0, %v1098
      %1100 = vdwg.mxu0
      %vm1101 = vcmask 130048
      %v1103 = vsel %vm1101, %v914, 0
      %v1106 = vsel %vm1101, %v917, 0
      %v1109 = vsel %vm1101, %v920, 0
      %v1112 = vsel %vm1101, %v923, 0
      %v1115 = vsel %vm1101, %v926, 0
      %v1118 = vsel %vm1101, %v929, 0
      %v1121 = vsel %vm1101, %v932, 0
      %v1124 = vsel %vm1101, %v935, 0
      %v1127 = vsel %vm1101, %v938, 0
      %v1130 = vsel %vm1101, %v941, 0
      %v1133 = vsel %vm1101, %v944, 0
      %v1136 = vsel %vm1101, %v947, 0
      %v1139 = vsel %vm1101, %v950, 0
      %v1142 = vsel %vm1101, %v953, 0
      %v1145 = vsel %vm1101, %v956, 0
      %v1148 = vsel %vm1101, %v959, 0
      %v1151 = vsel %vm1101, %v984, 0
      %v1154 = vsel %vm1101, %v987, 0
      %v1157 = vsel %vm1101, %v990, 0
      %v1160 = vsel %vm1101, %v993, 0
      %v1163 = vsel %vm1101, %v996, 0
      %v1166 = vsel %vm1101, %v999, 0
      %v1169 = vsel %vm1101, %v1002, 0
      %v1172 = vsel %vm1101, %v1005, 0
      %v1175 = vsel %vm1101, %v1008, 0
      %v1178 = vsel %vm1101, %v1011, 0
      %v1181 = vsel %vm1101, %v1014, 0
      %v1184 = vsel %vm1101, %v1017, 0
      %v1187 = vsel %vm1101, %v1020, 0
      %v1190 = vsel %vm1101, %v1023, 0
      %v1193 = vsel %vm1101, %v1026, 0
      %v1196 = vsel %vm1101, %v1029, 0
      %1198 = vmatpush.xpose.msra.mxu0 %v1196
      %1199 = vmatpush.xpose.msra.mxu0 %v1193
      %1200 = vmatpush.xpose.msra.mxu0 %v1190
      %1201 = vmatpush.xpose.msra.mxu0 %v1187
      %1202 = vmatpush.xpose.msra.mxu0 %v1184
      %1203 = vmatpush.xpose.msra.mxu0 %v1181
      %1204 = vmatpush.xpose.msra.mxu0 %v1178
      %1205 = vmatpush.xpose.msra.mxu0 %v1175
      %1206 = vmatpush.xpose.msra.mxu0 %v1172
      %1207 = vmatpush.xpose.msra.mxu0 %v1169
      %1208 = vmatpush.xpose.msra.mxu0 %v1166
      %1209 = vmatpush.xpose.msra.mxu0 %v1163
      %1210 = vmatpush.xpose.msra.mxu0 %v1160
      %1211 = vmatpush.xpose.msra.mxu0 %v1157
      %1212 = vmatpush.xpose.msra.mxu0 %v1154
      %1213 = vmatpush.xpose.msra.mxu0 %v1151
      %1214 = vmatmul.f32.gmra.mxu0 %v1103
      %v1215 = vpop.f32.mrf.mxu0
      %v1216 = vadd.f32 %v531, %v1215
      %1217 = vmatmul.f32.gmra.mxu0 %v1106
      %v1218 = vpop.f32.mrf.mxu0
      %v1219 = vadd.f32 %v532, %v1218
      %1220 = vmatmul.f32.gmra.mxu0 %v1109
      %v1221 = vpop.f32.mrf.mxu0
      %v1222 = vadd.f32 %v533, %v1221
      %1223 = vmatmul.f32.gmra.mxu0 %v1112
      %v1224 = vpop.f32.mrf.mxu0
      %v1225 = vadd.f32 %v534, %v1224
      %1226 = vmatmul.f32.gmra.mxu0 %v1115
      %v1227 = vpop.f32.mrf.mxu0
      %v1228 = vadd.f32 %v535, %v1227
      %1229 = vmatmul.f32.gmra.mxu0 %v1118
      %v1230 = vpop.f32.mrf.mxu0
      %v1231 = vadd.f32 %v536, %v1230
      %1232 = vmatmul.f32.gmra.mxu0 %v1121
      %v1233 = vpop.f32.mrf.mxu0
      %v1234 = vadd.f32 %v537, %v1233
      %1235 = vmatmul.f32.gmra.mxu0 %v1124
      %v1236 = vpop.f32.mrf.mxu0
      %v1237 = vadd.f32 %v538, %v1236
      %1238 = vmatmul.f32.gmra.mxu0 %v1127
      %v1239 = vpop.f32.mrf.mxu0
      %v1240 = vadd.f32 %v539, %v1239
      %1241 = vmatmul.f32.gmra.mxu0 %v1130
      %v1242 = vpop.f32.mrf.mxu0
      %v1243 = vadd.f32 %v540, %v1242
      %1244 = vmatmul.f32.gmra.mxu0 %v1133
      %v1245 = vpop.f32.mrf.mxu0
      %v1246 = vadd.f32 %v541, %v1245
      %1247 = vmatmul.f32.gmra.mxu0 %v1136
      %v1248 = vpop.f32.mrf.mxu0
      %v1249 = vadd.f32 %v542, %v1248
      %1250 = vmatmul.f32.gmra.mxu0 %v1139
      %v1251 = vpop.f32.mrf.mxu0
      %v1252 = vadd.f32 %v543, %v1251
      %1253 = vmatmul.f32.gmra.mxu0 %v1142
      %v1254 = vpop.f32.mrf.mxu0
      %v1255 = vadd.f32 %v544, %v1254
      %1256 = vmatmul.f32.gmra.mxu0 %v1145
      %v1257 = vpop.f32.mrf.mxu0
      %v1258 = vadd.f32 %v545, %v1257
      %1259 = vmatmul.f32.gmra.mxu0 %v1148
      %v1260 = vpop.f32.mrf.mxu0
      %v1261 = vadd.f32 %v546, %v1260
      %1262 = vdwg.mxu0
      %1263 = vmax.xlane.f32.xlu0 %v1216
      %v1264 = vpop.xlane.xlu0 %1263
      %1265 = vmax.xlane.f32.xlu0 %v1219
      %v1266 = vpop.xlane.xlu0 %1265
      %1267 = vmax.xlane.f32.xlu0 %v1222
      %v1268 = vpop.xlane.xlu0 %1267
      %1269 = vmax.xlane.f32.xlu0 %v1225
      %v1270 = vpop.xlane.xlu0 %1269
      %1271 = vmax.xlane.f32.xlu0 %v1228
      %v1272 = vpop.xlane.xlu0 %1271
      %1273 = vmax.xlane.f32.xlu0 %v1231
      %v1274 = vpop.xlane.xlu0 %1273
      %1275 = vmax.xlane.f32.xlu0 %v1234
      %v1276 = vpop.xlane.xlu0 %1275
      %1277 = vmax.xlane.f32.xlu0 %v1237
      %v1278 = vpop.xlane.xlu0 %1277
      %1279 = vmax.xlane.f32.xlu0 %v1240
      %v1280 = vpop.xlane.xlu0 %1279
      %1281 = vmax.xlane.f32.xlu0 %v1243
      %v1282 = vpop.xlane.xlu0 %1281
      %1283 = vmax.xlane.f32.xlu0 %v1246
      %v1284 = vpop.xlane.xlu0 %1283
      %1285 = vmax.xlane.f32.xlu0 %v1249
      %v1286 = vpop.xlane.xlu0 %1285
      %1287 = vmax.xlane.f32.xlu0 %v1252
      %v1288 = vpop.xlane.xlu0 %1287
      %1289 = vmax.xlane.f32.xlu0 %v1255
      %v1290 = vpop.xlane.xlu0 %1289
      %1291 = vmax.xlane.f32.xlu0 %v1258
      %v1292 = vpop.xlane.xlu0 %1291
      %1293 = vmax.xlane.f32.xlu0 %v1261
      %v1294 = vpop.xlane.xlu0 %1293
      %v1295 = vsub.f32 %v1216, %v1264
      %v1296 = vsub.f32 %v1219, %v1266
      %v1297 = vsub.f32 %v1222, %v1268
      %v1298 = vsub.f32 %v1225, %v1270
      %v1299 = vsub.f32 %v1228, %v1272
      %v1300 = vsub.f32 %v1231, %v1274
      %v1301 = vsub.f32 %v1234, %v1276
      %v1302 = vsub.f32 %v1237, %v1278
      %v1303 = vsub.f32 %v1240, %v1280
      %v1304 = vsub.f32 %v1243, %v1282
      %v1305 = vsub.f32 %v1246, %v1284
      %v1306 = vsub.f32 %v1249, %v1286
      %v1307 = vsub.f32 %v1252, %v1288
      %v1308 = vsub.f32 %v1255, %v1290
      %v1309 = vsub.f32 %v1258, %v1292
      %v1310 = vsub.f32 %v1261, %v1294
      %v1311 = vmul.f32 %v1295, 1.442695
      %v1312 = vpow.pop %v1311
      %v1313 = vmul.f32 %v1296, 1.442695
      %v1314 = vpow.pop %v1313
      %v1315 = vmul.f32 %v1297, 1.442695
      %v1316 = vpow.pop %v1315
      %v1317 = vmul.f32 %v1298, 1.442695
      %v1318 = vpow.pop %v1317
      %v1319 = vmul.f32 %v1299, 1.442695
      %v1320 = vpow.pop %v1319
      %v1321 = vmul.f32 %v1300, 1.442695
      %v1322 = vpow.pop %v1321
      %v1323 = vmul.f32 %v1301, 1.442695
      %v1324 = vpow.pop %v1323
      %v1325 = vmul.f32 %v1302, 1.442695
      %v1326 = vpow.pop %v1325
      %v1327 = vmul.f32 %v1303, 1.442695
      %v1328 = vpow.pop %v1327
      %v1329 = vmul.f32 %v1304, 1.442695
      %v1330 = vpow.pop %v1329
      %v1331 = vmul.f32 %v1305, 1.442695
      %v1332 = vpow.pop %v1331
      %v1333 = vmul.f32 %v1306, 1.442695
      %v1334 = vpow.pop %v1333
      %v1335 = vmul.f32 %v1307, 1.442695
      %v1336 = vpow.pop %v1335
      %v1337 = vmul.f32 %v1308, 1.442695
      %v1338 = vpow.pop %v1337
      %v1339 = vmul.f32 %v1309, 1.442695
      %v1340 = vpow.pop %v1339
      %v1341 = vmul.f32 %v1310, 1.442695
      %v1342 = vpow.pop %v1341
      %1343 = vadd.xlane.f32.xlu0 %v1312
      %v1344 = vpop.xlane.xlu0 %1343
      %1345 = vadd.xlane.f32.xlu0 %v1314
      %v1346 = vpop.xlane.xlu0 %1345
      %1347 = vadd.xlane.f32.xlu0 %v1316
      %v1348 = vpop.xlane.xlu0 %1347
      %1349 = vadd.xlane.f32.xlu0 %v1318
      %v1350 = vpop.xlane.xlu0 %1349
      %1351 = vadd.xlane.f32.xlu0 %v1320
      %v1352 = vpop.xlane.xlu0 %1351
      %1353 = vadd.xlane.f32.xlu0 %v1322
      %v1354 = vpop.xlane.xlu0 %1353
      %1355 = vadd.xlane.f32.xlu0 %v1324
      %v1356 = vpop.xlane.xlu0 %1355
      %1357 = vadd.xlane.f32.xlu0 %v1326
      %v1358 = vpop.xlane.xlu0 %1357
      %1359 = vadd.xlane.f32.xlu0 %v1328
      %v1360 = vpop.xlane.xlu0 %1359
      %1361 = vadd.xlane.f32.xlu0 %v1330
      %v1362 = vpop.xlane.xlu0 %1361
      %1363 = vadd.xlane.f32.xlu0 %v1332
      %v1364 = vpop.xlane.xlu0 %1363
      %1365 = vadd.xlane.f32.xlu0 %v1334
      %v1366 = vpop.xlane.xlu0 %1365
      %1367 = vadd.xlane.f32.xlu0 %v1336
      %v1368 = vpop.xlane.xlu0 %1367
      %1369 = vadd.xlane.f32.xlu0 %v1338
      %v1370 = vpop.xlane.xlu0 %1369
      %1371 = vadd.xlane.f32.xlu0 %v1340
      %v1372 = vpop.xlane.xlu0 %1371
      %1373 = vadd.xlane.f32.xlu0 %v1342
      %v1374 = vpop.xlane.xlu0 %1373
      %v1375 = vrcp.pop %v1344
      %v1376 = vrcp.pop %v1346
      %v1377 = vrcp.pop %v1348
      %v1378 = vrcp.pop %v1350
      %v1379 = vrcp.pop %v1352
      %v1380 = vrcp.pop %v1354
      %v1381 = vrcp.pop %v1356
      %v1382 = vrcp.pop %v1358
      %v1383 = vrcp.pop %v1360
      %v1384 = vrcp.pop %v1362
      %v1385 = vrcp.pop %v1364
      %v1386 = vrcp.pop %v1366
      %v1387 = vrcp.pop %v1368
      %v1388 = vrcp.pop %v1370
      %v1389 = vrcp.pop %v1372
      %v1390 = vrcp.pop %v1374
      %v1391 = vmul.f32 %v1312, %v1375
      %v1392 = vmul.f32 %v1314, %v1376
      %v1393 = vmul.f32 %v1316, %v1377
      %v1394 = vmul.f32 %v1318, %v1378
      %v1395 = vmul.f32 %v1320, %v1379
      %v1396 = vmul.f32 %v1322, %v1380
      %v1397 = vmul.f32 %v1324, %v1381
      %v1398 = vmul.f32 %v1326, %v1382
      %v1399 = vmul.f32 %v1328, %v1383
      %v1400 = vmul.f32 %v1330, %v1384
      %v1401 = vmul.f32 %v1332, %v1385
      %v1402 = vmul.f32 %v1334, %v1386
      %v1403 = vmul.f32 %v1336, %v1387
      %v1404 = vmul.f32 %v1338, %v1388
      %v1405 = vmul.f32 %v1340, %v1389
      %v1406 = vmul.f32 %v1342, %v1390
      %1407 = vmatpush.msra.mxu0 %v1099
      %1408 = vmatpush.msra.mxu0 %v1096
      %1409 = vmatpush.msra.mxu0 %v1093
      %1410 = vmatpush.msra.mxu0 %v1090
      %1411 = vmatpush.msra.mxu0 %v1087
      %1412 = vmatpush.msra.mxu0 %v1084
      %1413 = vmatpush.msra.mxu0 %v1081
      %1414 = vmatpush.msra.mxu0 %v1078
      %1415 = vmatpush.msra.mxu0 %v1075
      %1416 = vmatpush.msra.mxu0 %v1072
      %1417 = vmatpush.msra.mxu0 %v1069
      %1418 = vmatpush.msra.mxu0 %v1066
      %1419 = vmatpush.msra.mxu0 %v1063
      %1420 = vmatpush.msra.mxu0 %v1060
      %1421 = vmatpush.msra.mxu0 %v1057
      %1422 = vmatpush.msra.mxu0 %v1054
      %1423 = vmatmul.f32.gmra.mxu0 %v1391
      %v1424 = vpop.f32.mrf.mxu0
      %v1425 = vadd.f32 0.0, %v1424
      %1426 = vmatmul.f32.gmra.mxu0 %v1392
      %v1427 = vpop.f32.mrf.mxu0
      %v1428 = vadd.f32 0.0, %v1427
      %1429 = vmatmul.f32.gmra.mxu0 %v1393
      %v1430 = vpop.f32.mrf.mxu0
      %v1431 = vadd.f32 0.0, %v1430
      %1432 = vmatmul.f32.gmra.mxu0 %v1394
      %v1433 = vpop.f32.mrf.mxu0
      %v1434 = vadd.f32 0.0, %v1433
      %1435 = vmatmul.f32.gmra.mxu0 %v1395
      %v1436 = vpop.f32.mrf.mxu0
      %v1437 = vadd.f32 0.0, %v1436
      %1438 = vmatmul.f32.gmra.mxu0 %v1396
      %v1439 = vpop.f32.mrf.mxu0
      %v1440 = vadd.f32 0.0, %v1439
      %1441 = vmatmul.f32.gmra.mxu0 %v1397
      %v1442 = vpop.f32.mrf.mxu0
      %v1443 = vadd.f32 0.0, %v1442
      %1444 = vmatmul.f32.gmra.mxu0 %v1398
      %v1445 = vpop.f32.mrf.mxu0
      %v1446 = vadd.f32 0.0, %v1445
      %1447 = vmatmul.f32.gmra.mxu0 %v1399
      %v1448 = vpop.f32.mrf.mxu0
      %v1449 = vadd.f32 0.0, %v1448
      %1450 = vmatmul.f32.gmra.mxu0 %v1400
      %v1451 = vpop.f32.mrf.mxu0
      %v1452 = vadd.f32 0.0, %v1451
      %1453 = vmatmul.f32.gmra.mxu0 %v1401
      %v1454 = vpop.f32.mrf.mxu0
      %v1455 = vadd.f32 0.0, %v1454
      %1456 = vmatmul.f32.gmra.mxu0 %v1402
      %v1457 = vpop.f32.mrf.mxu0
      %v1458 = vadd.f32 0.0, %v1457
      %1459 = vmatmul.f32.gmra.mxu0 %v1403
      %v1460 = vpop.f32.mrf.mxu0
      %v1461 = vadd.f32 0.0, %v1460
      %1462 = vmatmul.f32.gmra.mxu0 %v1404
      %v1463 = vpop.f32.mrf.mxu0
      %v1464 = vadd.f32 0.0, %v1463
      %1465 = vmatmul.f32.gmra.mxu0 %v1405
      %v1466 = vpop.f32.mrf.mxu0
      %v1467 = vadd.f32 0.0, %v1466
      %1468 = vmatmul.f32.gmra.mxu0 %v1406
      %v1469 = vpop.f32.mrf.mxu0
      %v1470 = vadd.f32 0.0, %v1469
      %1471 = vdwg.mxu0
      %s1472 = scalar_lea.vmem %s3, 192
      %v1473 = vld [vmem:[%s1472] sm:$0xff]
      %v1474 = vld [vmem:[%s1472 + $0x8] sm:$0xff]
      %v1475 = vld [vmem:[%s1472 + $0x10] sm:$0xff]
      %v1476 = vld [vmem:[%s1472 + $0x18] sm:$0xff]
      %v1478 = vsel %vm1101, %v1425, 0
      %v1481 = vsel %vm1101, %v1428, 0
      %v1484 = vsel %vm1101, %v1431, 0
      %v1487 = vsel %vm1101, %v1434, 0
      %v1490 = vsel %vm1101, %v1437, 0
      %v1493 = vsel %vm1101, %v1440, 0
      %v1496 = vsel %vm1101, %v1443, 0
      %v1499 = vsel %vm1101, %v1446, 0
      %v1502 = vsel %vm1101, %v1449, 0
      %v1505 = vsel %vm1101, %v1452, 0
      %v1508 = vsel %vm1101, %v1455, 0
      %v1511 = vsel %vm1101, %v1458, 0
      %v1514 = vsel %vm1101, %v1461, 0
      %v1517 = vsel %vm1101, %v1464, 0
      %v1520 = vsel %vm1101, %v1467, 0
      %v1523 = vsel %vm1101, %v1470, 0
      %v1526 = vsel %vm1101, %v1473, 0
      %v1529 = vsel %vm1101, %v1474, 0
      %v1532 = vsel %vm1101, %v1475, 0
      %v1535 = vsel %vm1101, %v1476, 0
      %1537 = vmatpush.xpose.msra.mxu0 0.0
      %1538 = vmatpush.xpose.msra.mxu0 0.0
      %1539 = vmatpush.xpose.msra.mxu0 0.0
      %1540 = vmatpush.xpose.msra.mxu0 0.0
      %1541 = vmatpush.xpose.msra.mxu0 0.0
      %1542 = vmatpush.xpose.msra.mxu0 0.0
      %1543 = vmatpush.xpose.msra.mxu0 0.0
      %1544 = vmatpush.xpose.msra.mxu0 0.0
      %1545 = vmatpush.xpose.msra.mxu0 0.0
      %1546 = vmatpush.xpose.msra.mxu0 0.0
      %1547 = vmatpush.xpose.msra.mxu0 0.0
      %1548 = vmatpush.xpose.msra.mxu0 0.0
      %1549 = vmatpush.xpose.msra.mxu0 %v1535
      %1550 = vmatpush.xpose.msra.mxu0 %v1532
      %1551 = vmatpush.xpose.msra.mxu0 %v1529
      %1552 = vmatpush.xpose.msra.mxu0 %v1526
      %1553 = vmatmul.f32.gmra.mxu0 %v1478
      %v1554 = vpop.f32.mrf.mxu0
      %v1555 = vadd.f32 0.0, %v1554
      %1556 = vmatmul.f32.gmra.mxu0 %v1481
      %v1557 = vpop.f32.mrf.mxu0
      %v1558 = vadd.f32 0.0, %v1557
      %1559 = vmatmul.f32.gmra.mxu0 %v1484
      %v1560 = vpop.f32.mrf.mxu0
      %v1561 = vadd.f32 0.0, %v1560
      %1562 = vmatmul.f32.gmra.mxu0 %v1487
      %v1563 = vpop.f32.mrf.mxu0
      %v1564 = vadd.f32 0.0, %v1563
      %1565 = vmatmul.f32.gmra.mxu0 %v1490
      %v1566 = vpop.f32.mrf.mxu0
      %v1567 = vadd.f32 0.0, %v1566
      %1568 = vmatmul.f32.gmra.mxu0 %v1493
      %v1569 = vpop.f32.mrf.mxu0
      %v1570 = vadd.f32 0.0, %v1569
      %1571 = vmatmul.f32.gmra.mxu0 %v1496
      %v1572 = vpop.f32.mrf.mxu0
      %v1573 = vadd.f32 0.0, %v1572
      %1574 = vmatmul.f32.gmra.mxu0 %v1499
      %v1575 = vpop.f32.mrf.mxu0
      %v1576 = vadd.f32 0.0, %v1575
      %1577 = vmatmul.f32.gmra.mxu0 %v1502
      %v1578 = vpop.f32.mrf.mxu0
      %v1579 = vadd.f32 0.0, %v1578
      %1580 = vmatmul.f32.gmra.mxu0 %v1505
      %v1581 = vpop.f32.mrf.mxu0
      %v1582 = vadd.f32 0.0, %v1581
      %1583 = vmatmul.f32.gmra.mxu0 %v1508
      %v1584 = vpop.f32.mrf.mxu0
      %v1585 = vadd.f32 0.0, %v1584
      %1586 = vmatmul.f32.gmra.mxu0 %v1511
      %v1587 = vpop.f32.mrf.mxu0
      %v1588 = vadd.f32 0.0, %v1587
      %1589 = vmatmul.f32.gmra.mxu0 %v1514
      %v1590 = vpop.f32.mrf.mxu0
      %v1591 = vadd.f32 0.0, %v1590
      %1592 = vmatmul.f32.gmra.mxu0 %v1517
      %v1593 = vpop.f32.mrf.mxu0
      %v1594 = vadd.f32 0.0, %v1593
      %1595 = vmatmul.f32.gmra.mxu0 %v1520
      %v1596 = vpop.f32.mrf.mxu0
      %v1597 = vadd.f32 0.0, %v1596
      %1598 = vmatmul.f32.gmra.mxu0 %v1523
      %v1599 = vpop.f32.mrf.mxu0
      %v1600 = vadd.f32 0.0, %v1599
      %1601 = vdwg.mxu0
      %v1602 = vadd.f32 %v402, %v1555
      %v1603 = vadd.f32 %v405, %v1558
      %v1604 = vadd.f32 %v408, %v1561
      %v1605 = vadd.f32 %v411, %v1564
      %v1606 = vadd.f32 %v414, %v1567
      %v1607 = vadd.f32 %v417, %v1570
      %v1608 = vadd.f32 %v420, %v1573
      %v1609 = vadd.f32 %v423, %v1576
      %v1610 = vadd.f32 %v426, %v1579
      %v1611 = vadd.f32 %v429, %v1582
      %v1612 = vadd.f32 %v432, %v1585
      %v1613 = vadd.f32 %v435, %v1588
      %v1614 = vadd.f32 %v438, %v1591
      %v1615 = vadd.f32 %v441, %v1594
      %v1616 = vadd.f32 %v444, %v1597
      %v1617 = vadd.f32 %v447, %v1600
      %s1618 = scalar_lea.vmem %s3, 32
      %v1619 = vld [vmem:[%s1618] sm:$0xff]
      %v1620 = vld [vmem:[%s1618 + $0x8] sm:$0xff]
      %v1621 = vld [vmem:[%s1618 + $0x10] sm:$0xff]
      %v1622 = vld [vmem:[%s1618 + $0x18] sm:$0xff]
      %1623 = vmatpush.msra.mxu0 0.0
      %1624 = vmatpush.msra.mxu0 0.0
      %1625 = vmatpush.msra.mxu0 0.0
      %1626 = vmatpush.msra.mxu0 0.0
      %1627 = vmatpush.msra.mxu0 0.0
      %1628 = vmatpush.msra.mxu0 0.0
      %1629 = vmatpush.msra.mxu0 0.0
      %1630 = vmatpush.msra.mxu0 0.0
      %1631 = vmatpush.msra.mxu0 0.0
      %1632 = vmatpush.msra.mxu0 0.0
      %1633 = vmatpush.msra.mxu0 0.0
      %1634 = vmatpush.msra.mxu0 0.0
      %1635 = vmatpush.msra.mxu0 %v1622
      %1636 = vmatpush.msra.mxu0 %v1621
      %1637 = vmatpush.msra.mxu0 %v1620
      %1638 = vmatpush.msra.mxu0 %v1619
      %1639 = vmatmul.f32.gmra.mxu0 %v849
      %v1640 = vpop.f32.mrf.mxu0
      %v1641 = vadd.f32 0.0, %v1640
      %1642 = vmatmul.f32.gmra.mxu0 %v852
      %v1643 = vpop.f32.mrf.mxu0
      %v1644 = vadd.f32 0.0, %v1643
      %1645 = vmatmul.f32.gmra.mxu0 %v855
      %v1646 = vpop.f32.mrf.mxu0
      %v1647 = vadd.f32 0.0, %v1646
      %1648 = vmatmul.f32.gmra.mxu0 %v858
      %v1649 = vpop.f32.mrf.mxu0
      %v1650 = vadd.f32 0.0, %v1649
      %1651 = vmatmul.f32.gmra.mxu0 %v861
      %v1652 = vpop.f32.mrf.mxu0
      %v1653 = vadd.f32 0.0, %v1652
      %1654 = vmatmul.f32.gmra.mxu0 %v864
      %v1655 = vpop.f32.mrf.mxu0
      %v1656 = vadd.f32 0.0, %v1655
      %1657 = vmatmul.f32.gmra.mxu0 %v867
      %v1658 = vpop.f32.mrf.mxu0
      %v1659 = vadd.f32 0.0, %v1658
      %1660 = vmatmul.f32.gmra.mxu0 %v870
      %v1661 = vpop.f32.mrf.mxu0
      %v1662 = vadd.f32 0.0, %v1661
      %1663 = vmatmul.f32.gmra.mxu0 %v873
      %v1664 = vpop.f32.mrf.mxu0
      %v1665 = vadd.f32 0.0, %v1664
      %1666 = vmatmul.f32.gmra.mxu0 %v876
      %v1667 = vpop.f32.mrf.mxu0
      %v1668 = vadd.f32 0.0, %v1667
      %1669 = vmatmul.f32.gmra.mxu0 %v879
      %v1670 = vpop.f32.mrf.mxu0
      %v1671 = vadd.f32 0.0, %v1670
      %1672 = vmatmul.f32.gmra.mxu0 %v882
      %v1673 = vpop.f32.mrf.mxu0
      %v1674 = vadd.f32 0.0, %v1673
      %1675 = vmatmul.f32.gmra.mxu0 %v885
      %v1676 = vpop.f32.mrf.mxu0
      %v1677 = vadd.f32 0.0, %v1676
      %1678 = vmatmul.f32.gmra.mxu0 %v888
      %v1679 = vpop.f32.mrf.mxu0
      %v1680 = vadd.f32 0.0, %v1679
      %1681 = vmatmul.f32.gmra.mxu0 %v891
      %v1682 = vpop.f32.mrf.mxu0
      %v1683 = vadd.f32 0.0, %v1682
      %1684 = vmatmul.f32.gmra.mxu0 %v894
      %v1685 = vpop.f32.mrf.mxu0
      %v1686 = vadd.f32 0.0, %v1685
      %1687 = vdwg.mxu0
      %s1688 = scalar_lea.vmem %s3, 96
      %v1689 = vld [vmem:[%s1688] sm:$0xff]
      %v1690 = vld [vmem:[%s1688 + $0x8] sm:$0xff]
      %v1691 = vld [vmem:[%s1688 + $0x10] sm:$0xff]
      %v1692 = vld [vmem:[%s1688 + $0x18] sm:$0xff]
      %1693 = vmatpush.msra.mxu0 0.0
      %1694 = vmatpush.msra.mxu0 0.0
      %1695 = vmatpush.msra.mxu0 0.0
      %1696 = vmatpush.msra.mxu0 0.0
      %1697 = vmatpush.msra.mxu0 0.0
      %1698 = vmatpush.msra.mxu0 0.0
      %1699 = vmatpush.msra.mxu0 0.0
      %1700 = vmatpush.msra.mxu0 0.0
      %1701 = vmatpush.msra.mxu0 0.0
      %1702 = vmatpush.msra.mxu0 0.0
      %1703 = vmatpush.msra.mxu0 0.0
      %1704 = vmatpush.msra.mxu0 0.0
      %1705 = vmatpush.msra.mxu0 %v1692
      %1706 = vmatpush.msra.mxu0 %v1691
      %1707 = vmatpush.msra.mxu0 %v1690
      %1708 = vmatpush.msra.mxu0 %v1689
      %1709 = vmatmul.f32.gmra.mxu0 %v849
      %v1710 = vpop.f32.mrf.mxu0
      %v1711 = vadd.f32 0.0, %v1710
      %1712 = vmatmul.f32.gmra.mxu0 %v852
      %v1713 = vpop.f32.mrf.mxu0
      %v1714 = vadd.f32 0.0, %v1713
      %1715 = vmatmul.f32.gmra.mxu0 %v855
      %v1716 = vpop.f32.mrf.mxu0
      %v1717 = vadd.f32 0.0, %v1716
      %1718 = vmatmul.f32.gmra.mxu0 %v858
      %v1719 = vpop.f32.mrf.mxu0
      %v1720 = vadd.f32 0.0, %v1719
      %1721 = vmatmul.f32.gmra.mxu0 %v861
      %v1722 = vpop.f32.mrf.mxu0
      %v1723 = vadd.f32 0.0, %v1722
      %1724 = vmatmul.f32.gmra.mxu0 %v864
      %v1725 = vpop.f32.mrf.mxu0
      %v1726 = vadd.f32 0.0, %v1725
      %1727 = vmatmul.f32.gmra.mxu0 %v867
      %v1728 = vpop.f32.mrf.mxu0
      %v1729 = vadd.f32 0.0, %v1728
      %1730 = vmatmul.f32.gmra.mxu0 %v870
      %v1731 = vpop.f32.mrf.mxu0
      %v1732 = vadd.f32 0.0, %v1731
      %1733 = vmatmul.f32.gmra.mxu0 %v873
      %v1734 = vpop.f32.mrf.mxu0
      %v1735 = vadd.f32 0.0, %v1734
      %1736 = vmatmul.f32.gmra.mxu0 %v876
      %v1737 = vpop.f32.mrf.mxu0
      %v1738 = vadd.f32 0.0, %v1737
      %1739 = vmatmul.f32.gmra.mxu0 %v879
      %v1740 = vpop.f32.mrf.mxu0
      %v1741 = vadd.f32 0.0, %v1740
      %1742 = vmatmul.f32.gmra.mxu0 %v882
      %v1743 = vpop.f32.mrf.mxu0
      %v1744 = vadd.f32 0.0, %v1743
      %1745 = vmatmul.f32.gmra.mxu0 %v885
      %v1746 = vpop.f32.mrf.mxu0
      %v1747 = vadd.f32 0.0, %v1746
      %1748 = vmatmul.f32.gmra.mxu0 %v888
      %v1749 = vpop.f32.mrf.mxu0
      %v1750 = vadd.f32 0.0, %v1749
      %1751 = vmatmul.f32.gmra.mxu0 %v891
      %v1752 = vpop.f32.mrf.mxu0
      %v1753 = vadd.f32 0.0, %v1752
      %1754 = vmatmul.f32.gmra.mxu0 %v894
      %v1755 = vpop.f32.mrf.mxu0
      %v1756 = vadd.f32 0.0, %v1755
      %1757 = vdwg.mxu0
      %s1758 = scalar_lea.vmem %s3, 160
      %v1759 = vld [vmem:[%s1758] sm:$0xff]
      %v1760 = vld [vmem:[%s1758 + $0x8] sm:$0xff]
      %v1761 = vld [vmem:[%s1758 + $0x10] sm:$0xff]
      %v1762 = vld [vmem:[%s1758 + $0x18] sm:$0xff]
      %1763 = vmatpush.msra.mxu0 0.0
      %1764 = vmatpush.msra.mxu0 0.0
      %1765 = vmatpush.msra.mxu0 0.0
      %1766 = vmatpush.msra.mxu0 0.0
      %1767 = vmatpush.msra.mxu0 0.0
      %1768 = vmatpush.msra.mxu0 0.0
      %1769 = vmatpush.msra.mxu0 0.0
      %1770 = vmatpush.msra.mxu0 0.0
      %1771 = vmatpush.msra.mxu0 0.0
      %1772 = vmatpush.msra.mxu0 0.0
      %1773 = vmatpush.msra.mxu0 0.0
      %1774 = vmatpush.msra.mxu0 0.0
      %1775 = vmatpush.msra.mxu0 %v1762
      %1776 = vmatpush.msra.mxu0 %v1761
      %1777 = vmatpush.msra.mxu0 %v1760
      %1778 = vmatpush.msra.mxu0 %v1759
      %1779 = vmatmul.f32.gmra.mxu0 %v849
      %v1780 = vpop.f32.mrf.mxu0
      %v1781 = vadd.f32 0.0, %v1780
      %1782 = vmatmul.f32.gmra.mxu0 %v852
      %v1783 = vpop.f32.mrf.mxu0
      %v1784 = vadd.f32 0.0, %v1783
      %1785 = vmatmul.f32.gmra.mxu0 %v855
      %v1786 = vpop.f32.mrf.mxu0
      %v1787 = vadd.f32 0.0, %v1786
      %1788 = vmatmul.f32.gmra.mxu0 %v858
      %v1789 = vpop.f32.mrf.mxu0
      %v1790 = vadd.f32 0.0, %v1789
      %1791 = vmatmul.f32.gmra.mxu0 %v861
      %v1792 = vpop.f32.mrf.mxu0
      %v1793 = vadd.f32 0.0, %v1792
      %1794 = vmatmul.f32.gmra.mxu0 %v864
      %v1795 = vpop.f32.mrf.mxu0
      %v1796 = vadd.f32 0.0, %v1795
      %1797 = vmatmul.f32.gmra.mxu0 %v867
      %v1798 = vpop.f32.mrf.mxu0
      %v1799 = vadd.f32 0.0, %v1798
      %1800 = vmatmul.f32.gmra.mxu0 %v870
      %v1801 = vpop.f32.mrf.mxu0
      %v1802 = vadd.f32 0.0, %v1801
      %1803 = vmatmul.f32.gmra.mxu0 %v873
      %v1804 = vpop.f32.mrf.mxu0
      %v1805 = vadd.f32 0.0, %v1804
      %1806 = vmatmul.f32.gmra.mxu0 %v876
      %v1807 = vpop.f32.mrf.mxu0
      %v1808 = vadd.f32 0.0, %v1807
      %1809 = vmatmul.f32.gmra.mxu0 %v879
      %v1810 = vpop.f32.mrf.mxu0
      %v1811 = vadd.f32 0.0, %v1810
      %1812 = vmatmul.f32.gmra.mxu0 %v882
      %v1813 = vpop.f32.mrf.mxu0
      %v1814 = vadd.f32 0.0, %v1813
      %1815 = vmatmul.f32.gmra.mxu0 %v885
      %v1816 = vpop.f32.mrf.mxu0
      %v1817 = vadd.f32 0.0, %v1816
      %1818 = vmatmul.f32.gmra.mxu0 %v888
      %v1819 = vpop.f32.mrf.mxu0
      %v1820 = vadd.f32 0.0, %v1819
      %1821 = vmatmul.f32.gmra.mxu0 %v891
      %v1822 = vpop.f32.mrf.mxu0
      %v1823 = vadd.f32 0.0, %v1822
      %1824 = vmatmul.f32.gmra.mxu0 %v894
      %v1825 = vpop.f32.mrf.mxu0
      %v1826 = vadd.f32 0.0, %v1825
      %1827 = vdwg.mxu0
      %v1829 = vsel %vm1101, %v1641, 0
      %v1832 = vsel %vm1101, %v1644, 0
      %v1835 = vsel %vm1101, %v1647, 0
      %v1838 = vsel %vm1101, %v1650, 0
      %v1841 = vsel %vm1101, %v1653, 0
      %v1844 = vsel %vm1101, %v1656, 0
      %v1847 = vsel %vm1101, %v1659, 0
      %v1850 = vsel %vm1101, %v1662, 0
      %v1853 = vsel %vm1101, %v1665, 0
      %v1856 = vsel %vm1101, %v1668, 0
      %v1859 = vsel %vm1101, %v1671, 0
      %v1862 = vsel %vm1101, %v1674, 0
      %v1865 = vsel %vm1101, %v1677, 0
      %v1868 = vsel %vm1101, %v1680, 0
      %v1871 = vsel %vm1101, %v1683, 0
      %v1874 = vsel %vm1101, %v1686, 0
      %v1877 = vsel %vm1101, %v1711, 0
      %v1880 = vsel %vm1101, %v1714, 0
      %v1883 = vsel %vm1101, %v1717, 0
      %v1886 = vsel %vm1101, %v1720, 0
      %v1889 = vsel %vm1101, %v1723, 0
      %v1892 = vsel %vm1101, %v1726, 0
      %v1895 = vsel %vm1101, %v1729, 0
      %v1898 = vsel %vm1101, %v1732, 0
      %v1901 = vsel %vm1101, %v1735, 0
      %v1904 = vsel %vm1101, %v1738, 0
      %v1907 = vsel %vm1101, %v1741, 0
      %v1910 = vsel %vm1101, %v1744, 0
      %v1913 = vsel %vm1101, %v1747, 0
      %v1916 = vsel %vm1101, %v1750, 0
      %v1919 = vsel %vm1101, %v1753, 0
      %v1922 = vsel %vm1101, %v1756, 0
      %1924 = vmatpush.xpose.msra.mxu0 %v1922
      %1925 = vmatpush.xpose.msra.mxu0 %v1919
      %1926 = vmatpush.xpose.msra.mxu0 %v1916
      %1927 = vmatpush.xpose.msra.mxu0 %v1913
      %1928 = vmatpush.xpose.msra.mxu0 %v1910
      %1929 = vmatpush.xpose.msra.mxu0 %v1907
      %1930 = vmatpush.xpose.msra.mxu0 %v1904
      %1931 = vmatpush.xpose.msra.mxu0 %v1901
      %1932 = vmatpush.xpose.msra.mxu0 %v1898
      %1933 = vmatpush.xpose.msra.mxu0 %v1895
      %1934 = vmatpush.xpose.msra.mxu0 %v1892
      %1935 = vmatpush.xpose.msra.mxu0 %v1889
      %1936 = vmatpush.xpose.msra.mxu0 %v1886
      %1937 = vmatpush.xpose.msra.mxu0 %v1883
      %1938 = vmatpush.xpose.msra.mxu0 %v1880
      %1939 = vmatpush.xpose.msra.mxu0 %v1877
      %1940 = vmatmul.f32.gmra.mxu0 %v1829
      %v1941 = vpop.f32.mrf.mxu0
      %v1942 = vadd.f32 %v531, %v1941
      %1943 = vmatmul.f32.gmra.mxu0 %v1832
      %v1944 = vpop.f32.mrf.mxu0
      %v1945 = vadd.f32 %v532, %v1944
      %1946 = vmatmul.f32.gmra.mxu0 %v1835
      %v1947 = vpop.f32.mrf.mxu0
      %v1948 = vadd.f32 %v533, %v1947
      %1949 = vmatmul.f32.gmra.mxu0 %v1838
      %v1950 = vpop.f32.mrf.mxu0
      %v1951 = vadd.f32 %v534, %v1950
      %1952 = vmatmul.f32.gmra.mxu0 %v1841
      %v1953 = vpop.f32.mrf.mxu0
      %v1954 = vadd.f32 %v535, %v1953
      %1955 = vmatmul.f32.gmra.mxu0 %v1844
      %v1956 = vpop.f32.mrf.mxu0
      %v1957 = vadd.f32 %v536, %v1956
      %1958 = vmatmul.f32.gmra.mxu0 %v1847
      %v1959 = vpop.f32.mrf.mxu0
      %v1960 = vadd.f32 %v537, %v1959
      %1961 = vmatmul.f32.gmra.mxu0 %v1850
      %v1962 = vpop.f32.mrf.mxu0
      %v1963 = vadd.f32 %v538, %v1962
      %1964 = vmatmul.f32.gmra.mxu0 %v1853
      %v1965 = vpop.f32.mrf.mxu0
      %v1966 = vadd.f32 %v539, %v1965
      %1967 = vmatmul.f32.gmra.mxu0 %v1856
      %v1968 = vpop.f32.mrf.mxu0
      %v1969 = vadd.f32 %v540, %v1968
      %1970 = vmatmul.f32.gmra.mxu0 %v1859
      %v1971 = vpop.f32.mrf.mxu0
      %v1972 = vadd.f32 %v541, %v1971
      %1973 = vmatmul.f32.gmra.mxu0 %v1862
      %v1974 = vpop.f32.mrf.mxu0
      %v1975 = vadd.f32 %v542, %v1974
      %1976 = vmatmul.f32.gmra.mxu0 %v1865
      %v1977 = vpop.f32.mrf.mxu0
      %v1978 = vadd.f32 %v543, %v1977
      %1979 = vmatmul.f32.gmra.mxu0 %v1868
      %v1980 = vpop.f32.mrf.mxu0
      %v1981 = vadd.f32 %v544, %v1980
      %1982 = vmatmul.f32.gmra.mxu0 %v1871
      %v1983 = vpop.f32.mrf.mxu0
      %v1984 = vadd.f32 %v545, %v1983
      %1985 = vmatmul.f32.gmra.mxu0 %v1874
      %v1986 = vpop.f32.mrf.mxu0
      %v1987 = vadd.f32 %v546, %v1986
      %1988 = vdwg.mxu0
      %1989 = vmax.xlane.f32.xlu0 %v1942
      %v1990 = vpop.xlane.xlu0 %1989
      %1991 = vmax.xlane.f32.xlu0 %v1945
      %v1992 = vpop.xlane.xlu0 %1991
      %1993 = vmax.xlane.f32.xlu0 %v1948
      %v1994 = vpop.xlane.xlu0 %1993
      %1995 = vmax.xlane.f32.xlu0 %v1951
      %v1996 = vpop.xlane.xlu0 %1995
      %1997 = vmax.xlane.f32.xlu0 %v1954
      %v1998 = vpop.xlane.xlu0 %1997
      %1999 = vmax.xlane.f32.xlu0 %v1957
      %v2000 = vpop.xlane.xlu0 %1999
      %2001 = vmax.xlane.f32.xlu0 %v1960
      %v2002 = vpop.xlane.xlu0 %2001
      %2003 = vmax.xlane.f32.xlu0 %v1963
      %v2004 = vpop.xlane.xlu0 %2003
      %2005 = vmax.xlane.f32.xlu0 %v1966
      %v2006 = vpop.xlane.xlu0 %2005
      %2007 = vmax.xlane.f32.xlu0 %v1969
      %v2008 = vpop.xlane.xlu0 %2007
      %2009 = vmax.xlane.f32.xlu0 %v1972
      %v2010 = vpop.xlane.xlu0 %2009
      %2011 = vmax.xlane.f32.xlu0 %v1975
      %v2012 = vpop.xlane.xlu0 %2011
      %2013 = vmax.xlane.f32.xlu0 %v1978
      %v2014 = vpop.xlane.xlu0 %2013
      %2015 = vmax.xlane.f32.xlu0 %v1981
      %v2016 = vpop.xlane.xlu0 %2015
      %2017 = vmax.xlane.f32.xlu0 %v1984
      %v2018 = vpop.xlane.xlu0 %2017
      %2019 = vmax.xlane.f32.xlu0 %v1987
      %v2020 = vpop.xlane.xlu0 %2019
      %v2021 = vsub.f32 %v1942, %v1990
      %v2022 = vsub.f32 %v1945, %v1992
      %v2023 = vsub.f32 %v1948, %v1994
      %v2024 = vsub.f32 %v1951, %v1996
      %v2025 = vsub.f32 %v1954, %v1998
      %v2026 = vsub.f32 %v1957, %v2000
      %v2027 = vsub.f32 %v1960, %v2002
      %v2028 = vsub.f32 %v1963, %v2004
      %v2029 = vsub.f32 %v1966, %v2006
      %v2030 = vsub.f32 %v1969, %v2008
      %v2031 = vsub.f32 %v1972, %v2010
      %v2032 = vsub.f32 %v1975, %v2012
      %v2033 = vsub.f32 %v1978, %v2014
      %v2034 = vsub.f32 %v1981, %v2016
      %v2035 = vsub.f32 %v1984, %v2018
      %v2036 = vsub.f32 %v1987, %v2020
      %v2037 = vmul.f32 %v2021, 1.442695
      %v2038 = vpow.pop %v2037
      %v2039 = vmul.f32 %v2022, 1.442695
      %v2040 = vpow.pop %v2039
      %v2041 = vmul.f32 %v2023, 1.442695
      %v2042 = vpow.pop %v2041
      %v2043 = vmul.f32 %v2024, 1.442695
      %v2044 = vpow.pop %v2043
      %v2045 = vmul.f32 %v2025, 1.442695
      %v2046 = vpow.pop %v2045
      %v2047 = vmul.f32 %v2026, 1.442695
      %v2048 = vpow.pop %v2047
      %v2049 = vmul.f32 %v2027, 1.442695
      %v2050 = vpow.pop %v2049
      %v2051 = vmul.f32 %v2028, 1.442695
      %v2052 = vpow.pop %v2051
      %v2053 = vmul.f32 %v2029, 1.442695
      %v2054 = vpow.pop %v2053
      %v2055 = vmul.f32 %v2030, 1.442695
      %v2056 = vpow.pop %v2055
      %v2057 = vmul.f32 %v2031, 1.442695
      %v2058 = vpow.pop %v2057
      %v2059 = vmul.f32 %v2032, 1.442695
      %v2060 = vpow.pop %v2059
      %v2061 = vmul.f32 %v2033, 1.442695
      %v2062 = vpow.pop %v2061
      %v2063 = vmul.f32 %v2034, 1.442695
      %v2064 = vpow.pop %v2063
      %v2065 = vmul.f32 %v2035, 1.442695
      %v2066 = vpow.pop %v2065
      %v2067 = vmul.f32 %v2036, 1.442695
      %v2068 = vpow.pop %v2067
      %2069 = vadd.xlane.f32.xlu0 %v2038
      %v2070 = vpop.xlane.xlu0 %2069
      %2071 = vadd.xlane.f32.xlu0 %v2040
      %v2072 = vpop.xlane.xlu0 %2071
      %2073 = vadd.xlane.f32.xlu0 %v2042
      %v2074 = vpop.xlane.xlu0 %2073
      %2075 = vadd.xlane.f32.xlu0 %v2044
      %v2076 = vpop.xlane.xlu0 %2075
      %2077 = vadd.xlane.f32.xlu0 %v2046
      %v2078 = vpop.xlane.xlu0 %2077
      %2079 = vadd.xlane.f32.xlu0 %v2048
      %v2080 = vpop.xlane.xlu0 %2079
      %2081 = vadd.xlane.f32.xlu0 %v2050
      %v2082 = vpop.xlane.xlu0 %2081
      %2083 = vadd.xlane.f32.xlu0 %v2052
      %v2084 = vpop.xlane.xlu0 %2083
      %2085 = vadd.xlane.f32.xlu0 %v2054
      %v2086 = vpop.xlane.xlu0 %2085
      %2087 = vadd.xlane.f32.xlu0 %v2056
      %v2088 = vpop.xlane.xlu0 %2087
      %2089 = vadd.xlane.f32.xlu0 %v2058
      %v2090 = vpop.xlane.xlu0 %2089
      %2091 = vadd.xlane.f32.xlu0 %v2060
      %v2092 = vpop.xlane.xlu0 %2091
      %2093 = vadd.xlane.f32.xlu0 %v2062
      %v2094 = vpop.xlane.xlu0 %2093
      %2095 = vadd.xlane.f32.xlu0 %v2064
      %v2096 = vpop.xlane.xlu0 %2095
      %2097 = vadd.xlane.f32.xlu0 %v2066
      %v2098 = vpop.xlane.xlu0 %2097
      %2099 = vadd.xlane.f32.xlu0 %v2068
      %v2100 = vpop.xlane.xlu0 %2099
      %v2101 = vrcp.pop %v2070
      %v2102 = vrcp.pop %v2072
      %v2103 = vrcp.pop %v2074
      %v2104 = vrcp.pop %v2076
      %v2105 = vrcp.pop %v2078
      %v2106 = vrcp.pop %v2080
      %v2107 = vrcp.pop %v2082
      %v2108 = vrcp.pop %v2084
      %v2109 = vrcp.pop %v2086
      %v2110 = vrcp.pop %v2088
      %v2111 = vrcp.pop %v2090
      %v2112 = vrcp.pop %v2092
      %v2113 = vrcp.pop %v2094
      %v2114 = vrcp.pop %v2096
      %v2115 = vrcp.pop %v2098
      %v2116 = vrcp.pop %v2100
      %v2117 = vmul.f32 %v2038, %v2101
      %v2118 = vmul.f32 %v2040, %v2102
      %v2119 = vmul.f32 %v2042, %v2103
      %v2120 = vmul.f32 %v2044, %v2104
      %v2121 = vmul.f32 %v2046, %v2105
      %v2122 = vmul.f32 %v2048, %v2106
      %v2123 = vmul.f32 %v2050, %v2107
      %v2124 = vmul.f32 %v2052, %v2108
      %v2125 = vmul.f32 %v2054, %v2109
      %v2126 = vmul.f32 %v2056, %v2110
      %v2127 = vmul.f32 %v2058, %v2111
      %v2128 = vmul.f32 %v2060, %v2112
      %v2129 = vmul.f32 %v2062, %v2113
      %v2130 = vmul.f32 %v2064, %v2114
      %v2131 = vmul.f32 %v2066, %v2115
      %v2132 = vmul.f32 %v2068, %v2116
      %2133 = vmatpush.msra.mxu0 %v1826
      %2134 = vmatpush.msra.mxu0 %v1823
      %2135 = vmatpush.msra.mxu0 %v1820
      %2136 = vmatpush.msra.mxu0 %v1817
      %2137 = vmatpush.msra.mxu0 %v1814
      %2138 = vmatpush.msra.mxu0 %v1811
      %2139 = vmatpush.msra.mxu0 %v1808
      %2140 = vmatpush.msra.mxu0 %v1805
      %2141 = vmatpush.msra.mxu0 %v1802
      %2142 = vmatpush.msra.mxu0 %v1799
      %2143 = vmatpush.msra.mxu0 %v1796
      %2144 = vmatpush.msra.mxu0 %v1793
      %2145 = vmatpush.msra.mxu0 %v1790
      %2146 = vmatpush.msra.mxu0 %v1787
      %2147 = vmatpush.msra.mxu0 %v1784
      %2148 = vmatpush.msra.mxu0 %v1781
      %2149 = vmatmul.f32.gmra.mxu0 %v2117
      %v2150 = vpop.f32.mrf.mxu0
      %v2151 = vadd.f32 0.0, %v2150
      %2152 = vmatmul.f32.gmra.mxu0 %v2118
      %v2153 = vpop.f32.mrf.mxu0
      %v2154 = vadd.f32 0.0, %v2153
      %2155 = vmatmul.f32.gmra.mxu0 %v2119
      %v2156 = vpop.f32.mrf.mxu0
      %v2157 = vadd.f32 0.0, %v2156
      %2158 = vmatmul.f32.gmra.mxu0 %v2120
      %v2159 = vpop.f32.mrf.mxu0
      %v2160 = vadd.f32 0.0, %v2159
      %2161 = vmatmul.f32.gmra.mxu0 %v2121
      %v2162 = vpop.f32.mrf.mxu0
      %v2163 = vadd.f32 0.0, %v2162
      %2164 = vmatmul.f32.gmra.mxu0 %v2122
      %v2165 = vpop.f32.mrf.mxu0
      %v2166 = vadd.f32 0.0, %v2165
      %2167 = vmatmul.f32.gmra.mxu0 %v2123
      %v2168 = vpop.f32.mrf.mxu0
      %v2169 = vadd.f32 0.0, %v2168
      %2170 = vmatmul.f32.gmra.mxu0 %v2124
      %v2171 = vpop.f32.mrf.mxu0
      %v2172 = vadd.f32 0.0, %v2171
      %2173 = vmatmul.f32.gmra.mxu0 %v2125
      %v2174 = vpop.f32.mrf.mxu0
      %v2175 = vadd.f32 0.0, %v2174
      %2176 = vmatmul.f32.gmra.mxu0 %v2126
      %v2177 = vpop.f32.mrf.mxu0
      %v2178 = vadd.f32 0.0, %v2177
      %2179 = vmatmul.f32.gmra.mxu0 %v2127
      %v2180 = vpop.f32.mrf.mxu0
      %v2181 = vadd.f32 0.0, %v2180
      %2182 = vmatmul.f32.gmra.mxu0 %v2128
      %v2183 = vpop.f32.mrf.mxu0
      %v2184 = vadd.f32 0.0, %v2183
      %2185 = vmatmul.f32.gmra.mxu0 %v2129
      %v2186 = vpop.f32.mrf.mxu0
      %v2187 = vadd.f32 0.0, %v2186
      %2188 = vmatmul.f32.gmra.mxu0 %v2130
      %v2189 = vpop.f32.mrf.mxu0
      %v2190 = vadd.f32 0.0, %v2189
      %2191 = vmatmul.f32.gmra.mxu0 %v2131
      %v2192 = vpop.f32.mrf.mxu0
      %v2193 = vadd.f32 0.0, %v2192
      %2194 = vmatmul.f32.gmra.mxu0 %v2132
      %v2195 = vpop.f32.mrf.mxu0
      %v2196 = vadd.f32 0.0, %v2195
      %2197 = vdwg.mxu0
      %s2198 = scalar_lea.vmem %s3, 224
      %v2199 = vld [vmem:[%s2198] sm:$0xff]
      %v2200 = vld [vmem:[%s2198 + $0x8] sm:$0xff]
      %v2201 = vld [vmem:[%s2198 + $0x10] sm:$0xff]
      %v2202 = vld [vmem:[%s2198 + $0x18] sm:$0xff]
      %v2204 = vsel %vm1101, %v2151, 0
      %v2207 = vsel %vm1101, %v2154, 0
      %v2210 = vsel %vm1101, %v2157, 0
      %v2213 = vsel %vm1101, %v2160, 0
      %v2216 = vsel %vm1101, %v2163, 0
      %v2219 = vsel %vm1101, %v2166, 0
      %v2222 = vsel %vm1101, %v2169, 0
      %v2225 = vsel %vm1101, %v2172, 0
      %v2228 = vsel %vm1101, %v2175, 0
      %v2231 = vsel %vm1101, %v2178, 0
      %v2234 = vsel %vm1101, %v2181, 0
      %v2237 = vsel %vm1101, %v2184, 0
      %v2240 = vsel %vm1101, %v2187, 0
      %v2243 = vsel %vm1101, %v2190, 0
      %v2246 = vsel %vm1101, %v2193, 0
      %v2249 = vsel %vm1101, %v2196, 0
      %v2252 = vsel %vm1101, %v2199, 0
      %v2255 = vsel %vm1101, %v2200, 0
      %v2258 = vsel %vm1101, %v2201, 0
      %v2261 = vsel %vm1101, %v2202, 0
      %2263 = vmatpush.xpose.msra.mxu0 0.0
      %2264 = vmatpush.xpose.msra.mxu0 0.0
      %2265 = vmatpush.xpose.msra.mxu0 0.0
      %2266 = vmatpush.xpose.msra.mxu0 0.0
      %2267 = vmatpush.xpose.msra.mxu0 0.0
      %2268 = vmatpush.xpose.msra.mxu0 0.0
      %2269 = vmatpush.xpose.msra.mxu0 0.0
      %2270 = vmatpush.xpose.msra.mxu0 0.0
      %2271 = vmatpush.xpose.msra.mxu0 0.0
      %2272 = vmatpush.xpose.msra.mxu0 0.0
      %2273 = vmatpush.xpose.msra.mxu0 0.0
      %2274 = vmatpush.xpose.msra.mxu0 0.0
      %2275 = vmatpush.xpose.msra.mxu0 %v2261
      %2276 = vmatpush.xpose.msra.mxu0 %v2258
      %2277 = vmatpush.xpose.msra.mxu0 %v2255
      %2278 = vmatpush.xpose.msra.mxu0 %v2252
      %2279 = vmatmul.f32.gmra.mxu0 %v2204
      %v2280 = vpop.f32.mrf.mxu0
      %v2281 = vadd.f32 0.0, %v2280
      %2282 = vmatmul.f32.gmra.mxu0 %v2207
      %v2283 = vpop.f32.mrf.mxu0
      %v2284 = vadd.f32 0.0, %v2283
      %2285 = vmatmul.f32.gmra.mxu0 %v2210
      %v2286 = vpop.f32.mrf.mxu0
      %v2287 = vadd.f32 0.0, %v2286
      %2288 = vmatmul.f32.gmra.mxu0 %v2213
      %v2289 = vpop.f32.mrf.mxu0
      %v2290 = vadd.f32 0.0, %v2289
      %2291 = vmatmul.f32.gmra.mxu0 %v2216
      %v2292 = vpop.f32.mrf.mxu0
      %v2293 = vadd.f32 0.0, %v2292
      %2294 = vmatmul.f32.gmra.mxu0 %v2219
      %v2295 = vpop.f32.mrf.mxu0
      %v2296 = vadd.f32 0.0, %v2295
      %2297 = vmatmul.f32.gmra.mxu0 %v2222
      %v2298 = vpop.f32.mrf.mxu0
      %v2299 = vadd.f32 0.0, %v2298
      %2300 = vmatmul.f32.gmra.mxu0 %v2225
      %v2301 = vpop.f32.mrf.mxu0
      %v2302 = vadd.f32 0.0, %v2301
      %2303 = vmatmul.f32.gmra.mxu0 %v2228
      %v2304 = vpop.f32.mrf.mxu0
      %v2305 = vadd.f32 0.0, %v2304
      %2306 = vmatmul.f32.gmra.mxu0 %v2231
      %v2307 = vpop.f32.mrf.mxu0
      %v2308 = vadd.f32 0.0, %v2307
      %2309 = vmatmul.f32.gmra.mxu0 %v2234
      %v2310 = vpop.f32.mrf.mxu0
      %v2311 = vadd.f32 0.0, %v2310
      %2312 = vmatmul.f32.gmra.mxu0 %v2237
      %v2313 = vpop.f32.mrf.mxu0
      %v2314 = vadd.f32 0.0, %v2313
      %2315 = vmatmul.f32.gmra.mxu0 %v2240
      %v2316 = vpop.f32.mrf.mxu0
      %v2317 = vadd.f32 0.0, %v2316
      %2318 = vmatmul.f32.gmra.mxu0 %v2243
      %v2319 = vpop.f32.mrf.mxu0
      %v2320 = vadd.f32 0.0, %v2319
      %2321 = vmatmul.f32.gmra.mxu0 %v2246
      %v2322 = vpop.f32.mrf.mxu0
      %v2323 = vadd.f32 0.0, %v2322
      %2324 = vmatmul.f32.gmra.mxu0 %v2249
      %v2325 = vpop.f32.mrf.mxu0
      %v2326 = vadd.f32 0.0, %v2325
      %2327 = vdwg.mxu0
      %v2328 = vadd.f32 %v1602, %v2281
      %v2329 = vadd.f32 %v1603, %v2284
      %v2330 = vadd.f32 %v1604, %v2287
      %v2331 = vadd.f32 %v1605, %v2290
      %v2332 = vadd.f32 %v1606, %v2293
      %v2333 = vadd.f32 %v1607, %v2296
      %v2334 = vadd.f32 %v1608, %v2299
      %v2335 = vadd.f32 %v1609, %v2302
      %v2336 = vadd.f32 %v1610, %v2305
      %v2337 = vadd.f32 %v1611, %v2308
      %v2338 = vadd.f32 %v1612, %v2311
      %v2339 = vadd.f32 %v1613, %v2314
      %v2340 = vadd.f32 %v1614, %v2317
      %v2341 = vadd.f32 %v1615, %v2320
      %v2342 = vadd.f32 %v1616, %v2323
      %v2343 = vadd.f32 %v1617, %v2326
      %v2344 = vmul.f32 %v2328, %v2328
      %v2345 = vmul.f32 %v2329, %v2329
      %v2346 = vmul.f32 %v2330, %v2330
      %v2347 = vmul.f32 %v2331, %v2331
      %v2348 = vmul.f32 %v2332, %v2332
      %v2349 = vmul.f32 %v2333, %v2333
      %v2350 = vmul.f32 %v2334, %v2334
      %v2351 = vmul.f32 %v2335, %v2335
      %v2352 = vmul.f32 %v2336, %v2336
      %v2353 = vmul.f32 %v2337, %v2337
      %v2354 = vmul.f32 %v2338, %v2338
      %v2355 = vmul.f32 %v2339, %v2339
      %v2356 = vmul.f32 %v2340, %v2340
      %v2357 = vmul.f32 %v2341, %v2341
      %v2358 = vmul.f32 %v2342, %v2342
      %v2359 = vmul.f32 %v2343, %v2343
      %v2360 = vsel %vm563, %v2344, 0.0
      %2361 = vadd.xlane.f32.xlu0 %v2360
      %v2362 = vpop.xlane.xlu0 %2361
      %v2363 = vsel %vm563, %v2345, 0.0
      %2364 = vadd.xlane.f32.xlu0 %v2363
      %v2365 = vpop.xlane.xlu0 %2364
      %v2366 = vsel %vm563, %v2346, 0.0
      %2367 = vadd.xlane.f32.xlu0 %v2366
      %v2368 = vpop.xlane.xlu0 %2367
      %v2369 = vsel %vm563, %v2347, 0.0
      %2370 = vadd.xlane.f32.xlu0 %v2369
      %v2371 = vpop.xlane.xlu0 %2370
      %v2372 = vsel %vm563, %v2348, 0.0
      %2373 = vadd.xlane.f32.xlu0 %v2372
      %v2374 = vpop.xlane.xlu0 %2373
      %v2375 = vsel %vm563, %v2349, 0.0
      %2376 = vadd.xlane.f32.xlu0 %v2375
      %v2377 = vpop.xlane.xlu0 %2376
      %v2378 = vsel %vm563, %v2350, 0.0
      %2379 = vadd.xlane.f32.xlu0 %v2378
      %v2380 = vpop.xlane.xlu0 %2379
      %v2381 = vsel %vm563, %v2351, 0.0
      %2382 = vadd.xlane.f32.xlu0 %v2381
      %v2383 = vpop.xlane.xlu0 %2382
      %v2384 = vsel %vm563, %v2352, 0.0
      %2385 = vadd.xlane.f32.xlu0 %v2384
      %v2386 = vpop.xlane.xlu0 %2385
      %v2387 = vsel %vm563, %v2353, 0.0
      %2388 = vadd.xlane.f32.xlu0 %v2387
      %v2389 = vpop.xlane.xlu0 %2388
      %v2390 = vsel %vm563, %v2354, 0.0
      %2391 = vadd.xlane.f32.xlu0 %v2390
      %v2392 = vpop.xlane.xlu0 %2391
      %v2393 = vsel %vm563, %v2355, 0.0
      %2394 = vadd.xlane.f32.xlu0 %v2393
      %v2395 = vpop.xlane.xlu0 %2394
      %v2396 = vsel %vm563, %v2356, 0.0
      %2397 = vadd.xlane.f32.xlu0 %v2396
      %v2398 = vpop.xlane.xlu0 %2397
      %v2399 = vsel %vm563, %v2357, 0.0
      %2400 = vadd.xlane.f32.xlu0 %v2399
      %v2401 = vpop.xlane.xlu0 %2400
      %v2402 = vsel %vm563, %v2358, 0.0
      %2403 = vadd.xlane.f32.xlu0 %v2402
      %v2404 = vpop.xlane.xlu0 %2403
      %v2405 = vsel %vm563, %v2359, 0.0
      %2406 = vadd.xlane.f32.xlu0 %v2405
      %v2407 = vpop.xlane.xlu0 %2406
      %v2408 = vmul.f32 %v2362, %v618
      %v2409 = vmul.f32 %v2365, %v618
      %v2410 = vmul.f32 %v2368, %v618
      %v2411 = vmul.f32 %v2371, %v618
      %v2412 = vmul.f32 %v2374, %v618
      %v2413 = vmul.f32 %v2377, %v618
      %v2414 = vmul.f32 %v2380, %v618
      %v2415 = vmul.f32 %v2383, %v618
      %v2416 = vmul.f32 %v2386, %v618
      %v2417 = vmul.f32 %v2389, %v618
      %v2418 = vmul.f32 %v2392, %v618
      %v2419 = vmul.f32 %v2395, %v618
      %v2420 = vmul.f32 %v2398, %v618
      %v2421 = vmul.f32 %v2401, %v618
      %v2422 = vmul.f32 %v2404, %v618
      %v2423 = vmul.f32 %v2407, %v618
      %v2424 = vadd.f32 %v2408, 1e-06
      %v2425 = vadd.f32 %v2409, 1e-06
      %v2426 = vadd.f32 %v2410, 1e-06
      %v2427 = vadd.f32 %v2411, 1e-06
      %v2428 = vadd.f32 %v2412, 1e-06
      %v2429 = vadd.f32 %v2413, 1e-06
      %v2430 = vadd.f32 %v2414, 1e-06
      %v2431 = vadd.f32 %v2415, 1e-06
      %v2432 = vadd.f32 %v2416, 1e-06
      %v2433 = vadd.f32 %v2417, 1e-06
      %v2434 = vadd.f32 %v2418, 1e-06
      %v2435 = vadd.f32 %v2419, 1e-06
      %v2436 = vadd.f32 %v2420, 1e-06
      %v2437 = vadd.f32 %v2421, 1e-06
      %v2438 = vadd.f32 %v2422, 1e-06
      %v2439 = vadd.f32 %v2423, 1e-06
      %v2440 = vrsqrt.pop %v2424
      %v2441 = vmul.f32 %v2440, %v2424
      %v2442 = vmul.f32 %v2441, %v2440
      %v2443 = vmul.f32 0.5, %v2442
      %v2444 = vsub.f32 1.5, %v2443
      %v2445 = vmul.f32 %v2440, %v2444
      %vm2446 = vweird.f32 %v2424
      %vm2447 = vweird.f32 %v2440
      %vm2448 = vmor %vm2446, %vm2447
      %v2449 = vsel %vm2448, %v2440, %v2445
      %v2450 = vrsqrt.pop %v2425
      %v2451 = vmul.f32 %v2450, %v2425
      %v2452 = vmul.f32 %v2451, %v2450
      %v2453 = vmul.f32 0.5, %v2452
      %v2454 = vsub.f32 1.5, %v2453
      %v2455 = vmul.f32 %v2450, %v2454
      %vm2456 = vweird.f32 %v2425
      %vm2457 = vweird.f32 %v2450
      %vm2458 = vmor %vm2456, %vm2457
      %v2459 = vsel %vm2458, %v2450, %v2455
      %v2460 = vrsqrt.pop %v2426
      %v2461 = vmul.f32 %v2460, %v2426
      %v2462 = vmul.f32 %v2461, %v2460
      %v2463 = vmul.f32 0.5, %v2462
      %v2464 = vsub.f32 1.5, %v2463
      %v2465 = vmul.f32 %v2460, %v2464
      %vm2466 = vweird.f32 %v2426
      %vm2467 = vweird.f32 %v2460
      %vm2468 = vmor %vm2466, %vm2467
      %v2469 = vsel %vm2468, %v2460, %v2465
      %v2470 = vrsqrt.pop %v2427
      %v2471 = vmul.f32 %v2470, %v2427
      %v2472 = vmul.f32 %v2471, %v2470
      %v2473 = vmul.f32 0.5, %v2472
      %v2474 = vsub.f32 1.5, %v2473
      %v2475 = vmul.f32 %v2470, %v2474
      %vm2476 = vweird.f32 %v2427
      %vm2477 = vweird.f32 %v2470
      %vm2478 = vmor %vm2476, %vm2477
      %v2479 = vsel %vm2478, %v2470, %v2475
      %v2480 = vrsqrt.pop %v2428
      %v2481 = vmul.f32 %v2480, %v2428
      %v2482 = vmul.f32 %v2481, %v2480
      %v2483 = vmul.f32 0.5, %v2482
      %v2484 = vsub.f32 1.5, %v2483
      %v2485 = vmul.f32 %v2480, %v2484
      %vm2486 = vweird.f32 %v2428
      %vm2487 = vweird.f32 %v2480
      %vm2488 = vmor %vm2486, %vm2487
      %v2489 = vsel %vm2488, %v2480, %v2485
      %v2490 = vrsqrt.pop %v2429
      %v2491 = vmul.f32 %v2490, %v2429
      %v2492 = vmul.f32 %v2491, %v2490
      %v2493 = vmul.f32 0.5, %v2492
      %v2494 = vsub.f32 1.5, %v2493
      %v2495 = vmul.f32 %v2490, %v2494
      %vm2496 = vweird.f32 %v2429
      %vm2497 = vweird.f32 %v2490
      %vm2498 = vmor %vm2496, %vm2497
      %v2499 = vsel %vm2498, %v2490, %v2495
      %v2500 = vrsqrt.pop %v2430
      %v2501 = vmul.f32 %v2500, %v2430
      %v2502 = vmul.f32 %v2501, %v2500
      %v2503 = vmul.f32 0.5, %v2502
      %v2504 = vsub.f32 1.5, %v2503
      %v2505 = vmul.f32 %v2500, %v2504
      %vm2506 = vweird.f32 %v2430
      %vm2507 = vweird.f32 %v2500
      %vm2508 = vmor %vm2506, %vm2507
      %v2509 = vsel %vm2508, %v2500, %v2505
      %v2510 = vrsqrt.pop %v2431
      %v2511 = vmul.f32 %v2510, %v2431
      %v2512 = vmul.f32 %v2511, %v2510
      %v2513 = vmul.f32 0.5, %v2512
      %v2514 = vsub.f32 1.5, %v2513
      %v2515 = vmul.f32 %v2510, %v2514
      %vm2516 = vweird.f32 %v2431
      %vm2517 = vweird.f32 %v2510
      %vm2518 = vmor %vm2516, %vm2517
      %v2519 = vsel %vm2518, %v2510, %v2515
      %v2520 = vrsqrt.pop %v2432
      %v2521 = vmul.f32 %v2520, %v2432
      %v2522 = vmul.f32 %v2521, %v2520
      %v2523 = vmul.f32 0.5, %v2522
      %v2524 = vsub.f32 1.5, %v2523
      %v2525 = vmul.f32 %v2520, %v2524
      %vm2526 = vweird.f32 %v2432
      %vm2527 = vweird.f32 %v2520
      %vm2528 = vmor %vm2526, %vm2527
      %v2529 = vsel %vm2528, %v2520, %v2525
      %v2530 = vrsqrt.pop %v2433
      %v2531 = vmul.f32 %v2530, %v2433
      %v2532 = vmul.f32 %v2531, %v2530
      %v2533 = vmul.f32 0.5, %v2532
      %v2534 = vsub.f32 1.5, %v2533
      %v2535 = vmul.f32 %v2530, %v2534
      %vm2536 = vweird.f32 %v2433
      %vm2537 = vweird.f32 %v2530
      %vm2538 = vmor %vm2536, %vm2537
      %v2539 = vsel %vm2538, %v2530, %v2535
      %v2540 = vrsqrt.pop %v2434
      %v2541 = vmul.f32 %v2540, %v2434
      %v2542 = vmul.f32 %v2541, %v2540
      %v2543 = vmul.f32 0.5, %v2542
      %v2544 = vsub.f32 1.5, %v2543
      %v2545 = vmul.f32 %v2540, %v2544
      %vm2546 = vweird.f32 %v2434
      %vm2547 = vweird.f32 %v2540
      %vm2548 = vmor %vm2546, %vm2547
      %v2549 = vsel %vm2548, %v2540, %v2545
      %v2550 = vrsqrt.pop %v2435
      %v2551 = vmul.f32 %v2550, %v2435
      %v2552 = vmul.f32 %v2551, %v2550
      %v2553 = vmul.f32 0.5, %v2552
      %v2554 = vsub.f32 1.5, %v2553
      %v2555 = vmul.f32 %v2550, %v2554
      %vm2556 = vweird.f32 %v2435
      %vm2557 = vweird.f32 %v2550
      %vm2558 = vmor %vm2556, %vm2557
      %v2559 = vsel %vm2558, %v2550, %v2555
      %v2560 = vrsqrt.pop %v2436
      %v2561 = vmul.f32 %v2560, %v2436
      %v2562 = vmul.f32 %v2561, %v2560
      %v2563 = vmul.f32 0.5, %v2562
      %v2564 = vsub.f32 1.5, %v2563
      %v2565 = vmul.f32 %v2560, %v2564
      %vm2566 = vweird.f32 %v2436
      %vm2567 = vweird.f32 %v2560
      %vm2568 = vmor %vm2566, %vm2567
      %v2569 = vsel %vm2568, %v2560, %v2565
      %v2570 = vrsqrt.pop %v2437
      %v2571 = vmul.f32 %v2570, %v2437
      %v2572 = vmul.f32 %v2571, %v2570
      %v2573 = vmul.f32 0.5, %v2572
      %v2574 = vsub.f32 1.5, %v2573
      %v2575 = vmul.f32 %v2570, %v2574
      %vm2576 = vweird.f32 %v2437
      %vm2577 = vweird.f32 %v2570
      %vm2578 = vmor %vm2576, %vm2577
      %v2579 = vsel %vm2578, %v2570, %v2575
      %v2580 = vrsqrt.pop %v2438
      %v2581 = vmul.f32 %v2580, %v2438
      %v2582 = vmul.f32 %v2581, %v2580
      %v2583 = vmul.f32 0.5, %v2582
      %v2584 = vsub.f32 1.5, %v2583
      %v2585 = vmul.f32 %v2580, %v2584
      %vm2586 = vweird.f32 %v2438
      %vm2587 = vweird.f32 %v2580
      %vm2588 = vmor %vm2586, %vm2587
      %v2589 = vsel %vm2588, %v2580, %v2585
      %v2590 = vrsqrt.pop %v2439
      %v2591 = vmul.f32 %v2590, %v2439
      %v2592 = vmul.f32 %v2591, %v2590
      %v2593 = vmul.f32 0.5, %v2592
      %v2594 = vsub.f32 1.5, %v2593
      %v2595 = vmul.f32 %v2590, %v2594
      %vm2596 = vweird.f32 %v2439
      %vm2597 = vweird.f32 %v2590
      %vm2598 = vmor %vm2596, %vm2597
      %v2599 = vsel %vm2598, %v2590, %v2595
      %v2600 = vmul.f32 %v2328, %v2449
      %v2601 = vmul.f32 %v2329, %v2459
      %v2602 = vmul.f32 %v2330, %v2469
      %v2603 = vmul.f32 %v2331, %v2479
      %v2604 = vmul.f32 %v2332, %v2489
      %v2605 = vmul.f32 %v2333, %v2499
      %v2606 = vmul.f32 %v2334, %v2509
      %v2607 = vmul.f32 %v2335, %v2519
      %v2608 = vmul.f32 %v2336, %v2529
      %v2609 = vmul.f32 %v2337, %v2539
      %v2610 = vmul.f32 %v2338, %v2549
      %v2611 = vmul.f32 %v2339, %v2559
      %v2612 = vmul.f32 %v2340, %v2569
      %v2613 = vmul.f32 %v2341, %v2579
      %v2614 = vmul.f32 %v2342, %v2589
      %v2615 = vmul.f32 %v2343, %v2599
      %v2616 = vperm.slane %v228, 2
      %v2617 = vmul.f32 %v2600, %v2616
      %v2618 = vmul.f32 %v2601, %v2616
      %v2619 = vmul.f32 %v2602, %v2616
      %v2620 = vmul.f32 %v2603, %v2616
      %v2621 = vmul.f32 %v2604, %v2616
      %v2622 = vmul.f32 %v2605, %v2616
      %v2623 = vmul.f32 %v2606, %v2616
      %v2624 = vmul.f32 %v2607, %v2616
      %v2625 = vmul.f32 %v2608, %v2616
      %v2626 = vmul.f32 %v2609, %v2616
      %v2627 = vmul.f32 %v2610, %v2616
      %v2628 = vmul.f32 %v2611, %v2616
      %v2629 = vmul.f32 %v2612, %v2616
      %v2630 = vmul.f32 %v2613, %v2616
      %v2631 = vmul.f32 %v2614, %v2616
      %v2632 = vmul.f32 %v2615, %v2616
      %v2633 = vld [vmem:[%s4] sm:$0xff]
      %v2634 = vld [vmem:[%s4 + $0x8] sm:$0xff]
      %v2635 = vld [vmem:[%s4 + $0x10] sm:$0xff]
      %v2636 = vld [vmem:[%s4 + $0x18] sm:$0xff]
      %v2638 = vsel %vm563, %v2617, 0
      %v2641 = vsel %vm563, %v2618, 0
      %v2644 = vsel %vm563, %v2619, 0
      %v2647 = vsel %vm563, %v2620, 0
      %v2650 = vsel %vm563, %v2621, 0
      %v2653 = vsel %vm563, %v2622, 0
      %v2656 = vsel %vm563, %v2623, 0
      %v2659 = vsel %vm563, %v2624, 0
      %v2662 = vsel %vm563, %v2625, 0
      %v2665 = vsel %vm563, %v2626, 0
      %v2668 = vsel %vm563, %v2627, 0
      %v2671 = vsel %vm563, %v2628, 0
      %v2674 = vsel %vm563, %v2629, 0
      %v2677 = vsel %vm563, %v2630, 0
      %v2680 = vsel %vm563, %v2631, 0
      %v2683 = vsel %vm563, %v2632, 0
      %2685 = vmatpush.msra.mxu0 0.0
      %2686 = vmatpush.msra.mxu0 0.0
      %2687 = vmatpush.msra.mxu0 0.0
      %2688 = vmatpush.msra.mxu0 0.0
      %2689 = vmatpush.msra.mxu0 0.0
      %2690 = vmatpush.msra.mxu0 0.0
      %2691 = vmatpush.msra.mxu0 0.0
      %2692 = vmatpush.msra.mxu0 0.0
      %2693 = vmatpush.msra.mxu0 0.0
      %2694 = vmatpush.msra.mxu0 0.0
      %2695 = vmatpush.msra.mxu0 0.0
      %2696 = vmatpush.msra.mxu0 0.0
      %2697 = vmatpush.msra.mxu0 %v2636
      %2698 = vmatpush.msra.mxu0 %v2635
      %2699 = vmatpush.msra.mxu0 %v2634
      %2700 = vmatpush.msra.mxu0 %v2633
      %2701 = vmatmul.f32.gmra.mxu0 %v2638
      %v2702 = vpop.f32.mrf.mxu0
      %v2703 = vadd.f32 0.0, %v2702
      %2704 = vmatmul.f32.gmra.mxu0 %v2641
      %v2705 = vpop.f32.mrf.mxu0
      %v2706 = vadd.f32 0.0, %v2705
      %2707 = vmatmul.f32.gmra.mxu0 %v2644
      %v2708 = vpop.f32.mrf.mxu0
      %v2709 = vadd.f32 0.0, %v2708
      %2710 = vmatmul.f32.gmra.mxu0 %v2647
      %v2711 = vpop.f32.mrf.mxu0
      %v2712 = vadd.f32 0.0, %v2711
      %2713 = vmatmul.f32.gmra.mxu0 %v2650
      %v2714 = vpop.f32.mrf.mxu0
      %v2715 = vadd.f32 0.0, %v2714
      %2716 = vmatmul.f32.gmra.mxu0 %v2653
      %v2717 = vpop.f32.mrf.mxu0
      %v2718 = vadd.f32 0.0, %v2717
      %2719 = vmatmul.f32.gmra.mxu0 %v2656
      %v2720 = vpop.f32.mrf.mxu0
      %v2721 = vadd.f32 0.0, %v2720
      %2722 = vmatmul.f32.gmra.mxu0 %v2659
      %v2723 = vpop.f32.mrf.mxu0
      %v2724 = vadd.f32 0.0, %v2723
      %2725 = vmatmul.f32.gmra.mxu0 %v2662
      %v2726 = vpop.f32.mrf.mxu0
      %v2727 = vadd.f32 0.0, %v2726
      %2728 = vmatmul.f32.gmra.mxu0 %v2665
      %v2729 = vpop.f32.mrf.mxu0
      %v2730 = vadd.f32 0.0, %v2729
      %2731 = vmatmul.f32.gmra.mxu0 %v2668
      %v2732 = vpop.f32.mrf.mxu0
      %v2733 = vadd.f32 0.0, %v2732
      %2734 = vmatmul.f32.gmra.mxu0 %v2671
      %v2735 = vpop.f32.mrf.mxu0
      %v2736 = vadd.f32 0.0, %v2735
      %2737 = vmatmul.f32.gmra.mxu0 %v2674
      %v2738 = vpop.f32.mrf.mxu0
      %v2739 = vadd.f32 0.0, %v2738
      %2740 = vmatmul.f32.gmra.mxu0 %v2677
      %v2741 = vpop.f32.mrf.mxu0
      %v2742 = vadd.f32 0.0, %v2741
      %2743 = vmatmul.f32.gmra.mxu0 %v2680
      %v2744 = vpop.f32.mrf.mxu0
      %v2745 = vadd.f32 0.0, %v2744
      %2746 = vmatmul.f32.gmra.mxu0 %v2683
      %v2747 = vpop.f32.mrf.mxu0
      %v2748 = vadd.f32 0.0, %v2747
      %2749 = vdwg.mxu0
      %s2750 = scalar_lea.vmem %s4, 32
      %v2751 = vld [vmem:[%s2750] sm:$0xff]
      %v2752 = vld [vmem:[%s2750 + $0x8] sm:$0xff]
      %v2753 = vld [vmem:[%s2750 + $0x10] sm:$0xff]
      %v2754 = vld [vmem:[%s2750 + $0x18] sm:$0xff]
      %2755 = vmatpush.msra.mxu0 0.0
      %2756 = vmatpush.msra.mxu0 0.0
      %2757 = vmatpush.msra.mxu0 0.0
      %2758 = vmatpush.msra.mxu0 0.0
      %2759 = vmatpush.msra.mxu0 0.0
      %2760 = vmatpush.msra.mxu0 0.0
      %2761 = vmatpush.msra.mxu0 0.0
      %2762 = vmatpush.msra.mxu0 0.0
      %2763 = vmatpush.msra.mxu0 0.0
      %2764 = vmatpush.msra.mxu0 0.0
      %2765 = vmatpush.msra.mxu0 0.0
      %2766 = vmatpush.msra.mxu0 0.0
      %2767 = vmatpush.msra.mxu0 %v2754
      %2768 = vmatpush.msra.mxu0 %v2753
      %2769 = vmatpush.msra.mxu0 %v2752
      %2770 = vmatpush.msra.mxu0 %v2751
      %2771 = vmatmul.f32.gmra.mxu0 %v2638
      %v2772 = vpop.f32.mrf.mxu0
      %v2773 = vadd.f32 0.0, %v2772
      %2774 = vmatmul.f32.gmra.mxu0 %v2641
      %v2775 = vpop.f32.mrf.mxu0
      %v2776 = vadd.f32 0.0, %v2775
      %2777 = vmatmul.f32.gmra.mxu0 %v2644
      %v2778 = vpop.f32.mrf.mxu0
      %v2779 = vadd.f32 0.0, %v2778
      %2780 = vmatmul.f32.gmra.mxu0 %v2647
      %v2781 = vpop.f32.mrf.mxu0
      %v2782 = vadd.f32 0.0, %v2781
      %2783 = vmatmul.f32.gmra.mxu0 %v2650
      %v2784 = vpop.f32.mrf.mxu0
      %v2785 = vadd.f32 0.0, %v2784
      %2786 = vmatmul.f32.gmra.mxu0 %v2653
      %v2787 = vpop.f32.mrf.mxu0
      %v2788 = vadd.f32 0.0, %v2787
      %2789 = vmatmul.f32.gmra.mxu0 %v2656
      %v2790 = vpop.f32.mrf.mxu0
      %v2791 = vadd.f32 0.0, %v2790
      %2792 = vmatmul.f32.gmra.mxu0 %v2659
      %v2793 = vpop.f32.mrf.mxu0
      %v2794 = vadd.f32 0.0, %v2793
      %2795 = vmatmul.f32.gmra.mxu0 %v2662
      %v2796 = vpop.f32.mrf.mxu0
      %v2797 = vadd.f32 0.0, %v2796
      %2798 = vmatmul.f32.gmra.mxu0 %v2665
      %v2799 = vpop.f32.mrf.mxu0
      %v2800 = vadd.f32 0.0, %v2799
      %2801 = vmatmul.f32.gmra.mxu0 %v2668
      %v2802 = vpop.f32.mrf.mxu0
      %v2803 = vadd.f32 0.0, %v2802
      %2804 = vmatmul.f32.gmra.mxu0 %v2671
      %v2805 = vpop.f32.mrf.mxu0
      %v2806 = vadd.f32 0.0, %v2805
      %2807 = vmatmul.f32.gmra.mxu0 %v2674
      %v2808 = vpop.f32.mrf.mxu0
      %v2809 = vadd.f32 0.0, %v2808
      %2810 = vmatmul.f32.gmra.mxu0 %v2677
      %v2811 = vpop.f32.mrf.mxu0
      %v2812 = vadd.f32 0.0, %v2811
      %2813 = vmatmul.f32.gmra.mxu0 %v2680
      %v2814 = vpop.f32.mrf.mxu0
      %v2815 = vadd.f32 0.0, %v2814
      %2816 = vmatmul.f32.gmra.mxu0 %v2683
      %v2817 = vpop.f32.mrf.mxu0
      %v2818 = vadd.f32 0.0, %v2817
      %2819 = vdwg.mxu0
      %v2820 = vsub.f32 0.0, %v2703
      %v2821 = vsub.f32 0.0, %v2706
      %v2822 = vsub.f32 0.0, %v2709
      %v2823 = vsub.f32 0.0, %v2712
      %v2824 = vsub.f32 0.0, %v2715
      %v2825 = vsub.f32 0.0, %v2718
      %v2826 = vsub.f32 0.0, %v2721
      %v2827 = vsub.f32 0.0, %v2724
      %v2828 = vsub.f32 0.0, %v2727
      %v2829 = vsub.f32 0.0, %v2730
      %v2830 = vsub.f32 0.0, %v2733
      %v2831 = vsub.f32 0.0, %v2736
      %v2832 = vsub.f32 0.0, %v2739
      %v2833 = vsub.f32 0.0, %v2742
      %v2834 = vsub.f32 0.0, %v2745
      %v2835 = vsub.f32 0.0, %v2748
      %v2836 = vmul.f32 %v2820, 1.442695
      %v2837 = vpow.pop %v2836
      %v2838 = vmul.f32 %v2821, 1.442695
      %v2839 = vpow.pop %v2838
      %v2840 = vmul.f32 %v2822, 1.442695
      %v2841 = vpow.pop %v2840
      %v2842 = vmul.f32 %v2823, 1.442695
      %v2843 = vpow.pop %v2842
      %v2844 = vmul.f32 %v2824, 1.442695
      %v2845 = vpow.pop %v2844
      %v2846 = vmul.f32 %v2825, 1.442695
      %v2847 = vpow.pop %v2846
      %v2848 = vmul.f32 %v2826, 1.442695
      %v2849 = vpow.pop %v2848
      %v2850 = vmul.f32 %v2827, 1.442695
      %v2851 = vpow.pop %v2850
      %v2852 = vmul.f32 %v2828, 1.442695
      %v2853 = vpow.pop %v2852
      %v2854 = vmul.f32 %v2829, 1.442695
      %v2855 = vpow.pop %v2854
      %v2856 = vmul.f32 %v2830, 1.442695
      %v2857 = vpow.pop %v2856
      %v2858 = vmul.f32 %v2831, 1.442695
      %v2859 = vpow.pop %v2858
      %v2860 = vmul.f32 %v2832, 1.442695
      %v2861 = vpow.pop %v2860
      %v2862 = vmul.f32 %v2833, 1.442695
      %v2863 = vpow.pop %v2862
      %v2864 = vmul.f32 %v2834, 1.442695
      %v2865 = vpow.pop %v2864
      %v2866 = vmul.f32 %v2835, 1.442695
      %v2867 = vpow.pop %v2866
      %v2868 = vadd.f32 %v2837, 1.0
      %v2869 = vadd.f32 %v2839, 1.0
      %v2870 = vadd.f32 %v2841, 1.0
      %v2871 = vadd.f32 %v2843, 1.0
      %v2872 = vadd.f32 %v2845, 1.0
      %v2873 = vadd.f32 %v2847, 1.0
      %v2874 = vadd.f32 %v2849, 1.0
      %v2875 = vadd.f32 %v2851, 1.0
      %v2876 = vadd.f32 %v2853, 1.0
      %v2877 = vadd.f32 %v2855, 1.0
      %v2878 = vadd.f32 %v2857, 1.0
      %v2879 = vadd.f32 %v2859, 1.0
      %v2880 = vadd.f32 %v2861, 1.0
      %v2881 = vadd.f32 %v2863, 1.0
      %v2882 = vadd.f32 %v2865, 1.0
      %v2883 = vadd.f32 %v2867, 1.0
      %v2884 = vrcp.pop %v2868
      %v2885 = vrcp.pop %v2869
      %v2886 = vrcp.pop %v2870
      %v2887 = vrcp.pop %v2871
      %v2888 = vrcp.pop %v2872
      %v2889 = vrcp.pop %v2873
      %v2890 = vrcp.pop %v2874
      %v2891 = vrcp.pop %v2875
      %v2892 = vrcp.pop %v2876
      %v2893 = vrcp.pop %v2877
      %v2894 = vrcp.pop %v2878
      %v2895 = vrcp.pop %v2879
      %v2896 = vrcp.pop %v2880
      %v2897 = vrcp.pop %v2881
      %v2898 = vrcp.pop %v2882
      %v2899 = vrcp.pop %v2883
      %v2900 = vmul.f32 %v2703, %v2884
      %v2901 = vmul.f32 %v2706, %v2885
      %v2902 = vmul.f32 %v2709, %v2886
      %v2903 = vmul.f32 %v2712, %v2887
      %v2904 = vmul.f32 %v2715, %v2888
      %v2905 = vmul.f32 %v2718, %v2889
      %v2906 = vmul.f32 %v2721, %v2890
      %v2907 = vmul.f32 %v2724, %v2891
      %v2908 = vmul.f32 %v2727, %v2892
      %v2909 = vmul.f32 %v2730, %v2893
      %v2910 = vmul.f32 %v2733, %v2894
      %v2911 = vmul.f32 %v2736, %v2895
      %v2912 = vmul.f32 %v2739, %v2896
      %v2913 = vmul.f32 %v2742, %v2897
      %v2914 = vmul.f32 %v2745, %v2898
      %v2915 = vmul.f32 %v2748, %v2899
      %v2916 = vmul.f32 %v2900, %v2773
      %v2917 = vmul.f32 %v2901, %v2776
      %v2918 = vmul.f32 %v2902, %v2779
      %v2919 = vmul.f32 %v2903, %v2782
      %v2920 = vmul.f32 %v2904, %v2785
      %v2921 = vmul.f32 %v2905, %v2788
      %v2922 = vmul.f32 %v2906, %v2791
      %v2923 = vmul.f32 %v2907, %v2794
      %v2924 = vmul.f32 %v2908, %v2797
      %v2925 = vmul.f32 %v2909, %v2800
      %v2926 = vmul.f32 %v2910, %v2803
      %v2927 = vmul.f32 %v2911, %v2806
      %v2928 = vmul.f32 %v2912, %v2809
      %v2929 = vmul.f32 %v2913, %v2812
      %v2930 = vmul.f32 %v2914, %v2815
      %v2931 = vmul.f32 %v2915, %v2818
      %s2932 = scalar_lea.vmem %s4, 64
      %v2933 = vld [vmem:[%s2932] sm:$0xff]
      %v2934 = vld [vmem:[%s2932 + $0x8] sm:$0xff]
      %v2935 = vld [vmem:[%s2932 + $0x10] sm:$0xff]
      %v2936 = vld [vmem:[%s2932 + $0x18] sm:$0xff]
      %v2938 = vsel %vm335, %v2916, 0
      %v2941 = vsel %vm335, %v2917, 0
      %v2944 = vsel %vm335, %v2918, 0
      %v2947 = vsel %vm335, %v2919, 0
      %v2950 = vsel %vm335, %v2920, 0
      %v2953 = vsel %vm335, %v2921, 0
      %v2956 = vsel %vm335, %v2922, 0
      %v2959 = vsel %vm335, %v2923, 0
      %v2962 = vsel %vm335, %v2924, 0
      %v2965 = vsel %vm335, %v2925, 0
      %v2968 = vsel %vm335, %v2926, 0
      %v2971 = vsel %vm335, %v2927, 0
      %v2974 = vsel %vm335, %v2928, 0
      %v2977 = vsel %vm335, %v2929, 0
      %v2980 = vsel %vm335, %v2930, 0
      %v2983 = vsel %vm335, %v2931, 0
      %v2986 = vsel %vm335, %v2933, 0
      %v2989 = vsel %vm335, %v2934, 0
      %v2992 = vsel %vm335, %v2935, 0
      %v2995 = vsel %vm335, %v2936, 0
      %2997 = vmatpush.xpose.msra.mxu0 0.0
      %2998 = vmatpush.xpose.msra.mxu0 0.0
      %2999 = vmatpush.xpose.msra.mxu0 0.0
      %3000 = vmatpush.xpose.msra.mxu0 0.0
      %3001 = vmatpush.xpose.msra.mxu0 0.0
      %3002 = vmatpush.xpose.msra.mxu0 0.0
      %3003 = vmatpush.xpose.msra.mxu0 0.0
      %3004 = vmatpush.xpose.msra.mxu0 0.0
      %3005 = vmatpush.xpose.msra.mxu0 0.0
      %3006 = vmatpush.xpose.msra.mxu0 0.0
      %3007 = vmatpush.xpose.msra.mxu0 0.0
      %3008 = vmatpush.xpose.msra.mxu0 0.0
      %3009 = vmatpush.xpose.msra.mxu0 %v2995
      %3010 = vmatpush.xpose.msra.mxu0 %v2992
      %3011 = vmatpush.xpose.msra.mxu0 %v2989
      %3012 = vmatpush.xpose.msra.mxu0 %v2986
      %3013 = vmatmul.f32.gmra.mxu0 %v2938
      %v3014 = vpop.f32.mrf.mxu0
      %v3015 = vadd.f32 0.0, %v3014
      %3016 = vmatmul.f32.gmra.mxu0 %v2941
      %v3017 = vpop.f32.mrf.mxu0
      %v3018 = vadd.f32 0.0, %v3017
      %3019 = vmatmul.f32.gmra.mxu0 %v2944
      %v3020 = vpop.f32.mrf.mxu0
      %v3021 = vadd.f32 0.0, %v3020
      %3022 = vmatmul.f32.gmra.mxu0 %v2947
      %v3023 = vpop.f32.mrf.mxu0
      %v3024 = vadd.f32 0.0, %v3023
      %3025 = vmatmul.f32.gmra.mxu0 %v2950
      %v3026 = vpop.f32.mrf.mxu0
      %v3027 = vadd.f32 0.0, %v3026
      %3028 = vmatmul.f32.gmra.mxu0 %v2953
      %v3029 = vpop.f32.mrf.mxu0
      %v3030 = vadd.f32 0.0, %v3029
      %3031 = vmatmul.f32.gmra.mxu0 %v2956
      %v3032 = vpop.f32.mrf.mxu0
      %v3033 = vadd.f32 0.0, %v3032
      %3034 = vmatmul.f32.gmra.mxu0 %v2959
      %v3035 = vpop.f32.mrf.mxu0
      %v3036 = vadd.f32 0.0, %v3035
      %3037 = vmatmul.f32.gmra.mxu0 %v2962
      %v3038 = vpop.f32.mrf.mxu0
      %v3039 = vadd.f32 0.0, %v3038
      %3040 = vmatmul.f32.gmra.mxu0 %v2965
      %v3041 = vpop.f32.mrf.mxu0
      %v3042 = vadd.f32 0.0, %v3041
      %3043 = vmatmul.f32.gmra.mxu0 %v2968
      %v3044 = vpop.f32.mrf.mxu0
      %v3045 = vadd.f32 0.0, %v3044
      %3046 = vmatmul.f32.gmra.mxu0 %v2971
      %v3047 = vpop.f32.mrf.mxu0
      %v3048 = vadd.f32 0.0, %v3047
      %3049 = vmatmul.f32.gmra.mxu0 %v2974
      %v3050 = vpop.f32.mrf.mxu0
      %v3051 = vadd.f32 0.0, %v3050
      %3052 = vmatmul.f32.gmra.mxu0 %v2977
      %v3053 = vpop.f32.mrf.mxu0
      %v3054 = vadd.f32 0.0, %v3053
      %3055 = vmatmul.f32.gmra.mxu0 %v2980
      %v3056 = vpop.f32.mrf.mxu0
      %v3057 = vadd.f32 0.0, %v3056
      %3058 = vmatmul.f32.gmra.mxu0 %v2983
      %v3059 = vpop.f32.mrf.mxu0
      %v3060 = vadd.f32 0.0, %v3059
      %3061 = vdwg.mxu0
      %v3062 = vadd.f32 %v2328, %v3015
      %v3063 = vadd.f32 %v2329, %v3018
      %v3064 = vadd.f32 %v2330, %v3021
      %v3065 = vadd.f32 %v2331, %v3024
      %v3066 = vadd.f32 %v2332, %v3027
      %v3067 = vadd.f32 %v2333, %v3030
      %v3068 = vadd.f32 %v2334, %v3033
      %v3069 = vadd.f32 %v2335, %v3036
      %v3070 = vadd.f32 %v2336, %v3039
      %v3071 = vadd.f32 %v2337, %v3042
      %v3072 = vadd.f32 %v2338, %v3045
      %v3073 = vadd.f32 %v2339, %v3048
      %v3074 = vadd.f32 %v2340, %v3051
      %v3075 = vadd.f32 %v2341, %v3054
      %v3076 = vadd.f32 %v2342, %v3057
      %v3077 = vadd.f32 %v2343, %v3060
      %v3078 = vmul.f32 %v3062, %v3062
      %v3079 = vmul.f32 %v3063, %v3063
      %v3080 = vmul.f32 %v3064, %v3064
      %v3081 = vmul.f32 %v3065, %v3065
      %v3082 = vmul.f32 %v3066, %v3066
      %v3083 = vmul.f32 %v3067, %v3067
      %v3084 = vmul.f32 %v3068, %v3068
      %v3085 = vmul.f32 %v3069, %v3069
      %v3086 = vmul.f32 %v3070, %v3070
      %v3087 = vmul.f32 %v3071, %v3071
      %v3088 = vmul.f32 %v3072, %v3072
      %v3089 = vmul.f32 %v3073, %v3073
      %v3090 = vmul.f32 %v3074, %v3074
      %v3091 = vmul.f32 %v3075, %v3075
      %v3092 = vmul.f32 %v3076, %v3076
      %v3093 = vmul.f32 %v3077, %v3077
      %v3094 = vsel %vm563, %v3078, 0.0
      %3095 = vadd.xlane.f32.xlu0 %v3094
      %v3096 = vpop.xlane.xlu0 %3095
      %v3097 = vsel %vm563, %v3079, 0.0
      %3098 = vadd.xlane.f32.xlu0 %v3097
      %v3099 = vpop.xlane.xlu0 %3098
      %v3100 = vsel %vm563, %v3080, 0.0
      %3101 = vadd.xlane.f32.xlu0 %v3100
      %v3102 = vpop.xlane.xlu0 %3101
      %v3103 = vsel %vm563, %v3081, 0.0
      %3104 = vadd.xlane.f32.xlu0 %v3103
      %v3105 = vpop.xlane.xlu0 %3104
      %v3106 = vsel %vm563, %v3082, 0.0
      %3107 = vadd.xlane.f32.xlu0 %v3106
      %v3108 = vpop.xlane.xlu0 %3107
      %v3109 = vsel %vm563, %v3083, 0.0
      %3110 = vadd.xlane.f32.xlu0 %v3109
      %v3111 = vpop.xlane.xlu0 %3110
      %v3112 = vsel %vm563, %v3084, 0.0
      %3113 = vadd.xlane.f32.xlu0 %v3112
      %v3114 = vpop.xlane.xlu0 %3113
      %v3115 = vsel %vm563, %v3085, 0.0
      %3116 = vadd.xlane.f32.xlu0 %v3115
      %v3117 = vpop.xlane.xlu0 %3116
      %v3118 = vsel %vm563, %v3086, 0.0
      %3119 = vadd.xlane.f32.xlu0 %v3118
      %v3120 = vpop.xlane.xlu0 %3119
      %v3121 = vsel %vm563, %v3087, 0.0
      %3122 = vadd.xlane.f32.xlu0 %v3121
      %v3123 = vpop.xlane.xlu0 %3122
      %v3124 = vsel %vm563, %v3088, 0.0
      %3125 = vadd.xlane.f32.xlu0 %v3124
      %v3126 = vpop.xlane.xlu0 %3125
      %v3127 = vsel %vm563, %v3089, 0.0
      %3128 = vadd.xlane.f32.xlu0 %v3127
      %v3129 = vpop.xlane.xlu0 %3128
      %v3130 = vsel %vm563, %v3090, 0.0
      %3131 = vadd.xlane.f32.xlu0 %v3130
      %v3132 = vpop.xlane.xlu0 %3131
      %v3133 = vsel %vm563, %v3091, 0.0
      %3134 = vadd.xlane.f32.xlu0 %v3133
      %v3135 = vpop.xlane.xlu0 %3134
      %v3136 = vsel %vm563, %v3092, 0.0
      %3137 = vadd.xlane.f32.xlu0 %v3136
      %v3138 = vpop.xlane.xlu0 %3137
      %v3139 = vsel %vm563, %v3093, 0.0
      %3140 = vadd.xlane.f32.xlu0 %v3139
      %v3141 = vpop.xlane.xlu0 %3140
      %v3142 = vmul.f32 %v3096, %v618
      %v3143 = vmul.f32 %v3099, %v618
      %v3144 = vmul.f32 %v3102, %v618
      %v3145 = vmul.f32 %v3105, %v618
      %v3146 = vmul.f32 %v3108, %v618
      %v3147 = vmul.f32 %v3111, %v618
      %v3148 = vmul.f32 %v3114, %v618
      %v3149 = vmul.f32 %v3117, %v618
      %v3150 = vmul.f32 %v3120, %v618
      %v3151 = vmul.f32 %v3123, %v618
      %v3152 = vmul.f32 %v3126, %v618
      %v3153 = vmul.f32 %v3129, %v618
      %v3154 = vmul.f32 %v3132, %v618
      %v3155 = vmul.f32 %v3135, %v618
      %v3156 = vmul.f32 %v3138, %v618
      %v3157 = vmul.f32 %v3141, %v618
      %v3158 = vadd.f32 %v3142, 1e-06
      %v3159 = vadd.f32 %v3143, 1e-06
      %v3160 = vadd.f32 %v3144, 1e-06
      %v3161 = vadd.f32 %v3145, 1e-06
      %v3162 = vadd.f32 %v3146, 1e-06
      %v3163 = vadd.f32 %v3147, 1e-06
      %v3164 = vadd.f32 %v3148, 1e-06
      %v3165 = vadd.f32 %v3149, 1e-06
      %v3166 = vadd.f32 %v3150, 1e-06
      %v3167 = vadd.f32 %v3151, 1e-06
      %v3168 = vadd.f32 %v3152, 1e-06
      %v3169 = vadd.f32 %v3153, 1e-06
      %v3170 = vadd.f32 %v3154, 1e-06
      %v3171 = vadd.f32 %v3155, 1e-06
      %v3172 = vadd.f32 %v3156, 1e-06
      %v3173 = vadd.f32 %v3157, 1e-06
      %v3174 = vrsqrt.pop %v3158
      %v3175 = vmul.f32 %v3174, %v3158
      %v3176 = vmul.f32 %v3175, %v3174
      %v3177 = vmul.f32 0.5, %v3176
      %v3178 = vsub.f32 1.5, %v3177
      %v3179 = vmul.f32 %v3174, %v3178
      %vm3180 = vweird.f32 %v3158
      %vm3181 = vweird.f32 %v3174
      %vm3182 = vmor %vm3180, %vm3181
      %v3183 = vsel %vm3182, %v3174, %v3179
      %v3184 = vrsqrt.pop %v3159
      %v3185 = vmul.f32 %v3184, %v3159
      %v3186 = vmul.f32 %v3185, %v3184
      %v3187 = vmul.f32 0.5, %v3186
      %v3188 = vsub.f32 1.5, %v3187
      %v3189 = vmul.f32 %v3184, %v3188
      %vm3190 = vweird.f32 %v3159
      %vm3191 = vweird.f32 %v3184
      %vm3192 = vmor %vm3190, %vm3191
      %v3193 = vsel %vm3192, %v3184, %v3189
      %v3194 = vrsqrt.pop %v3160
      %v3195 = vmul.f32 %v3194, %v3160
      %v3196 = vmul.f32 %v3195, %v3194
      %v3197 = vmul.f32 0.5, %v3196
      %v3198 = vsub.f32 1.5, %v3197
      %v3199 = vmul.f32 %v3194, %v3198
      %vm3200 = vweird.f32 %v3160
      %vm3201 = vweird.f32 %v3194
      %vm3202 = vmor %vm3200, %vm3201
      %v3203 = vsel %vm3202, %v3194, %v3199
      %v3204 = vrsqrt.pop %v3161
      %v3205 = vmul.f32 %v3204, %v3161
      %v3206 = vmul.f32 %v3205, %v3204
      %v3207 = vmul.f32 0.5, %v3206
      %v3208 = vsub.f32 1.5, %v3207
      %v3209 = vmul.f32 %v3204, %v3208
      %vm3210 = vweird.f32 %v3161
      %vm3211 = vweird.f32 %v3204
      %vm3212 = vmor %vm3210, %vm3211
      %v3213 = vsel %vm3212, %v3204, %v3209
      %v3214 = vrsqrt.pop %v3162
      %v3215 = vmul.f32 %v3214, %v3162
      %v3216 = vmul.f32 %v3215, %v3214
      %v3217 = vmul.f32 0.5, %v3216
      %v3218 = vsub.f32 1.5, %v3217
      %v3219 = vmul.f32 %v3214, %v3218
      %vm3220 = vweird.f32 %v3162
      %vm3221 = vweird.f32 %v3214
      %vm3222 = vmor %vm3220, %vm3221
      %v3223 = vsel %vm3222, %v3214, %v3219
      %v3224 = vrsqrt.pop %v3163
      %v3225 = vmul.f32 %v3224, %v3163
      %v3226 = vmul.f32 %v3225, %v3224
      %v3227 = vmul.f32 0.5, %v3226
      %v3228 = vsub.f32 1.5, %v3227
      %v3229 = vmul.f32 %v3224, %v3228
      %vm3230 = vweird.f32 %v3163
      %vm3231 = vweird.f32 %v3224
      %vm3232 = vmor %vm3230, %vm3231
      %v3233 = vsel %vm3232, %v3224, %v3229
      %v3234 = vrsqrt.pop %v3164
      %v3235 = vmul.f32 %v3234, %v3164
      %v3236 = vmul.f32 %v3235, %v3234
      %v3237 = vmul.f32 0.5, %v3236
      %v3238 = vsub.f32 1.5, %v3237
      %v3239 = vmul.f32 %v3234, %v3238
      %vm3240 = vweird.f32 %v3164
      %vm3241 = vweird.f32 %v3234
      %vm3242 = vmor %vm3240, %vm3241
      %v3243 = vsel %vm3242, %v3234, %v3239
      %v3244 = vrsqrt.pop %v3165
      %v3245 = vmul.f32 %v3244, %v3165
      %v3246 = vmul.f32 %v3245, %v3244
      %v3247 = vmul.f32 0.5, %v3246
      %v3248 = vsub.f32 1.5, %v3247
      %v3249 = vmul.f32 %v3244, %v3248
      %vm3250 = vweird.f32 %v3165
      %vm3251 = vweird.f32 %v3244
      %vm3252 = vmor %vm3250, %vm3251
      %v3253 = vsel %vm3252, %v3244, %v3249
      %v3254 = vrsqrt.pop %v3166
      %v3255 = vmul.f32 %v3254, %v3166
      %v3256 = vmul.f32 %v3255, %v3254
      %v3257 = vmul.f32 0.5, %v3256
      %v3258 = vsub.f32 1.5, %v3257
      %v3259 = vmul.f32 %v3254, %v3258
      %vm3260 = vweird.f32 %v3166
      %vm3261 = vweird.f32 %v3254
      %vm3262 = vmor %vm3260, %vm3261
      %v3263 = vsel %vm3262, %v3254, %v3259
      %v3264 = vrsqrt.pop %v3167
      %v3265 = vmul.f32 %v3264, %v3167
      %v3266 = vmul.f32 %v3265, %v3264
      %v3267 = vmul.f32 0.5, %v3266
      %v3268 = vsub.f32 1.5, %v3267
      %v3269 = vmul.f32 %v3264, %v3268
      %vm3270 = vweird.f32 %v3167
      %vm3271 = vweird.f32 %v3264
      %vm3272 = vmor %vm3270, %vm3271
      %v3273 = vsel %vm3272, %v3264, %v3269
      %v3274 = vrsqrt.pop %v3168
      %v3275 = vmul.f32 %v3274, %v3168
      %v3276 = vmul.f32 %v3275, %v3274
      %v3277 = vmul.f32 0.5, %v3276
      %v3278 = vsub.f32 1.5, %v3277
      %v3279 = vmul.f32 %v3274, %v3278
      %vm3280 = vweird.f32 %v3168
      %vm3281 = vweird.f32 %v3274
      %vm3282 = vmor %vm3280, %vm3281
      %v3283 = vsel %vm3282, %v3274, %v3279
      %v3284 = vrsqrt.pop %v3169
      %v3285 = vmul.f32 %v3284, %v3169
      %v3286 = vmul.f32 %v3285, %v3284
      %v3287 = vmul.f32 0.5, %v3286
      %v3288 = vsub.f32 1.5, %v3287
      %v3289 = vmul.f32 %v3284, %v3288
      %vm3290 = vweird.f32 %v3169
      %vm3291 = vweird.f32 %v3284
      %vm3292 = vmor %vm3290, %vm3291
      %v3293 = vsel %vm3292, %v3284, %v3289
      %v3294 = vrsqrt.pop %v3170
      %v3295 = vmul.f32 %v3294, %v3170
      %v3296 = vmul.f32 %v3295, %v3294
      %v3297 = vmul.f32 0.5, %v3296
      %v3298 = vsub.f32 1.5, %v3297
      %v3299 = vmul.f32 %v3294, %v3298
      %vm3300 = vweird.f32 %v3170
      %vm3301 = vweird.f32 %v3294
      %vm3302 = vmor %vm3300, %vm3301
      %v3303 = vsel %vm3302, %v3294, %v3299
      %v3304 = vrsqrt.pop %v3171
      %v3305 = vmul.f32 %v3304, %v3171
      %v3306 = vmul.f32 %v3305, %v3304
      %v3307 = vmul.f32 0.5, %v3306
      %v3308 = vsub.f32 1.5, %v3307
      %v3309 = vmul.f32 %v3304, %v3308
      %vm3310 = vweird.f32 %v3171
      %vm3311 = vweird.f32 %v3304
      %vm3312 = vmor %vm3310, %vm3311
      %v3313 = vsel %vm3312, %v3304, %v3309
      %v3314 = vrsqrt.pop %v3172
      %v3315 = vmul.f32 %v3314, %v3172
      %v3316 = vmul.f32 %v3315, %v3314
      %v3317 = vmul.f32 0.5, %v3316
      %v3318 = vsub.f32 1.5, %v3317
      %v3319 = vmul.f32 %v3314, %v3318
      %vm3320 = vweird.f32 %v3172
      %vm3321 = vweird.f32 %v3314
      %vm3322 = vmor %vm3320, %vm3321
      %v3323 = vsel %vm3322, %v3314, %v3319
      %v3324 = vrsqrt.pop %v3173
      %v3325 = vmul.f32 %v3324, %v3173
      %v3326 = vmul.f32 %v3325, %v3324
      %v3327 = vmul.f32 0.5, %v3326
      %v3328 = vsub.f32 1.5, %v3327
      %v3329 = vmul.f32 %v3324, %v3328
      %vm3330 = vweird.f32 %v3173
      %vm3331 = vweird.f32 %v3324
      %vm3332 = vmor %vm3330, %vm3331
      %v3333 = vsel %vm3332, %v3324, %v3329
      %v3334 = vmul.f32 %v3062, %v3183
      %v3335 = vmul.f32 %v3063, %v3193
      %v3336 = vmul.f32 %v3064, %v3203
      %v3337 = vmul.f32 %v3065, %v3213
      %v3338 = vmul.f32 %v3066, %v3223
      %v3339 = vmul.f32 %v3067, %v3233
      %v3340 = vmul.f32 %v3068, %v3243
      %v3341 = vmul.f32 %v3069, %v3253
      %v3342 = vmul.f32 %v3070, %v3263
      %v3343 = vmul.f32 %v3071, %v3273
      %v3344 = vmul.f32 %v3072, %v3283
      %v3345 = vmul.f32 %v3073, %v3293
      %v3346 = vmul.f32 %v3074, %v3303
      %v3347 = vmul.f32 %v3075, %v3313
      %v3348 = vmul.f32 %v3076, %v3323
      %v3349 = vmul.f32 %v3077, %v3333
      %v3350 = vperm.slane %v228, 1
      %v3351 = vmul.f32 %v3334, %v3350
      %v3352 = vmul.f32 %v3335, %v3350
      %v3353 = vmul.f32 %v3336, %v3350
      %v3354 = vmul.f32 %v3337, %v3350
      %v3355 = vmul.f32 %v3338, %v3350
      %v3356 = vmul.f32 %v3339, %v3350
      %v3357 = vmul.f32 %v3340, %v3350
      %v3358 = vmul.f32 %v3341, %v3350
      %v3359 = vmul.f32 %v3342, %v3350
      %v3360 = vmul.f32 %v3343, %v3350
      %v3361 = vmul.f32 %v3344, %v3350
      %v3362 = vmul.f32 %v3345, %v3350
      %v3363 = vmul.f32 %v3346, %v3350
      %v3364 = vmul.f32 %v3347, %v3350
      %v3365 = vmul.f32 %v3348, %v3350
      %v3366 = vmul.f32 %v3349, %v3350
      %s3367 = scalar_lea.vmem %s3, 256
      %v3368 = vld [vmem:[%s3367] sm:$0xff]
      %v3369 = vld [vmem:[%s3367 + $0x8] sm:$0xff]
      %v3370 = vld [vmem:[%s3367 + $0x10] sm:$0xff]
      %v3371 = vld [vmem:[%s3367 + $0x18] sm:$0xff]
      %v3373 = vsel %vm563, %v3351, 0
      %v3376 = vsel %vm563, %v3352, 0
      %v3379 = vsel %vm563, %v3353, 0
      %v3382 = vsel %vm563, %v3354, 0
      %v3385 = vsel %vm563, %v3355, 0
      %v3388 = vsel %vm563, %v3356, 0
      %v3391 = vsel %vm563, %v3357, 0
      %v3394 = vsel %vm563, %v3358, 0
      %v3397 = vsel %vm563, %v3359, 0
      %v3400 = vsel %vm563, %v3360, 0
      %v3403 = vsel %vm563, %v3361, 0
      %v3406 = vsel %vm563, %v3362, 0
      %v3409 = vsel %vm563, %v3363, 0
      %v3412 = vsel %vm563, %v3364, 0
      %v3415 = vsel %vm563, %v3365, 0
      %v3418 = vsel %vm563, %v3366, 0
      %3420 = vmatpush.msra.mxu0 0.0
      %3421 = vmatpush.msra.mxu0 0.0
      %3422 = vmatpush.msra.mxu0 0.0
      %3423 = vmatpush.msra.mxu0 0.0
      %3424 = vmatpush.msra.mxu0 0.0
      %3425 = vmatpush.msra.mxu0 0.0
      %3426 = vmatpush.msra.mxu0 0.0
      %3427 = vmatpush.msra.mxu0 0.0
      %3428 = vmatpush.msra.mxu0 0.0
      %3429 = vmatpush.msra.mxu0 0.0
      %3430 = vmatpush.msra.mxu0 0.0
      %3431 = vmatpush.msra.mxu0 0.0
      %3432 = vmatpush.msra.mxu0 %v3371
      %3433 = vmatpush.msra.mxu0 %v3370
      %3434 = vmatpush.msra.mxu0 %v3369
      %3435 = vmatpush.msra.mxu0 %v3368
      %3436 = vmatmul.f32.gmra.mxu0 %v3373
      %v3437 = vpop.f32.mrf.mxu0
      %v3438 = vadd.f32 0.0, %v3437
      %3439 = vmatmul.f32.gmra.mxu0 %v3376
      %v3440 = vpop.f32.mrf.mxu0
      %v3441 = vadd.f32 0.0, %v3440
      %3442 = vmatmul.f32.gmra.mxu0 %v3379
      %v3443 = vpop.f32.mrf.mxu0
      %v3444 = vadd.f32 0.0, %v3443
      %3445 = vmatmul.f32.gmra.mxu0 %v3382
      %v3446 = vpop.f32.mrf.mxu0
      %v3447 = vadd.f32 0.0, %v3446
      %3448 = vmatmul.f32.gmra.mxu0 %v3385
      %v3449 = vpop.f32.mrf.mxu0
      %v3450 = vadd.f32 0.0, %v3449
      %3451 = vmatmul.f32.gmra.mxu0 %v3388
      %v3452 = vpop.f32.mrf.mxu0
      %v3453 = vadd.f32 0.0, %v3452
      %3454 = vmatmul.f32.gmra.mxu0 %v3391
      %v3455 = vpop.f32.mrf.mxu0
      %v3456 = vadd.f32 0.0, %v3455
      %3457 = vmatmul.f32.gmra.mxu0 %v3394
      %v3458 = vpop.f32.mrf.mxu0
      %v3459 = vadd.f32 0.0, %v3458
      %3460 = vmatmul.f32.gmra.mxu0 %v3397
      %v3461 = vpop.f32.mrf.mxu0
      %v3462 = vadd.f32 0.0, %v3461
      %3463 = vmatmul.f32.gmra.mxu0 %v3400
      %v3464 = vpop.f32.mrf.mxu0
      %v3465 = vadd.f32 0.0, %v3464
      %3466 = vmatmul.f32.gmra.mxu0 %v3403
      %v3467 = vpop.f32.mrf.mxu0
      %v3468 = vadd.f32 0.0, %v3467
      %3469 = vmatmul.f32.gmra.mxu0 %v3406
      %v3470 = vpop.f32.mrf.mxu0
      %v3471 = vadd.f32 0.0, %v3470
      %3472 = vmatmul.f32.gmra.mxu0 %v3409
      %v3473 = vpop.f32.mrf.mxu0
      %v3474 = vadd.f32 0.0, %v3473
      %3475 = vmatmul.f32.gmra.mxu0 %v3412
      %v3476 = vpop.f32.mrf.mxu0
      %v3477 = vadd.f32 0.0, %v3476
      %3478 = vmatmul.f32.gmra.mxu0 %v3415
      %v3479 = vpop.f32.mrf.mxu0
      %v3480 = vadd.f32 0.0, %v3479
      %3481 = vmatmul.f32.gmra.mxu0 %v3418
      %v3482 = vpop.f32.mrf.mxu0
      %v3483 = vadd.f32 0.0, %v3482
      %3484 = vdwg.mxu0
      %s3485 = scalar_lea.vmem %s3, 320
      %v3486 = vld [vmem:[%s3485] sm:$0xff]
      %v3487 = vld [vmem:[%s3485 + $0x8] sm:$0xff]
      %v3488 = vld [vmem:[%s3485 + $0x10] sm:$0xff]
      %v3489 = vld [vmem:[%s3485 + $0x18] sm:$0xff]
      %3490 = vmatpush.msra.mxu0 0.0
      %3491 = vmatpush.msra.mxu0 0.0
      %3492 = vmatpush.msra.mxu0 0.0
      %3493 = vmatpush.msra.mxu0 0.0
      %3494 = vmatpush.msra.mxu0 0.0
      %3495 = vmatpush.msra.mxu0 0.0
      %3496 = vmatpush.msra.mxu0 0.0
      %3497 = vmatpush.msra.mxu0 0.0
      %3498 = vmatpush.msra.mxu0 0.0
      %3499 = vmatpush.msra.mxu0 0.0
      %3500 = vmatpush.msra.mxu0 0.0
      %3501 = vmatpush.msra.mxu0 0.0
      %3502 = vmatpush.msra.mxu0 %v3489
      %3503 = vmatpush.msra.mxu0 %v3488
      %3504 = vmatpush.msra.mxu0 %v3487
      %3505 = vmatpush.msra.mxu0 %v3486
      %3506 = vmatmul.f32.gmra.mxu0 %v3373
      %v3507 = vpop.f32.mrf.mxu0
      %v3508 = vadd.f32 0.0, %v3507
      %3509 = vmatmul.f32.gmra.mxu0 %v3376
      %v3510 = vpop.f32.mrf.mxu0
      %v3511 = vadd.f32 0.0, %v3510
      %3512 = vmatmul.f32.gmra.mxu0 %v3379
      %v3513 = vpop.f32.mrf.mxu0
      %v3514 = vadd.f32 0.0, %v3513
      %3515 = vmatmul.f32.gmra.mxu0 %v3382
      %v3516 = vpop.f32.mrf.mxu0
      %v3517 = vadd.f32 0.0, %v3516
      %3518 = vmatmul.f32.gmra.mxu0 %v3385
      %v3519 = vpop.f32.mrf.mxu0
      %v3520 = vadd.f32 0.0, %v3519
      %3521 = vmatmul.f32.gmra.mxu0 %v3388
      %v3522 = vpop.f32.mrf.mxu0
      %v3523 = vadd.f32 0.0, %v3522
      %3524 = vmatmul.f32.gmra.mxu0 %v3391
      %v3525 = vpop.f32.mrf.mxu0
      %v3526 = vadd.f32 0.0, %v3525
      %3527 = vmatmul.f32.gmra.mxu0 %v3394
      %v3528 = vpop.f32.mrf.mxu0
      %v3529 = vadd.f32 0.0, %v3528
      %3530 = vmatmul.f32.gmra.mxu0 %v3397
      %v3531 = vpop.f32.mrf.mxu0
      %v3532 = vadd.f32 0.0, %v3531
      %3533 = vmatmul.f32.gmra.mxu0 %v3400
      %v3534 = vpop.f32.mrf.mxu0
      %v3535 = vadd.f32 0.0, %v3534
      %3536 = vmatmul.f32.gmra.mxu0 %v3403
      %v3537 = vpop.f32.mrf.mxu0
      %v3538 = vadd.f32 0.0, %v3537
      %3539 = vmatmul.f32.gmra.mxu0 %v3406
      %v3540 = vpop.f32.mrf.mxu0
      %v3541 = vadd.f32 0.0, %v3540
      %3542 = vmatmul.f32.gmra.mxu0 %v3409
      %v3543 = vpop.f32.mrf.mxu0
      %v3544 = vadd.f32 0.0, %v3543
      %3545 = vmatmul.f32.gmra.mxu0 %v3412
      %v3546 = vpop.f32.mrf.mxu0
      %v3547 = vadd.f32 0.0, %v3546
      %3548 = vmatmul.f32.gmra.mxu0 %v3415
      %v3549 = vpop.f32.mrf.mxu0
      %v3550 = vadd.f32 0.0, %v3549
      %3551 = vmatmul.f32.gmra.mxu0 %v3418
      %v3552 = vpop.f32.mrf.mxu0
      %v3553 = vadd.f32 0.0, %v3552
      %3554 = vdwg.mxu0
      %s3555 = scalar_lea.vmem %s3, 384
      %v3556 = vld [vmem:[%s3555] sm:$0xff]
      %v3557 = vld [vmem:[%s3555 + $0x8] sm:$0xff]
      %v3558 = vld [vmem:[%s3555 + $0x10] sm:$0xff]
      %v3559 = vld [vmem:[%s3555 + $0x18] sm:$0xff]
      %3560 = vmatpush.msra.mxu0 0.0
      %3561 = vmatpush.msra.mxu0 0.0
      %3562 = vmatpush.msra.mxu0 0.0
      %3563 = vmatpush.msra.mxu0 0.0
      %3564 = vmatpush.msra.mxu0 0.0
      %3565 = vmatpush.msra.mxu0 0.0
      %3566 = vmatpush.msra.mxu0 0.0
      %3567 = vmatpush.msra.mxu0 0.0
      %3568 = vmatpush.msra.mxu0 0.0
      %3569 = vmatpush.msra.mxu0 0.0
      %3570 = vmatpush.msra.mxu0 0.0
      %3571 = vmatpush.msra.mxu0 0.0
      %3572 = vmatpush.msra.mxu0 %v3559
      %3573 = vmatpush.msra.mxu0 %v3558
      %3574 = vmatpush.msra.mxu0 %v3557
      %3575 = vmatpush.msra.mxu0 %v3556
      %3576 = vmatmul.f32.gmra.mxu0 %v3373
      %v3577 = vpop.f32.mrf.mxu0
      %v3578 = vadd.f32 0.0, %v3577
      %3579 = vmatmul.f32.gmra.mxu0 %v3376
      %v3580 = vpop.f32.mrf.mxu0
      %v3581 = vadd.f32 0.0, %v3580
      %3582 = vmatmul.f32.gmra.mxu0 %v3379
      %v3583 = vpop.f32.mrf.mxu0
      %v3584 = vadd.f32 0.0, %v3583
      %3585 = vmatmul.f32.gmra.mxu0 %v3382
      %v3586 = vpop.f32.mrf.mxu0
      %v3587 = vadd.f32 0.0, %v3586
      %3588 = vmatmul.f32.gmra.mxu0 %v3385
      %v3589 = vpop.f32.mrf.mxu0
      %v3590 = vadd.f32 0.0, %v3589
      %3591 = vmatmul.f32.gmra.mxu0 %v3388
      %v3592 = vpop.f32.mrf.mxu0
      %v3593 = vadd.f32 0.0, %v3592
      %3594 = vmatmul.f32.gmra.mxu0 %v3391
      %v3595 = vpop.f32.mrf.mxu0
      %v3596 = vadd.f32 0.0, %v3595
      %3597 = vmatmul.f32.gmra.mxu0 %v3394
      %v3598 = vpop.f32.mrf.mxu0
      %v3599 = vadd.f32 0.0, %v3598
      %3600 = vmatmul.f32.gmra.mxu0 %v3397
      %v3601 = vpop.f32.mrf.mxu0
      %v3602 = vadd.f32 0.0, %v3601
      %3603 = vmatmul.f32.gmra.mxu0 %v3400
      %v3604 = vpop.f32.mrf.mxu0
      %v3605 = vadd.f32 0.0, %v3604
      %3606 = vmatmul.f32.gmra.mxu0 %v3403
      %v3607 = vpop.f32.mrf.mxu0
      %v3608 = vadd.f32 0.0, %v3607
      %3609 = vmatmul.f32.gmra.mxu0 %v3406
      %v3610 = vpop.f32.mrf.mxu0
      %v3611 = vadd.f32 0.0, %v3610
      %3612 = vmatmul.f32.gmra.mxu0 %v3409
      %v3613 = vpop.f32.mrf.mxu0
      %v3614 = vadd.f32 0.0, %v3613
      %3615 = vmatmul.f32.gmra.mxu0 %v3412
      %v3616 = vpop.f32.mrf.mxu0
      %v3617 = vadd.f32 0.0, %v3616
      %3618 = vmatmul.f32.gmra.mxu0 %v3415
      %v3619 = vpop.f32.mrf.mxu0
      %v3620 = vadd.f32 0.0, %v3619
      %3621 = vmatmul.f32.gmra.mxu0 %v3418
      %v3622 = vpop.f32.mrf.mxu0
      %v3623 = vadd.f32 0.0, %v3622
      %3624 = vdwg.mxu0
      %v3626 = vsel %vm1101, %v3438, 0
      %v3629 = vsel %vm1101, %v3441, 0
      %v3632 = vsel %vm1101, %v3444, 0
      %v3635 = vsel %vm1101, %v3447, 0
      %v3638 = vsel %vm1101, %v3450, 0
      %v3641 = vsel %vm1101, %v3453, 0
      %v3644 = vsel %vm1101, %v3456, 0
      %v3647 = vsel %vm1101, %v3459, 0
      %v3650 = vsel %vm1101, %v3462, 0
      %v3653 = vsel %vm1101, %v3465, 0
      %v3656 = vsel %vm1101, %v3468, 0
      %v3659 = vsel %vm1101, %v3471, 0
      %v3662 = vsel %vm1101, %v3474, 0
      %v3665 = vsel %vm1101, %v3477, 0
      %v3668 = vsel %vm1101, %v3480, 0
      %v3671 = vsel %vm1101, %v3483, 0
      %v3674 = vsel %vm1101, %v3508, 0
      %v3677 = vsel %vm1101, %v3511, 0
      %v3680 = vsel %vm1101, %v3514, 0
      %v3683 = vsel %vm1101, %v3517, 0
      %v3686 = vsel %vm1101, %v3520, 0
      %v3689 = vsel %vm1101, %v3523, 0
      %v3692 = vsel %vm1101, %v3526, 0
      %v3695 = vsel %vm1101, %v3529, 0
      %v3698 = vsel %vm1101, %v3532, 0
      %v3701 = vsel %vm1101, %v3535, 0
      %v3704 = vsel %vm1101, %v3538, 0
      %v3707 = vsel %vm1101, %v3541, 0
      %v3710 = vsel %vm1101, %v3544, 0
      %v3713 = vsel %vm1101, %v3547, 0
      %v3716 = vsel %vm1101, %v3550, 0
      %v3719 = vsel %vm1101, %v3553, 0
      %3721 = vmatpush.xpose.msra.mxu0 %v3719
      %3722 = vmatpush.xpose.msra.mxu0 %v3716
      %3723 = vmatpush.xpose.msra.mxu0 %v3713
      %3724 = vmatpush.xpose.msra.mxu0 %v3710
      %3725 = vmatpush.xpose.msra.mxu0 %v3707
      %3726 = vmatpush.xpose.msra.mxu0 %v3704
      %3727 = vmatpush.xpose.msra.mxu0 %v3701
      %3728 = vmatpush.xpose.msra.mxu0 %v3698
      %3729 = vmatpush.xpose.msra.mxu0 %v3695
      %3730 = vmatpush.xpose.msra.mxu0 %v3692
      %3731 = vmatpush.xpose.msra.mxu0 %v3689
      %3732 = vmatpush.xpose.msra.mxu0 %v3686
      %3733 = vmatpush.xpose.msra.mxu0 %v3683
      %3734 = vmatpush.xpose.msra.mxu0 %v3680
      %3735 = vmatpush.xpose.msra.mxu0 %v3677
      %3736 = vmatpush.xpose.msra.mxu0 %v3674
      %3737 = vmatmul.f32.gmra.mxu0 %v3626
      %v3738 = vpop.f32.mrf.mxu0
      %v3739 = vadd.f32 %v531, %v3738
      %3740 = vmatmul.f32.gmra.mxu0 %v3629
      %v3741 = vpop.f32.mrf.mxu0
      %v3742 = vadd.f32 %v532, %v3741
      %3743 = vmatmul.f32.gmra.mxu0 %v3632
      %v3744 = vpop.f32.mrf.mxu0
      %v3745 = vadd.f32 %v533, %v3744
      %3746 = vmatmul.f32.gmra.mxu0 %v3635
      %v3747 = vpop.f32.mrf.mxu0
      %v3748 = vadd.f32 %v534, %v3747
      %3749 = vmatmul.f32.gmra.mxu0 %v3638
      %v3750 = vpop.f32.mrf.mxu0
      %v3751 = vadd.f32 %v535, %v3750
      %3752 = vmatmul.f32.gmra.mxu0 %v3641
      %v3753 = vpop.f32.mrf.mxu0
      %v3754 = vadd.f32 %v536, %v3753
      %3755 = vmatmul.f32.gmra.mxu0 %v3644
      %v3756 = vpop.f32.mrf.mxu0
      %v3757 = vadd.f32 %v537, %v3756
      %3758 = vmatmul.f32.gmra.mxu0 %v3647
      %v3759 = vpop.f32.mrf.mxu0
      %v3760 = vadd.f32 %v538, %v3759
      %3761 = vmatmul.f32.gmra.mxu0 %v3650
      %v3762 = vpop.f32.mrf.mxu0
      %v3763 = vadd.f32 %v539, %v3762
      %3764 = vmatmul.f32.gmra.mxu0 %v3653
      %v3765 = vpop.f32.mrf.mxu0
      %v3766 = vadd.f32 %v540, %v3765
      %3767 = vmatmul.f32.gmra.mxu0 %v3656
      %v3768 = vpop.f32.mrf.mxu0
      %v3769 = vadd.f32 %v541, %v3768
      %3770 = vmatmul.f32.gmra.mxu0 %v3659
      %v3771 = vpop.f32.mrf.mxu0
      %v3772 = vadd.f32 %v542, %v3771
      %3773 = vmatmul.f32.gmra.mxu0 %v3662
      %v3774 = vpop.f32.mrf.mxu0
      %v3775 = vadd.f32 %v543, %v3774
      %3776 = vmatmul.f32.gmra.mxu0 %v3665
      %v3777 = vpop.f32.mrf.mxu0
      %v3778 = vadd.f32 %v544, %v3777
      %3779 = vmatmul.f32.gmra.mxu0 %v3668
      %v3780 = vpop.f32.mrf.mxu0
      %v3781 = vadd.f32 %v545, %v3780
      %3782 = vmatmul.f32.gmra.mxu0 %v3671
      %v3783 = vpop.f32.mrf.mxu0
      %v3784 = vadd.f32 %v546, %v3783
      %3785 = vdwg.mxu0
      %3786 = vmax.xlane.f32.xlu0 %v3739
      %v3787 = vpop.xlane.xlu0 %3786
      %3788 = vmax.xlane.f32.xlu0 %v3742
      %v3789 = vpop.xlane.xlu0 %3788
      %3790 = vmax.xlane.f32.xlu0 %v3745
      %v3791 = vpop.xlane.xlu0 %3790
      %3792 = vmax.xlane.f32.xlu0 %v3748
      %v3793 = vpop.xlane.xlu0 %3792
      %3794 = vmax.xlane.f32.xlu0 %v3751
      %v3795 = vpop.xlane.xlu0 %3794
      %3796 = vmax.xlane.f32.xlu0 %v3754
      %v3797 = vpop.xlane.xlu0 %3796
      %3798 = vmax.xlane.f32.xlu0 %v3757
      %v3799 = vpop.xlane.xlu0 %3798
      %3800 = vmax.xlane.f32.xlu0 %v3760
      %v3801 = vpop.xlane.xlu0 %3800
      %3802 = vmax.xlane.f32.xlu0 %v3763
      %v3803 = vpop.xlane.xlu0 %3802
      %3804 = vmax.xlane.f32.xlu0 %v3766
      %v3805 = vpop.xlane.xlu0 %3804
      %3806 = vmax.xlane.f32.xlu0 %v3769
      %v3807 = vpop.xlane.xlu0 %3806
      %3808 = vmax.xlane.f32.xlu0 %v3772
      %v3809 = vpop.xlane.xlu0 %3808
      %3810 = vmax.xlane.f32.xlu0 %v3775
      %v3811 = vpop.xlane.xlu0 %3810
      %3812 = vmax.xlane.f32.xlu0 %v3778
      %v3813 = vpop.xlane.xlu0 %3812
      %3814 = vmax.xlane.f32.xlu0 %v3781
      %v3815 = vpop.xlane.xlu0 %3814
      %3816 = vmax.xlane.f32.xlu0 %v3784
      %v3817 = vpop.xlane.xlu0 %3816
      %v3818 = vsub.f32 %v3739, %v3787
      %v3819 = vsub.f32 %v3742, %v3789
      %v3820 = vsub.f32 %v3745, %v3791
      %v3821 = vsub.f32 %v3748, %v3793
      %v3822 = vsub.f32 %v3751, %v3795
      %v3823 = vsub.f32 %v3754, %v3797
      %v3824 = vsub.f32 %v3757, %v3799
      %v3825 = vsub.f32 %v3760, %v3801
      %v3826 = vsub.f32 %v3763, %v3803
      %v3827 = vsub.f32 %v3766, %v3805
      %v3828 = vsub.f32 %v3769, %v3807
      %v3829 = vsub.f32 %v3772, %v3809
      %v3830 = vsub.f32 %v3775, %v3811
      %v3831 = vsub.f32 %v3778, %v3813
      %v3832 = vsub.f32 %v3781, %v3815
      %v3833 = vsub.f32 %v3784, %v3817
      %v3834 = vmul.f32 %v3818, 1.442695
      %v3835 = vpow.pop %v3834
      %v3836 = vmul.f32 %v3819, 1.442695
      %v3837 = vpow.pop %v3836
      %v3838 = vmul.f32 %v3820, 1.442695
      %v3839 = vpow.pop %v3838
      %v3840 = vmul.f32 %v3821, 1.442695
      %v3841 = vpow.pop %v3840
      %v3842 = vmul.f32 %v3822, 1.442695
      %v3843 = vpow.pop %v3842
      %v3844 = vmul.f32 %v3823, 1.442695
      %v3845 = vpow.pop %v3844
      %v3846 = vmul.f32 %v3824, 1.442695
      %v3847 = vpow.pop %v3846
      %v3848 = vmul.f32 %v3825, 1.442695
      %v3849 = vpow.pop %v3848
      %v3850 = vmul.f32 %v3826, 1.442695
      %v3851 = vpow.pop %v3850
      %v3852 = vmul.f32 %v3827, 1.442695
      %v3853 = vpow.pop %v3852
      %v3854 = vmul.f32 %v3828, 1.442695
      %v3855 = vpow.pop %v3854
      %v3856 = vmul.f32 %v3829, 1.442695
      %v3857 = vpow.pop %v3856
      %v3858 = vmul.f32 %v3830, 1.442695
      %v3859 = vpow.pop %v3858
      %v3860 = vmul.f32 %v3831, 1.442695
      %v3861 = vpow.pop %v3860
      %v3862 = vmul.f32 %v3832, 1.442695
      %v3863 = vpow.pop %v3862
      %v3864 = vmul.f32 %v3833, 1.442695
      %v3865 = vpow.pop %v3864
      %3866 = vadd.xlane.f32.xlu0 %v3835
      %v3867 = vpop.xlane.xlu0 %3866
      %3868 = vadd.xlane.f32.xlu0 %v3837
      %v3869 = vpop.xlane.xlu0 %3868
      %3870 = vadd.xlane.f32.xlu0 %v3839
      %v3871 = vpop.xlane.xlu0 %3870
      %3872 = vadd.xlane.f32.xlu0 %v3841
      %v3873 = vpop.xlane.xlu0 %3872
      %3874 = vadd.xlane.f32.xlu0 %v3843
      %v3875 = vpop.xlane.xlu0 %3874
      %3876 = vadd.xlane.f32.xlu0 %v3845
      %v3877 = vpop.xlane.xlu0 %3876
      %3878 = vadd.xlane.f32.xlu0 %v3847
      %v3879 = vpop.xlane.xlu0 %3878
      %3880 = vadd.xlane.f32.xlu0 %v3849
      %v3881 = vpop.xlane.xlu0 %3880
      %3882 = vadd.xlane.f32.xlu0 %v3851
      %v3883 = vpop.xlane.xlu0 %3882
      %3884 = vadd.xlane.f32.xlu0 %v3853
      %v3885 = vpop.xlane.xlu0 %3884
      %3886 = vadd.xlane.f32.xlu0 %v3855
      %v3887 = vpop.xlane.xlu0 %3886
      %3888 = vadd.xlane.f32.xlu0 %v3857
      %v3889 = vpop.xlane.xlu0 %3888
      %3890 = vadd.xlane.f32.xlu0 %v3859
      %v3891 = vpop.xlane.xlu0 %3890
      %3892 = vadd.xlane.f32.xlu0 %v3861
      %v3893 = vpop.xlane.xlu0 %3892
      %3894 = vadd.xlane.f32.xlu0 %v3863
      %v3895 = vpop.xlane.xlu0 %3894
      %3896 = vadd.xlane.f32.xlu0 %v3865
      %v3897 = vpop.xlane.xlu0 %3896
      %v3898 = vrcp.pop %v3867
      %v3899 = vrcp.pop %v3869
      %v3900 = vrcp.pop %v3871
      %v3901 = vrcp.pop %v3873
      %v3902 = vrcp.pop %v3875
      %v3903 = vrcp.pop %v3877
      %v3904 = vrcp.pop %v3879
      %v3905 = vrcp.pop %v3881
      %v3906 = vrcp.pop %v3883
      %v3907 = vrcp.pop %v3885
      %v3908 = vrcp.pop %v3887
      %v3909 = vrcp.pop %v3889
      %v3910 = vrcp.pop %v3891
      %v3911 = vrcp.pop %v3893
      %v3912 = vrcp.pop %v3895
      %v3913 = vrcp.pop %v3897
      %v3914 = vmul.f32 %v3835, %v3898
      %v3915 = vmul.f32 %v3837, %v3899
      %v3916 = vmul.f32 %v3839, %v3900
      %v3917 = vmul.f32 %v3841, %v3901
      %v3918 = vmul.f32 %v3843, %v3902
      %v3919 = vmul.f32 %v3845, %v3903
      %v3920 = vmul.f32 %v3847, %v3904
      %v3921 = vmul.f32 %v3849, %v3905
      %v3922 = vmul.f32 %v3851, %v3906
      %v3923 = vmul.f32 %v3853, %v3907
      %v3924 = vmul.f32 %v3855, %v3908
      %v3925 = vmul.f32 %v3857, %v3909
      %v3926 = vmul.f32 %v3859, %v3910
      %v3927 = vmul.f32 %v3861, %v3911
      %v3928 = vmul.f32 %v3863, %v3912
      %v3929 = vmul.f32 %v3865, %v3913
      %3930 = vmatpush.msra.mxu0 %v3623
      %3931 = vmatpush.msra.mxu0 %v3620
      %3932 = vmatpush.msra.mxu0 %v3617
      %3933 = vmatpush.msra.mxu0 %v3614
      %3934 = vmatpush.msra.mxu0 %v3611
      %3935 = vmatpush.msra.mxu0 %v3608
      %3936 = vmatpush.msra.mxu0 %v3605
      %3937 = vmatpush.msra.mxu0 %v3602
      %3938 = vmatpush.msra.mxu0 %v3599
      %3939 = vmatpush.msra.mxu0 %v3596
      %3940 = vmatpush.msra.mxu0 %v3593
      %3941 = vmatpush.msra.mxu0 %v3590
      %3942 = vmatpush.msra.mxu0 %v3587
      %3943 = vmatpush.msra.mxu0 %v3584
      %3944 = vmatpush.msra.mxu0 %v3581
      %3945 = vmatpush.msra.mxu0 %v3578
      %3946 = vmatmul.f32.gmra.mxu0 %v3914
      %v3947 = vpop.f32.mrf.mxu0
      %v3948 = vadd.f32 0.0, %v3947
      %3949 = vmatmul.f32.gmra.mxu0 %v3915
      %v3950 = vpop.f32.mrf.mxu0
      %v3951 = vadd.f32 0.0, %v3950
      %3952 = vmatmul.f32.gmra.mxu0 %v3916
      %v3953 = vpop.f32.mrf.mxu0
      %v3954 = vadd.f32 0.0, %v3953
      %3955 = vmatmul.f32.gmra.mxu0 %v3917
      %v3956 = vpop.f32.mrf.mxu0
      %v3957 = vadd.f32 0.0, %v3956
      %3958 = vmatmul.f32.gmra.mxu0 %v3918
      %v3959 = vpop.f32.mrf.mxu0
      %v3960 = vadd.f32 0.0, %v3959
      %3961 = vmatmul.f32.gmra.mxu0 %v3919
      %v3962 = vpop.f32.mrf.mxu0
      %v3963 = vadd.f32 0.0, %v3962
      %3964 = vmatmul.f32.gmra.mxu0 %v3920
      %v3965 = vpop.f32.mrf.mxu0
      %v3966 = vadd.f32 0.0, %v3965
      %3967 = vmatmul.f32.gmra.mxu0 %v3921
      %v3968 = vpop.f32.mrf.mxu0
      %v3969 = vadd.f32 0.0, %v3968
      %3970 = vmatmul.f32.gmra.mxu0 %v3922
      %v3971 = vpop.f32.mrf.mxu0
      %v3972 = vadd.f32 0.0, %v3971
      %3973 = vmatmul.f32.gmra.mxu0 %v3923
      %v3974 = vpop.f32.mrf.mxu0
      %v3975 = vadd.f32 0.0, %v3974
      %3976 = vmatmul.f32.gmra.mxu0 %v3924
      %v3977 = vpop.f32.mrf.mxu0
      %v3978 = vadd.f32 0.0, %v3977
      %3979 = vmatmul.f32.gmra.mxu0 %v3925
      %v3980 = vpop.f32.mrf.mxu0
      %v3981 = vadd.f32 0.0, %v3980
      %3982 = vmatmul.f32.gmra.mxu0 %v3926
      %v3983 = vpop.f32.mrf.mxu0
      %v3984 = vadd.f32 0.0, %v3983
      %3985 = vmatmul.f32.gmra.mxu0 %v3927
      %v3986 = vpop.f32.mrf.mxu0
      %v3987 = vadd.f32 0.0, %v3986
      %3988 = vmatmul.f32.gmra.mxu0 %v3928
      %v3989 = vpop.f32.mrf.mxu0
      %v3990 = vadd.f32 0.0, %v3989
      %3991 = vmatmul.f32.gmra.mxu0 %v3929
      %v3992 = vpop.f32.mrf.mxu0
      %v3993 = vadd.f32 0.0, %v3992
      %3994 = vdwg.mxu0
      %s3995 = scalar_lea.vmem %s3, 448
      %v3996 = vld [vmem:[%s3995] sm:$0xff]
      %v3997 = vld [vmem:[%s3995 + $0x8] sm:$0xff]
      %v3998 = vld [vmem:[%s3995 + $0x10] sm:$0xff]
      %v3999 = vld [vmem:[%s3995 + $0x18] sm:$0xff]
      %v4001 = vsel %vm1101, %v3948, 0
      %v4004 = vsel %vm1101, %v3951, 0
      %v4007 = vsel %vm1101, %v3954, 0
      %v4010 = vsel %vm1101, %v3957, 0
      %v4013 = vsel %vm1101, %v3960, 0
      %v4016 = vsel %vm1101, %v3963, 0
      %v4019 = vsel %vm1101, %v3966, 0
      %v4022 = vsel %vm1101, %v3969, 0
      %v4025 = vsel %vm1101, %v3972, 0
      %v4028 = vsel %vm1101, %v3975, 0
      %v4031 = vsel %vm1101, %v3978, 0
      %v4034 = vsel %vm1101, %v3981, 0
      %v4037 = vsel %vm1101, %v3984, 0
      %v4040 = vsel %vm1101, %v3987, 0
      %v4043 = vsel %vm1101, %v3990, 0
      %v4046 = vsel %vm1101, %v3993, 0
      %v4049 = vsel %vm1101, %v3996, 0
      %v4052 = vsel %vm1101, %v3997, 0
      %v4055 = vsel %vm1101, %v3998, 0
      %v4058 = vsel %vm1101, %v3999, 0
      %4060 = vmatpush.xpose.msra.mxu0 0.0
      %4061 = vmatpush.xpose.msra.mxu0 0.0
      %4062 = vmatpush.xpose.msra.mxu0 0.0
      %4063 = vmatpush.xpose.msra.mxu0 0.0
      %4064 = vmatpush.xpose.msra.mxu0 0.0
      %4065 = vmatpush.xpose.msra.mxu0 0.0
      %4066 = vmatpush.xpose.msra.mxu0 0.0
      %4067 = vmatpush.xpose.msra.mxu0 0.0
      %4068 = vmatpush.xpose.msra.mxu0 0.0
      %4069 = vmatpush.xpose.msra.mxu0 0.0
      %4070 = vmatpush.xpose.msra.mxu0 0.0
      %4071 = vmatpush.xpose.msra.mxu0 0.0
      %4072 = vmatpush.xpose.msra.mxu0 %v4058
      %4073 = vmatpush.xpose.msra.mxu0 %v4055
      %4074 = vmatpush.xpose.msra.mxu0 %v4052
      %4075 = vmatpush.xpose.msra.mxu0 %v4049
      %4076 = vmatmul.f32.gmra.mxu0 %v4001
      %v4077 = vpop.f32.mrf.mxu0
      %v4078 = vadd.f32 0.0, %v4077
      %4079 = vmatmul.f32.gmra.mxu0 %v4004
      %v4080 = vpop.f32.mrf.mxu0
      %v4081 = vadd.f32 0.0, %v4080
      %4082 = vmatmul.f32.gmra.mxu0 %v4007
      %v4083 = vpop.f32.mrf.mxu0
      %v4084 = vadd.f32 0.0, %v4083
      %4085 = vmatmul.f32.gmra.mxu0 %v4010
      %v4086 = vpop.f32.mrf.mxu0
      %v4087 = vadd.f32 0.0, %v4086
      %4088 = vmatmul.f32.gmra.mxu0 %v4013
      %v4089 = vpop.f32.mrf.mxu0
      %v4090 = vadd.f32 0.0, %v4089
      %4091 = vmatmul.f32.gmra.mxu0 %v4016
      %v4092 = vpop.f32.mrf.mxu0
      %v4093 = vadd.f32 0.0, %v4092
      %4094 = vmatmul.f32.gmra.mxu0 %v4019
      %v4095 = vpop.f32.mrf.mxu0
      %v4096 = vadd.f32 0.0, %v4095
      %4097 = vmatmul.f32.gmra.mxu0 %v4022
      %v4098 = vpop.f32.mrf.mxu0
      %v4099 = vadd.f32 0.0, %v4098
      %4100 = vmatmul.f32.gmra.mxu0 %v4025
      %v4101 = vpop.f32.mrf.mxu0
      %v4102 = vadd.f32 0.0, %v4101
      %4103 = vmatmul.f32.gmra.mxu0 %v4028
      %v4104 = vpop.f32.mrf.mxu0
      %v4105 = vadd.f32 0.0, %v4104
      %4106 = vmatmul.f32.gmra.mxu0 %v4031
      %v4107 = vpop.f32.mrf.mxu0
      %v4108 = vadd.f32 0.0, %v4107
      %4109 = vmatmul.f32.gmra.mxu0 %v4034
      %v4110 = vpop.f32.mrf.mxu0
      %v4111 = vadd.f32 0.0, %v4110
      %4112 = vmatmul.f32.gmra.mxu0 %v4037
      %v4113 = vpop.f32.mrf.mxu0
      %v4114 = vadd.f32 0.0, %v4113
      %4115 = vmatmul.f32.gmra.mxu0 %v4040
      %v4116 = vpop.f32.mrf.mxu0
      %v4117 = vadd.f32 0.0, %v4116
      %4118 = vmatmul.f32.gmra.mxu0 %v4043
      %v4119 = vpop.f32.mrf.mxu0
      %v4120 = vadd.f32 0.0, %v4119
      %4121 = vmatmul.f32.gmra.mxu0 %v4046
      %v4122 = vpop.f32.mrf.mxu0
      %v4123 = vadd.f32 0.0, %v4122
      %4124 = vdwg.mxu0
      %v4125 = vadd.f32 %v3062, %v4078
      %v4126 = vadd.f32 %v3063, %v4081
      %v4127 = vadd.f32 %v3064, %v4084
      %v4128 = vadd.f32 %v3065, %v4087
      %v4129 = vadd.f32 %v3066, %v4090
      %v4130 = vadd.f32 %v3067, %v4093
      %v4131 = vadd.f32 %v3068, %v4096
      %v4132 = vadd.f32 %v3069, %v4099
      %v4133 = vadd.f32 %v3070, %v4102
      %v4134 = vadd.f32 %v3071, %v4105
      %v4135 = vadd.f32 %v3072, %v4108
      %v4136 = vadd.f32 %v3073, %v4111
      %v4137 = vadd.f32 %v3074, %v4114
      %v4138 = vadd.f32 %v3075, %v4117
      %v4139 = vadd.f32 %v3076, %v4120
      %v4140 = vadd.f32 %v3077, %v4123
      %s4141 = scalar_lea.vmem %s3, 288
      %v4142 = vld [vmem:[%s4141] sm:$0xff]
      %v4143 = vld [vmem:[%s4141 + $0x8] sm:$0xff]
      %v4144 = vld [vmem:[%s4141 + $0x10] sm:$0xff]
      %v4145 = vld [vmem:[%s4141 + $0x18] sm:$0xff]
      %4146 = vmatpush.msra.mxu0 0.0
      %4147 = vmatpush.msra.mxu0 0.0
      %4148 = vmatpush.msra.mxu0 0.0
      %4149 = vmatpush.msra.mxu0 0.0
      %4150 = vmatpush.msra.mxu0 0.0
      %4151 = vmatpush.msra.mxu0 0.0
      %4152 = vmatpush.msra.mxu0 0.0
      %4153 = vmatpush.msra.mxu0 0.0
      %4154 = vmatpush.msra.mxu0 0.0
      %4155 = vmatpush.msra.mxu0 0.0
      %4156 = vmatpush.msra.mxu0 0.0
      %4157 = vmatpush.msra.mxu0 0.0
      %4158 = vmatpush.msra.mxu0 %v4145
      %4159 = vmatpush.msra.mxu0 %v4144
      %4160 = vmatpush.msra.mxu0 %v4143
      %4161 = vmatpush.msra.mxu0 %v4142
      %4162 = vmatmul.f32.gmra.mxu0 %v3373
      %v4163 = vpop.f32.mrf.mxu0
      %v4164 = vadd.f32 0.0, %v4163
      %4165 = vmatmul.f32.gmra.mxu0 %v3376
      %v4166 = vpop.f32.mrf.mxu0
      %v4167 = vadd.f32 0.0, %v4166
      %4168 = vmatmul.f32.gmra.mxu0 %v3379
      %v4169 = vpop.f32.mrf.mxu0
      %v4170 = vadd.f32 0.0, %v4169
      %4171 = vmatmul.f32.gmra.mxu0 %v3382
      %v4172 = vpop.f32.mrf.mxu0
      %v4173 = vadd.f32 0.0, %v4172
      %4174 = vmatmul.f32.gmra.mxu0 %v3385
      %v4175 = vpop.f32.mrf.mxu0
      %v4176 = vadd.f32 0.0, %v4175
      %4177 = vmatmul.f32.gmra.mxu0 %v3388
      %v4178 = vpop.f32.mrf.mxu0
      %v4179 = vadd.f32 0.0, %v4178
      %4180 = vmatmul.f32.gmra.mxu0 %v3391
      %v4181 = vpop.f32.mrf.mxu0
      %v4182 = vadd.f32 0.0, %v4181
      %4183 = vmatmul.f32.gmra.mxu0 %v3394
      %v4184 = vpop.f32.mrf.mxu0
      %v4185 = vadd.f32 0.0, %v4184
      %4186 = vmatmul.f32.gmra.mxu0 %v3397
      %v4187 = vpop.f32.mrf.mxu0
      %v4188 = vadd.f32 0.0, %v4187
      %4189 = vmatmul.f32.gmra.mxu0 %v3400
      %v4190 = vpop.f32.mrf.mxu0
      %v4191 = vadd.f32 0.0, %v4190
      %4192 = vmatmul.f32.gmra.mxu0 %v3403
      %v4193 = vpop.f32.mrf.mxu0
      %v4194 = vadd.f32 0.0, %v4193
      %4195 = vmatmul.f32.gmra.mxu0 %v3406
      %v4196 = vpop.f32.mrf.mxu0
      %v4197 = vadd.f32 0.0, %v4196
      %4198 = vmatmul.f32.gmra.mxu0 %v3409
      %v4199 = vpop.f32.mrf.mxu0
      %v4200 = vadd.f32 0.0, %v4199
      %4201 = vmatmul.f32.gmra.mxu0 %v3412
      %v4202 = vpop.f32.mrf.mxu0
      %v4203 = vadd.f32 0.0, %v4202
      %4204 = vmatmul.f32.gmra.mxu0 %v3415
      %v4205 = vpop.f32.mrf.mxu0
      %v4206 = vadd.f32 0.0, %v4205
      %4207 = vmatmul.f32.gmra.mxu0 %v3418
      %v4208 = vpop.f32.mrf.mxu0
      %v4209 = vadd.f32 0.0, %v4208
      %4210 = vdwg.mxu0
      %s4211 = scalar_lea.vmem %s3, 352
      %v4212 = vld [vmem:[%s4211] sm:$0xff]
      %v4213 = vld [vmem:[%s4211 + $0x8] sm:$0xff]
      %v4214 = vld [vmem:[%s4211 + $0x10] sm:$0xff]
      %v4215 = vld [vmem:[%s4211 + $0x18] sm:$0xff]
      %4216 = vmatpush.msra.mxu0 0.0
      %4217 = vmatpush.msra.mxu0 0.0
      %4218 = vmatpush.msra.mxu0 0.0
      %4219 = vmatpush.msra.mxu0 0.0
      %4220 = vmatpush.msra.mxu0 0.0
      %4221 = vmatpush.msra.mxu0 0.0
      %4222 = vmatpush.msra.mxu0 0.0
      %4223 = vmatpush.msra.mxu0 0.0
      %4224 = vmatpush.msra.mxu0 0.0
      %4225 = vmatpush.msra.mxu0 0.0
      %4226 = vmatpush.msra.mxu0 0.0
      %4227 = vmatpush.msra.mxu0 0.0
      %4228 = vmatpush.msra.mxu0 %v4215
      %4229 = vmatpush.msra.mxu0 %v4214
      %4230 = vmatpush.msra.mxu0 %v4213
      %4231 = vmatpush.msra.mxu0 %v4212
      %4232 = vmatmul.f32.gmra.mxu0 %v3373
      %v4233 = vpop.f32.mrf.mxu0
      %v4234 = vadd.f32 0.0, %v4233
      %4235 = vmatmul.f32.gmra.mxu0 %v3376
      %v4236 = vpop.f32.mrf.mxu0
      %v4237 = vadd.f32 0.0, %v4236
      %4238 = vmatmul.f32.gmra.mxu0 %v3379
      %v4239 = vpop.f32.mrf.mxu0
      %v4240 = vadd.f32 0.0, %v4239
      %4241 = vmatmul.f32.gmra.mxu0 %v3382
      %v4242 = vpop.f32.mrf.mxu0
      %v4243 = vadd.f32 0.0, %v4242
      %4244 = vmatmul.f32.gmra.mxu0 %v3385
      %v4245 = vpop.f32.mrf.mxu0
      %v4246 = vadd.f32 0.0, %v4245
      %4247 = vmatmul.f32.gmra.mxu0 %v3388
      %v4248 = vpop.f32.mrf.mxu0
      %v4249 = vadd.f32 0.0, %v4248
      %4250 = vmatmul.f32.gmra.mxu0 %v3391
      %v4251 = vpop.f32.mrf.mxu0
      %v4252 = vadd.f32 0.0, %v4251
      %4253 = vmatmul.f32.gmra.mxu0 %v3394
      %v4254 = vpop.f32.mrf.mxu0
      %v4255 = vadd.f32 0.0, %v4254
      %4256 = vmatmul.f32.gmra.mxu0 %v3397
      %v4257 = vpop.f32.mrf.mxu0
      %v4258 = vadd.f32 0.0, %v4257
      %4259 = vmatmul.f32.gmra.mxu0 %v3400
      %v4260 = vpop.f32.mrf.mxu0
      %v4261 = vadd.f32 0.0, %v4260
      %4262 = vmatmul.f32.gmra.mxu0 %v3403
      %v4263 = vpop.f32.mrf.mxu0
      %v4264 = vadd.f32 0.0, %v4263
      %4265 = vmatmul.f32.gmra.mxu0 %v3406
      %v4266 = vpop.f32.mrf.mxu0
      %v4267 = vadd.f32 0.0, %v4266
      %4268 = vmatmul.f32.gmra.mxu0 %v3409
      %v4269 = vpop.f32.mrf.mxu0
      %v4270 = vadd.f32 0.0, %v4269
      %4271 = vmatmul.f32.gmra.mxu0 %v3412
      %v4272 = vpop.f32.mrf.mxu0
      %v4273 = vadd.f32 0.0, %v4272
      %4274 = vmatmul.f32.gmra.mxu0 %v3415
      %v4275 = vpop.f32.mrf.mxu0
      %v4276 = vadd.f32 0.0, %v4275
      %4277 = vmatmul.f32.gmra.mxu0 %v3418
      %v4278 = vpop.f32.mrf.mxu0
      %v4279 = vadd.f32 0.0, %v4278
      %4280 = vdwg.mxu0
      %s4281 = scalar_lea.vmem %s3, 416
      %v4282 = vld [vmem:[%s4281] sm:$0xff]
      %v4283 = vld [vmem:[%s4281 + $0x8] sm:$0xff]
      %v4284 = vld [vmem:[%s4281 + $0x10] sm:$0xff]
      %v4285 = vld [vmem:[%s4281 + $0x18] sm:$0xff]
      %4286 = vmatpush.msra.mxu0 0.0
      %4287 = vmatpush.msra.mxu0 0.0
      %4288 = vmatpush.msra.mxu0 0.0
      %4289 = vmatpush.msra.mxu0 0.0
      %4290 = vmatpush.msra.mxu0 0.0
      %4291 = vmatpush.msra.mxu0 0.0
      %4292 = vmatpush.msra.mxu0 0.0
      %4293 = vmatpush.msra.mxu0 0.0
      %4294 = vmatpush.msra.mxu0 0.0
      %4295 = vmatpush.msra.mxu0 0.0
      %4296 = vmatpush.msra.mxu0 0.0
      %4297 = vmatpush.msra.mxu0 0.0
      %4298 = vmatpush.msra.mxu0 %v4285
      %4299 = vmatpush.msra.mxu0 %v4284
      %4300 = vmatpush.msra.mxu0 %v4283
      %4301 = vmatpush.msra.mxu0 %v4282
      %4302 = vmatmul.f32.gmra.mxu0 %v3373
      %v4303 = vpop.f32.mrf.mxu0
      %v4304 = vadd.f32 0.0, %v4303
      %4305 = vmatmul.f32.gmra.mxu0 %v3376
      %v4306 = vpop.f32.mrf.mxu0
      %v4307 = vadd.f32 0.0, %v4306
      %4308 = vmatmul.f32.gmra.mxu0 %v3379
      %v4309 = vpop.f32.mrf.mxu0
      %v4310 = vadd.f32 0.0, %v4309
      %4311 = vmatmul.f32.gmra.mxu0 %v3382
      %v4312 = vpop.f32.mrf.mxu0
      %v4313 = vadd.f32 0.0, %v4312
      %4314 = vmatmul.f32.gmra.mxu0 %v3385
      %v4315 = vpop.f32.mrf.mxu0
      %v4316 = vadd.f32 0.0, %v4315
      %4317 = vmatmul.f32.gmra.mxu0 %v3388
      %v4318 = vpop.f32.mrf.mxu0
      %v4319 = vadd.f32 0.0, %v4318
      %4320 = vmatmul.f32.gmra.mxu0 %v3391
      %v4321 = vpop.f32.mrf.mxu0
      %v4322 = vadd.f32 0.0, %v4321
      %4323 = vmatmul.f32.gmra.mxu0 %v3394
      %v4324 = vpop.f32.mrf.mxu0
      %v4325 = vadd.f32 0.0, %v4324
      %4326 = vmatmul.f32.gmra.mxu0 %v3397
      %v4327 = vpop.f32.mrf.mxu0
      %v4328 = vadd.f32 0.0, %v4327
      %4329 = vmatmul.f32.gmra.mxu0 %v3400
      %v4330 = vpop.f32.mrf.mxu0
      %v4331 = vadd.f32 0.0, %v4330
      %4332 = vmatmul.f32.gmra.mxu0 %v3403
      %v4333 = vpop.f32.mrf.mxu0
      %v4334 = vadd.f32 0.0, %v4333
      %4335 = vmatmul.f32.gmra.mxu0 %v3406
      %v4336 = vpop.f32.mrf.mxu0
      %v4337 = vadd.f32 0.0, %v4336
      %4338 = vmatmul.f32.gmra.mxu0 %v3409
      %v4339 = vpop.f32.mrf.mxu0
      %v4340 = vadd.f32 0.0, %v4339
      %4341 = vmatmul.f32.gmra.mxu0 %v3412
      %v4342 = vpop.f32.mrf.mxu0
      %v4343 = vadd.f32 0.0, %v4342
      %4344 = vmatmul.f32.gmra.mxu0 %v3415
      %v4345 = vpop.f32.mrf.mxu0
      %v4346 = vadd.f32 0.0, %v4345
      %4347 = vmatmul.f32.gmra.mxu0 %v3418
      %v4348 = vpop.f32.mrf.mxu0
      %v4349 = vadd.f32 0.0, %v4348
      %4350 = vdwg.mxu0
      %v4352 = vsel %vm1101, %v4164, 0
      %v4355 = vsel %vm1101, %v4167, 0
      %v4358 = vsel %vm1101, %v4170, 0
      %v4361 = vsel %vm1101, %v4173, 0
      %v4364 = vsel %vm1101, %v4176, 0
      %v4367 = vsel %vm1101, %v4179, 0
      %v4370 = vsel %vm1101, %v4182, 0
      %v4373 = vsel %vm1101, %v4185, 0
      %v4376 = vsel %vm1101, %v4188, 0
      %v4379 = vsel %vm1101, %v4191, 0
      %v4382 = vsel %vm1101, %v4194, 0
      %v4385 = vsel %vm1101, %v4197, 0
      %v4388 = vsel %vm1101, %v4200, 0
      %v4391 = vsel %vm1101, %v4203, 0
      %v4394 = vsel %vm1101, %v4206, 0
      %v4397 = vsel %vm1101, %v4209, 0
      %v4400 = vsel %vm1101, %v4234, 0
      %v4403 = vsel %vm1101, %v4237, 0
      %v4406 = vsel %vm1101, %v4240, 0
      %v4409 = vsel %vm1101, %v4243, 0
      %v4412 = vsel %vm1101, %v4246, 0
      %v4415 = vsel %vm1101, %v4249, 0
      %v4418 = vsel %vm1101, %v4252, 0
      %v4421 = vsel %vm1101, %v4255, 0
      %v4424 = vsel %vm1101, %v4258, 0
      %v4427 = vsel %vm1101, %v4261, 0
      %v4430 = vsel %vm1101, %v4264, 0
      %v4433 = vsel %vm1101, %v4267, 0
      %v4436 = vsel %vm1101, %v4270, 0
      %v4439 = vsel %vm1101, %v4273, 0
      %v4442 = vsel %vm1101, %v4276, 0
      %v4445 = vsel %vm1101, %v4279, 0
      %4447 = vmatpush.xpose.msra.mxu0 %v4445
      %4448 = vmatpush.xpose.msra.mxu0 %v4442
      %4449 = vmatpush.xpose.msra.mxu0 %v4439
      %4450 = vmatpush.xpose.msra.mxu0 %v4436
      %4451 = vmatpush.xpose.msra.mxu0 %v4433
      %4452 = vmatpush.xpose.msra.mxu0 %v4430
      %4453 = vmatpush.xpose.msra.mxu0 %v4427
      %4454 = vmatpush.xpose.msra.mxu0 %v4424
      %4455 = vmatpush.xpose.msra.mxu0 %v4421
      %4456 = vmatpush.xpose.msra.mxu0 %v4418
      %4457 = vmatpush.xpose.msra.mxu0 %v4415
      %4458 = vmatpush.xpose.msra.mxu0 %v4412
      %4459 = vmatpush.xpose.msra.mxu0 %v4409
      %4460 = vmatpush.xpose.msra.mxu0 %v4406
      %4461 = vmatpush.xpose.msra.mxu0 %v4403
      %4462 = vmatpush.xpose.msra.mxu0 %v4400
      %4463 = vmatmul.f32.gmra.mxu0 %v4352
      %v4464 = vpop.f32.mrf.mxu0
      %v4465 = vadd.f32 %v531, %v4464
      %4466 = vmatmul.f32.gmra.mxu0 %v4355
      %v4467 = vpop.f32.mrf.mxu0
      %v4468 = vadd.f32 %v532, %v4467
      %4469 = vmatmul.f32.gmra.mxu0 %v4358
      %v4470 = vpop.f32.mrf.mxu0
      %v4471 = vadd.f32 %v533, %v4470
      %4472 = vmatmul.f32.gmra.mxu0 %v4361
      %v4473 = vpop.f32.mrf.mxu0
      %v4474 = vadd.f32 %v534, %v4473
      %4475 = vmatmul.f32.gmra.mxu0 %v4364
      %v4476 = vpop.f32.mrf.mxu0
      %v4477 = vadd.f32 %v535, %v4476
      %4478 = vmatmul.f32.gmra.mxu0 %v4367
      %v4479 = vpop.f32.mrf.mxu0
      %v4480 = vadd.f32 %v536, %v4479
      %4481 = vmatmul.f32.gmra.mxu0 %v4370
      %v4482 = vpop.f32.mrf.mxu0
      %v4483 = vadd.f32 %v537, %v4482
      %4484 = vmatmul.f32.gmra.mxu0 %v4373
      %v4485 = vpop.f32.mrf.mxu0
      %v4486 = vadd.f32 %v538, %v4485
      %4487 = vmatmul.f32.gmra.mxu0 %v4376
      %v4488 = vpop.f32.mrf.mxu0
      %v4489 = vadd.f32 %v539, %v4488
      %4490 = vmatmul.f32.gmra.mxu0 %v4379
      %v4491 = vpop.f32.mrf.mxu0
      %v4492 = vadd.f32 %v540, %v4491
      %4493 = vmatmul.f32.gmra.mxu0 %v4382
      %v4494 = vpop.f32.mrf.mxu0
      %v4495 = vadd.f32 %v541, %v4494
      %4496 = vmatmul.f32.gmra.mxu0 %v4385
      %v4497 = vpop.f32.mrf.mxu0
      %v4498 = vadd.f32 %v542, %v4497
      %4499 = vmatmul.f32.gmra.mxu0 %v4388
      %v4500 = vpop.f32.mrf.mxu0
      %v4501 = vadd.f32 %v543, %v4500
      %4502 = vmatmul.f32.gmra.mxu0 %v4391
      %v4503 = vpop.f32.mrf.mxu0
      %v4504 = vadd.f32 %v544, %v4503
      %4505 = vmatmul.f32.gmra.mxu0 %v4394
      %v4506 = vpop.f32.mrf.mxu0
      %v4507 = vadd.f32 %v545, %v4506
      %4508 = vmatmul.f32.gmra.mxu0 %v4397
      %v4509 = vpop.f32.mrf.mxu0
      %v4510 = vadd.f32 %v546, %v4509
      %4511 = vdwg.mxu0
      %4512 = vmax.xlane.f32.xlu0 %v4465
      %v4513 = vpop.xlane.xlu0 %4512
      %4514 = vmax.xlane.f32.xlu0 %v4468
      %v4515 = vpop.xlane.xlu0 %4514
      %4516 = vmax.xlane.f32.xlu0 %v4471
      %v4517 = vpop.xlane.xlu0 %4516
      %4518 = vmax.xlane.f32.xlu0 %v4474
      %v4519 = vpop.xlane.xlu0 %4518
      %4520 = vmax.xlane.f32.xlu0 %v4477
      %v4521 = vpop.xlane.xlu0 %4520
      %4522 = vmax.xlane.f32.xlu0 %v4480
      %v4523 = vpop.xlane.xlu0 %4522
      %4524 = vmax.xlane.f32.xlu0 %v4483
      %v4525 = vpop.xlane.xlu0 %4524
      %4526 = vmax.xlane.f32.xlu0 %v4486
      %v4527 = vpop.xlane.xlu0 %4526
      %4528 = vmax.xlane.f32.xlu0 %v4489
      %v4529 = vpop.xlane.xlu0 %4528
      %4530 = vmax.xlane.f32.xlu0 %v4492
      %v4531 = vpop.xlane.xlu0 %4530
      %4532 = vmax.xlane.f32.xlu0 %v4495
      %v4533 = vpop.xlane.xlu0 %4532
      %4534 = vmax.xlane.f32.xlu0 %v4498
      %v4535 = vpop.xlane.xlu0 %4534
      %4536 = vmax.xlane.f32.xlu0 %v4501
      %v4537 = vpop.xlane.xlu0 %4536
      %4538 = vmax.xlane.f32.xlu0 %v4504
      %v4539 = vpop.xlane.xlu0 %4538
      %4540 = vmax.xlane.f32.xlu0 %v4507
      %v4541 = vpop.xlane.xlu0 %4540
      %4542 = vmax.xlane.f32.xlu0 %v4510
      %v4543 = vpop.xlane.xlu0 %4542
      %v4544 = vsub.f32 %v4465, %v4513
      %v4545 = vsub.f32 %v4468, %v4515
      %v4546 = vsub.f32 %v4471, %v4517
      %v4547 = vsub.f32 %v4474, %v4519
      %v4548 = vsub.f32 %v4477, %v4521
      %v4549 = vsub.f32 %v4480, %v4523
      %v4550 = vsub.f32 %v4483, %v4525
      %v4551 = vsub.f32 %v4486, %v4527
      %v4552 = vsub.f32 %v4489, %v4529
      %v4553 = vsub.f32 %v4492, %v4531
      %v4554 = vsub.f32 %v4495, %v4533
      %v4555 = vsub.f32 %v4498, %v4535
      %v4556 = vsub.f32 %v4501, %v4537
      %v4557 = vsub.f32 %v4504, %v4539
      %v4558 = vsub.f32 %v4507, %v4541
      %v4559 = vsub.f32 %v4510, %v4543
      %v4560 = vmul.f32 %v4544, 1.442695
      %v4561 = vpow.pop %v4560
      %v4562 = vmul.f32 %v4545, 1.442695
      %v4563 = vpow.pop %v4562
      %v4564 = vmul.f32 %v4546, 1.442695
      %v4565 = vpow.pop %v4564
      %v4566 = vmul.f32 %v4547, 1.442695
      %v4567 = vpow.pop %v4566
      %v4568 = vmul.f32 %v4548, 1.442695
      %v4569 = vpow.pop %v4568
      %v4570 = vmul.f32 %v4549, 1.442695
      %v4571 = vpow.pop %v4570
      %v4572 = vmul.f32 %v4550, 1.442695
      %v4573 = vpow.pop %v4572
      %v4574 = vmul.f32 %v4551, 1.442695
      %v4575 = vpow.pop %v4574
      %v4576 = vmul.f32 %v4552, 1.442695
      %v4577 = vpow.pop %v4576
      %v4578 = vmul.f32 %v4553, 1.442695
      %v4579 = vpow.pop %v4578
      %v4580 = vmul.f32 %v4554, 1.442695
      %v4581 = vpow.pop %v4580
      %v4582 = vmul.f32 %v4555, 1.442695
      %v4583 = vpow.pop %v4582
      %v4584 = vmul.f32 %v4556, 1.442695
      %v4585 = vpow.pop %v4584
      %v4586 = vmul.f32 %v4557, 1.442695
      %v4587 = vpow.pop %v4586
      %v4588 = vmul.f32 %v4558, 1.442695
      %v4589 = vpow.pop %v4588
      %v4590 = vmul.f32 %v4559, 1.442695
      %v4591 = vpow.pop %v4590
      %4592 = vadd.xlane.f32.xlu0 %v4561
      %v4593 = vpop.xlane.xlu0 %4592
      %4594 = vadd.xlane.f32.xlu0 %v4563
      %v4595 = vpop.xlane.xlu0 %4594
      %4596 = vadd.xlane.f32.xlu0 %v4565
      %v4597 = vpop.xlane.xlu0 %4596
      %4598 = vadd.xlane.f32.xlu0 %v4567
      %v4599 = vpop.xlane.xlu0 %4598
      %4600 = vadd.xlane.f32.xlu0 %v4569
      %v4601 = vpop.xlane.xlu0 %4600
      %4602 = vadd.xlane.f32.xlu0 %v4571
      %v4603 = vpop.xlane.xlu0 %4602
      %4604 = vadd.xlane.f32.xlu0 %v4573
      %v4605 = vpop.xlane.xlu0 %4604
      %4606 = vadd.xlane.f32.xlu0 %v4575
      %v4607 = vpop.xlane.xlu0 %4606
      %4608 = vadd.xlane.f32.xlu0 %v4577
      %v4609 = vpop.xlane.xlu0 %4608
      %4610 = vadd.xlane.f32.xlu0 %v4579
      %v4611 = vpop.xlane.xlu0 %4610
      %4612 = vadd.xlane.f32.xlu0 %v4581
      %v4613 = vpop.xlane.xlu0 %4612
      %4614 = vadd.xlane.f32.xlu0 %v4583
      %v4615 = vpop.xlane.xlu0 %4614
      %4616 = vadd.xlane.f32.xlu0 %v4585
      %v4617 = vpop.xlane.xlu0 %4616
      %4618 = vadd.xlane.f32.xlu0 %v4587
      %v4619 = vpop.xlane.xlu0 %4618
      %4620 = vadd.xlane.f32.xlu0 %v4589
      %v4621 = vpop.xlane.xlu0 %4620
      %4622 = vadd.xlane.f32.xlu0 %v4591
      %v4623 = vpop.xlane.xlu0 %4622
      %v4624 = vrcp.pop %v4593
      %v4625 = vrcp.pop %v4595
      %v4626 = vrcp.pop %v4597
      %v4627 = vrcp.pop %v4599
      %v4628 = vrcp.pop %v4601
      %v4629 = vrcp.pop %v4603
      %v4630 = vrcp.pop %v4605
      %v4631 = vrcp.pop %v4607
      %v4632 = vrcp.pop %v4609
      %v4633 = vrcp.pop %v4611
      %v4634 = vrcp.pop %v4613
      %v4635 = vrcp.pop %v4615
      %v4636 = vrcp.pop %v4617
      %v4637 = vrcp.pop %v4619
      %v4638 = vrcp.pop %v4621
      %v4639 = vrcp.pop %v4623
      %v4640 = vmul.f32 %v4561, %v4624
      %v4641 = vmul.f32 %v4563, %v4625
      %v4642 = vmul.f32 %v4565, %v4626
      %v4643 = vmul.f32 %v4567, %v4627
      %v4644 = vmul.f32 %v4569, %v4628
      %v4645 = vmul.f32 %v4571, %v4629
      %v4646 = vmul.f32 %v4573, %v4630
      %v4647 = vmul.f32 %v4575, %v4631
      %v4648 = vmul.f32 %v4577, %v4632
      %v4649 = vmul.f32 %v4579, %v4633
      %v4650 = vmul.f32 %v4581, %v4634
      %v4651 = vmul.f32 %v4583, %v4635
      %v4652 = vmul.f32 %v4585, %v4636
      %v4653 = vmul.f32 %v4587, %v4637
      %v4654 = vmul.f32 %v4589, %v4638
      %v4655 = vmul.f32 %v4591, %v4639
      %4656 = vmatpush.msra.mxu0 %v4349
      %4657 = vmatpush.msra.mxu0 %v4346
      %4658 = vmatpush.msra.mxu0 %v4343
      %4659 = vmatpush.msra.mxu0 %v4340
      %4660 = vmatpush.msra.mxu0 %v4337
      %4661 = vmatpush.msra.mxu0 %v4334
      %4662 = vmatpush.msra.mxu0 %v4331
      %4663 = vmatpush.msra.mxu0 %v4328
      %4664 = vmatpush.msra.mxu0 %v4325
      %4665 = vmatpush.msra.mxu0 %v4322
      %4666 = vmatpush.msra.mxu0 %v4319
      %4667 = vmatpush.msra.mxu0 %v4316
      %4668 = vmatpush.msra.mxu0 %v4313
      %4669 = vmatpush.msra.mxu0 %v4310
      %4670 = vmatpush.msra.mxu0 %v4307
      %4671 = vmatpush.msra.mxu0 %v4304
      %4672 = vmatmul.f32.gmra.mxu0 %v4640
      %v4673 = vpop.f32.mrf.mxu0
      %v4674 = vadd.f32 0.0, %v4673
      %4675 = vmatmul.f32.gmra.mxu0 %v4641
      %v4676 = vpop.f32.mrf.mxu0
      %v4677 = vadd.f32 0.0, %v4676
      %4678 = vmatmul.f32.gmra.mxu0 %v4642
      %v4679 = vpop.f32.mrf.mxu0
      %v4680 = vadd.f32 0.0, %v4679
      %4681 = vmatmul.f32.gmra.mxu0 %v4643
      %v4682 = vpop.f32.mrf.mxu0
      %v4683 = vadd.f32 0.0, %v4682
      %4684 = vmatmul.f32.gmra.mxu0 %v4644
      %v4685 = vpop.f32.mrf.mxu0
      %v4686 = vadd.f32 0.0, %v4685
      %4687 = vmatmul.f32.gmra.mxu0 %v4645
      %v4688 = vpop.f32.mrf.mxu0
      %v4689 = vadd.f32 0.0, %v4688
      %4690 = vmatmul.f32.gmra.mxu0 %v4646
      %v4691 = vpop.f32.mrf.mxu0
      %v4692 = vadd.f32 0.0, %v4691
      %4693 = vmatmul.f32.gmra.mxu0 %v4647
      %v4694 = vpop.f32.mrf.mxu0
      %v4695 = vadd.f32 0.0, %v4694
      %4696 = vmatmul.f32.gmra.mxu0 %v4648
      %v4697 = vpop.f32.mrf.mxu0
      %v4698 = vadd.f32 0.0, %v4697
      %4699 = vmatmul.f32.gmra.mxu0 %v4649
      %v4700 = vpop.f32.mrf.mxu0
      %v4701 = vadd.f32 0.0, %v4700
      %4702 = vmatmul.f32.gmra.mxu0 %v4650
      %v4703 = vpop.f32.mrf.mxu0
      %v4704 = vadd.f32 0.0, %v4703
      %4705 = vmatmul.f32.gmra.mxu0 %v4651
      %v4706 = vpop.f32.mrf.mxu0
      %v4707 = vadd.f32 0.0, %v4706
      %4708 = vmatmul.f32.gmra.mxu0 %v4652
      %v4709 = vpop.f32.mrf.mxu0
      %v4710 = vadd.f32 0.0, %v4709
      %4711 = vmatmul.f32.gmra.mxu0 %v4653
      %v4712 = vpop.f32.mrf.mxu0
      %v4713 = vadd.f32 0.0, %v4712
      %4714 = vmatmul.f32.gmra.mxu0 %v4654
      %v4715 = vpop.f32.mrf.mxu0
      %v4716 = vadd.f32 0.0, %v4715
      %4717 = vmatmul.f32.gmra.mxu0 %v4655
      %v4718 = vpop.f32.mrf.mxu0
      %v4719 = vadd.f32 0.0, %v4718
      %4720 = vdwg.mxu0
      %s4721 = scalar_lea.vmem %s3, 480
      %v4722 = vld [vmem:[%s4721] sm:$0xff]
      %v4723 = vld [vmem:[%s4721 + $0x8] sm:$0xff]
      %v4724 = vld [vmem:[%s4721 + $0x10] sm:$0xff]
      %v4725 = vld [vmem:[%s4721 + $0x18] sm:$0xff]
      %v4727 = vsel %vm1101, %v4674, 0
      %v4730 = vsel %vm1101, %v4677, 0
      %v4733 = vsel %vm1101, %v4680, 0
      %v4736 = vsel %vm1101, %v4683, 0
      %v4739 = vsel %vm1101, %v4686, 0
      %v4742 = vsel %vm1101, %v4689, 0
      %v4745 = vsel %vm1101, %v4692, 0
      %v4748 = vsel %vm1101, %v4695, 0
      %v4751 = vsel %vm1101, %v4698, 0
      %v4754 = vsel %vm1101, %v4701, 0
      %v4757 = vsel %vm1101, %v4704, 0
      %v4760 = vsel %vm1101, %v4707, 0
      %v4763 = vsel %vm1101, %v4710, 0
      %v4766 = vsel %vm1101, %v4713, 0
      %v4769 = vsel %vm1101, %v4716, 0
      %v4772 = vsel %vm1101, %v4719, 0
      %v4775 = vsel %vm1101, %v4722, 0
      %v4778 = vsel %vm1101, %v4723, 0
      %v4781 = vsel %vm1101, %v4724, 0
      %v4784 = vsel %vm1101, %v4725, 0
      %4786 = vmatpush.xpose.msra.mxu0 0.0
      %4787 = vmatpush.xpose.msra.mxu0 0.0
      %4788 = vmatpush.xpose.msra.mxu0 0.0
      %4789 = vmatpush.xpose.msra.mxu0 0.0
      %4790 = vmatpush.xpose.msra.mxu0 0.0
      %4791 = vmatpush.xpose.msra.mxu0 0.0
      %4792 = vmatpush.xpose.msra.mxu0 0.0
      %4793 = vmatpush.xpose.msra.mxu0 0.0
      %4794 = vmatpush.xpose.msra.mxu0 0.0
      %4795 = vmatpush.xpose.msra.mxu0 0.0
      %4796 = vmatpush.xpose.msra.mxu0 0.0
      %4797 = vmatpush.xpose.msra.mxu0 0.0
      %4798 = vmatpush.xpose.msra.mxu0 %v4784
      %4799 = vmatpush.xpose.msra.mxu0 %v4781
      %4800 = vmatpush.xpose.msra.mxu0 %v4778
      %4801 = vmatpush.xpose.msra.mxu0 %v4775
      %4802 = vmatmul.f32.gmra.mxu0 %v4727
      %v4803 = vpop.f32.mrf.mxu0
      %v4804 = vadd.f32 0.0, %v4803
      %4805 = vmatmul.f32.gmra.mxu0 %v4730
      %v4806 = vpop.f32.mrf.mxu0
      %v4807 = vadd.f32 0.0, %v4806
      %4808 = vmatmul.f32.gmra.mxu0 %v4733
      %v4809 = vpop.f32.mrf.mxu0
      %v4810 = vadd.f32 0.0, %v4809
      %4811 = vmatmul.f32.gmra.mxu0 %v4736
      %v4812 = vpop.f32.mrf.mxu0
      %v4813 = vadd.f32 0.0, %v4812
      %4814 = vmatmul.f32.gmra.mxu0 %v4739
      %v4815 = vpop.f32.mrf.mxu0
      %v4816 = vadd.f32 0.0, %v4815
      %4817 = vmatmul.f32.gmra.mxu0 %v4742
      %v4818 = vpop.f32.mrf.mxu0
      %v4819 = vadd.f32 0.0, %v4818
      %4820 = vmatmul.f32.gmra.mxu0 %v4745
      %v4821 = vpop.f32.mrf.mxu0
      %v4822 = vadd.f32 0.0, %v4821
      %4823 = vmatmul.f32.gmra.mxu0 %v4748
      %v4824 = vpop.f32.mrf.mxu0
      %v4825 = vadd.f32 0.0, %v4824
      %4826 = vmatmul.f32.gmra.mxu0 %v4751
      %v4827 = vpop.f32.mrf.mxu0
      %v4828 = vadd.f32 0.0, %v4827
      %4829 = vmatmul.f32.gmra.mxu0 %v4754
      %v4830 = vpop.f32.mrf.mxu0
      %v4831 = vadd.f32 0.0, %v4830
      %4832 = vmatmul.f32.gmra.mxu0 %v4757
      %v4833 = vpop.f32.mrf.mxu0
      %v4834 = vadd.f32 0.0, %v4833
      %4835 = vmatmul.f32.gmra.mxu0 %v4760
      %v4836 = vpop.f32.mrf.mxu0
      %v4837 = vadd.f32 0.0, %v4836
      %4838 = vmatmul.f32.gmra.mxu0 %v4763
      %v4839 = vpop.f32.mrf.mxu0
      %v4840 = vadd.f32 0.0, %v4839
      %4841 = vmatmul.f32.gmra.mxu0 %v4766
      %v4842 = vpop.f32.mrf.mxu0
      %v4843 = vadd.f32 0.0, %v4842
      %4844 = vmatmul.f32.gmra.mxu0 %v4769
      %v4845 = vpop.f32.mrf.mxu0
      %v4846 = vadd.f32 0.0, %v4845
      %4847 = vmatmul.f32.gmra.mxu0 %v4772
      %v4848 = vpop.f32.mrf.mxu0
      %v4849 = vadd.f32 0.0, %v4848
      %4850 = vdwg.mxu0
      %v4851 = vadd.f32 %v4125, %v4804
      %v4852 = vadd.f32 %v4126, %v4807
      %v4853 = vadd.f32 %v4127, %v4810
      %v4854 = vadd.f32 %v4128, %v4813
      %v4855 = vadd.f32 %v4129, %v4816
      %v4856 = vadd.f32 %v4130, %v4819
      %v4857 = vadd.f32 %v4131, %v4822
      %v4858 = vadd.f32 %v4132, %v4825
      %v4859 = vadd.f32 %v4133, %v4828
      %v4860 = vadd.f32 %v4134, %v4831
      %v4861 = vadd.f32 %v4135, %v4834
      %v4862 = vadd.f32 %v4136, %v4837
      %v4863 = vadd.f32 %v4137, %v4840
      %v4864 = vadd.f32 %v4138, %v4843
      %v4865 = vadd.f32 %v4139, %v4846
      %v4866 = vadd.f32 %v4140, %v4849
      %v4867 = vmul.f32 %v4851, %v4851
      %v4868 = vmul.f32 %v4852, %v4852
      %v4869 = vmul.f32 %v4853, %v4853
      %v4870 = vmul.f32 %v4854, %v4854
      %v4871 = vmul.f32 %v4855, %v4855
      %v4872 = vmul.f32 %v4856, %v4856
      %v4873 = vmul.f32 %v4857, %v4857
      %v4874 = vmul.f32 %v4858, %v4858
      %v4875 = vmul.f32 %v4859, %v4859
      %v4876 = vmul.f32 %v4860, %v4860
      %v4877 = vmul.f32 %v4861, %v4861
      %v4878 = vmul.f32 %v4862, %v4862
      %v4879 = vmul.f32 %v4863, %v4863
      %v4880 = vmul.f32 %v4864, %v4864
      %v4881 = vmul.f32 %v4865, %v4865
      %v4882 = vmul.f32 %v4866, %v4866
      %v4883 = vsel %vm563, %v4867, 0.0
      %4884 = vadd.xlane.f32.xlu0 %v4883
      %v4885 = vpop.xlane.xlu0 %4884
      %v4886 = vsel %vm563, %v4868, 0.0
      %4887 = vadd.xlane.f32.xlu0 %v4886
      %v4888 = vpop.xlane.xlu0 %4887
      %v4889 = vsel %vm563, %v4869, 0.0
      %4890 = vadd.xlane.f32.xlu0 %v4889
      %v4891 = vpop.xlane.xlu0 %4890
      %v4892 = vsel %vm563, %v4870, 0.0
      %4893 = vadd.xlane.f32.xlu0 %v4892
      %v4894 = vpop.xlane.xlu0 %4893
      %v4895 = vsel %vm563, %v4871, 0.0
      %4896 = vadd.xlane.f32.xlu0 %v4895
      %v4897 = vpop.xlane.xlu0 %4896
      %v4898 = vsel %vm563, %v4872, 0.0
      %4899 = vadd.xlane.f32.xlu0 %v4898
      %v4900 = vpop.xlane.xlu0 %4899
      %v4901 = vsel %vm563, %v4873, 0.0
      %4902 = vadd.xlane.f32.xlu0 %v4901
      %v4903 = vpop.xlane.xlu0 %4902
      %v4904 = vsel %vm563, %v4874, 0.0
      %4905 = vadd.xlane.f32.xlu0 %v4904
      %v4906 = vpop.xlane.xlu0 %4905
      %v4907 = vsel %vm563, %v4875, 0.0
      %4908 = vadd.xlane.f32.xlu0 %v4907
      %v4909 = vpop.xlane.xlu0 %4908
      %v4910 = vsel %vm563, %v4876, 0.0
      %4911 = vadd.xlane.f32.xlu0 %v4910
      %v4912 = vpop.xlane.xlu0 %4911
      %v4913 = vsel %vm563, %v4877, 0.0
      %4914 = vadd.xlane.f32.xlu0 %v4913
      %v4915 = vpop.xlane.xlu0 %4914
      %v4916 = vsel %vm563, %v4878, 0.0
      %4917 = vadd.xlane.f32.xlu0 %v4916
      %v4918 = vpop.xlane.xlu0 %4917
      %v4919 = vsel %vm563, %v4879, 0.0
      %4920 = vadd.xlane.f32.xlu0 %v4919
      %v4921 = vpop.xlane.xlu0 %4920
      %v4922 = vsel %vm563, %v4880, 0.0
      %4923 = vadd.xlane.f32.xlu0 %v4922
      %v4924 = vpop.xlane.xlu0 %4923
      %v4925 = vsel %vm563, %v4881, 0.0
      %4926 = vadd.xlane.f32.xlu0 %v4925
      %v4927 = vpop.xlane.xlu0 %4926
      %v4928 = vsel %vm563, %v4882, 0.0
      %4929 = vadd.xlane.f32.xlu0 %v4928
      %v4930 = vpop.xlane.xlu0 %4929
      %v4931 = vmul.f32 %v4885, %v618
      %v4932 = vmul.f32 %v4888, %v618
      %v4933 = vmul.f32 %v4891, %v618
      %v4934 = vmul.f32 %v4894, %v618
      %v4935 = vmul.f32 %v4897, %v618
      %v4936 = vmul.f32 %v4900, %v618
      %v4937 = vmul.f32 %v4903, %v618
      %v4938 = vmul.f32 %v4906, %v618
      %v4939 = vmul.f32 %v4909, %v618
      %v4940 = vmul.f32 %v4912, %v618
      %v4941 = vmul.f32 %v4915, %v618
      %v4942 = vmul.f32 %v4918, %v618
      %v4943 = vmul.f32 %v4921, %v618
      %v4944 = vmul.f32 %v4924, %v618
      %v4945 = vmul.f32 %v4927, %v618
      %v4946 = vmul.f32 %v4930, %v618
      %v4947 = vadd.f32 %v4931, 1e-06
      %v4948 = vadd.f32 %v4932, 1e-06
      %v4949 = vadd.f32 %v4933, 1e-06
      %v4950 = vadd.f32 %v4934, 1e-06
      %v4951 = vadd.f32 %v4935, 1e-06
      %v4952 = vadd.f32 %v4936, 1e-06
      %v4953 = vadd.f32 %v4937, 1e-06
      %v4954 = vadd.f32 %v4938, 1e-06
      %v4955 = vadd.f32 %v4939, 1e-06
      %v4956 = vadd.f32 %v4940, 1e-06
      %v4957 = vadd.f32 %v4941, 1e-06
      %v4958 = vadd.f32 %v4942, 1e-06
      %v4959 = vadd.f32 %v4943, 1e-06
      %v4960 = vadd.f32 %v4944, 1e-06
      %v4961 = vadd.f32 %v4945, 1e-06
      %v4962 = vadd.f32 %v4946, 1e-06
      %v4963 = vrsqrt.pop %v4947
      %v4964 = vmul.f32 %v4963, %v4947
      %v4965 = vmul.f32 %v4964, %v4963
      %v4966 = vmul.f32 0.5, %v4965
      %v4967 = vsub.f32 1.5, %v4966
      %v4968 = vmul.f32 %v4963, %v4967
      %vm4969 = vweird.f32 %v4947
      %vm4970 = vweird.f32 %v4963
      %vm4971 = vmor %vm4969, %vm4970
      %v4972 = vsel %vm4971, %v4963, %v4968
      %v4973 = vrsqrt.pop %v4948
      %v4974 = vmul.f32 %v4973, %v4948
      %v4975 = vmul.f32 %v4974, %v4973
      %v4976 = vmul.f32 0.5, %v4975
      %v4977 = vsub.f32 1.5, %v4976
      %v4978 = vmul.f32 %v4973, %v4977
      %vm4979 = vweird.f32 %v4948
      %vm4980 = vweird.f32 %v4973
      %vm4981 = vmor %vm4979, %vm4980
      %v4982 = vsel %vm4981, %v4973, %v4978
      %v4983 = vrsqrt.pop %v4949
      %v4984 = vmul.f32 %v4983, %v4949
      %v4985 = vmul.f32 %v4984, %v4983
      %v4986 = vmul.f32 0.5, %v4985
      %v4987 = vsub.f32 1.5, %v4986
      %v4988 = vmul.f32 %v4983, %v4987
      %vm4989 = vweird.f32 %v4949
      %vm4990 = vweird.f32 %v4983
      %vm4991 = vmor %vm4989, %vm4990
      %v4992 = vsel %vm4991, %v4983, %v4988
      %v4993 = vrsqrt.pop %v4950
      %v4994 = vmul.f32 %v4993, %v4950
      %v4995 = vmul.f32 %v4994, %v4993
      %v4996 = vmul.f32 0.5, %v4995
      %v4997 = vsub.f32 1.5, %v4996
      %v4998 = vmul.f32 %v4993, %v4997
      %vm4999 = vweird.f32 %v4950
      %vm5000 = vweird.f32 %v4993
      %vm5001 = vmor %vm4999, %vm5000
      %v5002 = vsel %vm5001, %v4993, %v4998
      %v5003 = vrsqrt.pop %v4951
      %v5004 = vmul.f32 %v5003, %v4951
      %v5005 = vmul.f32 %v5004, %v5003
      %v5006 = vmul.f32 0.5, %v5005
      %v5007 = vsub.f32 1.5, %v5006
      %v5008 = vmul.f32 %v5003, %v5007
      %vm5009 = vweird.f32 %v4951
      %vm5010 = vweird.f32 %v5003
      %vm5011 = vmor %vm5009, %vm5010
      %v5012 = vsel %vm5011, %v5003, %v5008
      %v5013 = vrsqrt.pop %v4952
      %v5014 = vmul.f32 %v5013, %v4952
      %v5015 = vmul.f32 %v5014, %v5013
      %v5016 = vmul.f32 0.5, %v5015
      %v5017 = vsub.f32 1.5, %v5016
      %v5018 = vmul.f32 %v5013, %v5017
      %vm5019 = vweird.f32 %v4952
      %vm5020 = vweird.f32 %v5013
      %vm5021 = vmor %vm5019, %vm5020
      %v5022 = vsel %vm5021, %v5013, %v5018
      %v5023 = vrsqrt.pop %v4953
      %v5024 = vmul.f32 %v5023, %v4953
      %v5025 = vmul.f32 %v5024, %v5023
      %v5026 = vmul.f32 0.5, %v5025
      %v5027 = vsub.f32 1.5, %v5026
      %v5028 = vmul.f32 %v5023, %v5027
      %vm5029 = vweird.f32 %v4953
      %vm5030 = vweird.f32 %v5023
      %vm5031 = vmor %vm5029, %vm5030
      %v5032 = vsel %vm5031, %v5023, %v5028
      %v5033 = vrsqrt.pop %v4954
      %v5034 = vmul.f32 %v5033, %v4954
      %v5035 = vmul.f32 %v5034, %v5033
      %v5036 = vmul.f32 0.5, %v5035
      %v5037 = vsub.f32 1.5, %v5036
      %v5038 = vmul.f32 %v5033, %v5037
      %vm5039 = vweird.f32 %v4954
      %vm5040 = vweird.f32 %v5033
      %vm5041 = vmor %vm5039, %vm5040
      %v5042 = vsel %vm5041, %v5033, %v5038
      %v5043 = vrsqrt.pop %v4955
      %v5044 = vmul.f32 %v5043, %v4955
      %v5045 = vmul.f32 %v5044, %v5043
      %v5046 = vmul.f32 0.5, %v5045
      %v5047 = vsub.f32 1.5, %v5046
      %v5048 = vmul.f32 %v5043, %v5047
      %vm5049 = vweird.f32 %v4955
      %vm5050 = vweird.f32 %v5043
      %vm5051 = vmor %vm5049, %vm5050
      %v5052 = vsel %vm5051, %v5043, %v5048
      %v5053 = vrsqrt.pop %v4956
      %v5054 = vmul.f32 %v5053, %v4956
      %v5055 = vmul.f32 %v5054, %v5053
      %v5056 = vmul.f32 0.5, %v5055
      %v5057 = vsub.f32 1.5, %v5056
      %v5058 = vmul.f32 %v5053, %v5057
      %vm5059 = vweird.f32 %v4956
      %vm5060 = vweird.f32 %v5053
      %vm5061 = vmor %vm5059, %vm5060
      %v5062 = vsel %vm5061, %v5053, %v5058
      %v5063 = vrsqrt.pop %v4957
      %v5064 = vmul.f32 %v5063, %v4957
      %v5065 = vmul.f32 %v5064, %v5063
      %v5066 = vmul.f32 0.5, %v5065
      %v5067 = vsub.f32 1.5, %v5066
      %v5068 = vmul.f32 %v5063, %v5067
      %vm5069 = vweird.f32 %v4957
      %vm5070 = vweird.f32 %v5063
      %vm5071 = vmor %vm5069, %vm5070
      %v5072 = vsel %vm5071, %v5063, %v5068
      %v5073 = vrsqrt.pop %v4958
      %v5074 = vmul.f32 %v5073, %v4958
      %v5075 = vmul.f32 %v5074, %v5073
      %v5076 = vmul.f32 0.5, %v5075
      %v5077 = vsub.f32 1.5, %v5076
      %v5078 = vmul.f32 %v5073, %v5077
      %vm5079 = vweird.f32 %v4958
      %vm5080 = vweird.f32 %v5073
      %vm5081 = vmor %vm5079, %vm5080
      %v5082 = vsel %vm5081, %v5073, %v5078
      %v5083 = vrsqrt.pop %v4959
      %v5084 = vmul.f32 %v5083, %v4959
      %v5085 = vmul.f32 %v5084, %v5083
      %v5086 = vmul.f32 0.5, %v5085
      %v5087 = vsub.f32 1.5, %v5086
      %v5088 = vmul.f32 %v5083, %v5087
      %vm5089 = vweird.f32 %v4959
      %vm5090 = vweird.f32 %v5083
      %vm5091 = vmor %vm5089, %vm5090
      %v5092 = vsel %vm5091, %v5083, %v5088
      %v5093 = vrsqrt.pop %v4960
      %v5094 = vmul.f32 %v5093, %v4960
      %v5095 = vmul.f32 %v5094, %v5093
      %v5096 = vmul.f32 0.5, %v5095
      %v5097 = vsub.f32 1.5, %v5096
      %v5098 = vmul.f32 %v5093, %v5097
      %vm5099 = vweird.f32 %v4960
      %vm5100 = vweird.f32 %v5093
      %vm5101 = vmor %vm5099, %vm5100
      %v5102 = vsel %vm5101, %v5093, %v5098
      %v5103 = vrsqrt.pop %v4961
      %v5104 = vmul.f32 %v5103, %v4961
      %v5105 = vmul.f32 %v5104, %v5103
      %v5106 = vmul.f32 0.5, %v5105
      %v5107 = vsub.f32 1.5, %v5106
      %v5108 = vmul.f32 %v5103, %v5107
      %vm5109 = vweird.f32 %v4961
      %vm5110 = vweird.f32 %v5103
      %vm5111 = vmor %vm5109, %vm5110
      %v5112 = vsel %vm5111, %v5103, %v5108
      %v5113 = vrsqrt.pop %v4962
      %v5114 = vmul.f32 %v5113, %v4962
      %v5115 = vmul.f32 %v5114, %v5113
      %v5116 = vmul.f32 0.5, %v5115
      %v5117 = vsub.f32 1.5, %v5116
      %v5118 = vmul.f32 %v5113, %v5117
      %vm5119 = vweird.f32 %v4962
      %vm5120 = vweird.f32 %v5113
      %vm5121 = vmor %vm5119, %vm5120
      %v5122 = vsel %vm5121, %v5113, %v5118
      %v5123 = vmul.f32 %v4851, %v4972
      %v5124 = vmul.f32 %v4852, %v4982
      %v5125 = vmul.f32 %v4853, %v4992
      %v5126 = vmul.f32 %v4854, %v5002
      %v5127 = vmul.f32 %v4855, %v5012
      %v5128 = vmul.f32 %v4856, %v5022
      %v5129 = vmul.f32 %v4857, %v5032
      %v5130 = vmul.f32 %v4858, %v5042
      %v5131 = vmul.f32 %v4859, %v5052
      %v5132 = vmul.f32 %v4860, %v5062
      %v5133 = vmul.f32 %v4861, %v5072
      %v5134 = vmul.f32 %v4862, %v5082
      %v5135 = vmul.f32 %v4863, %v5092
      %v5136 = vmul.f32 %v4864, %v5102
      %v5137 = vmul.f32 %v4865, %v5112
      %v5138 = vmul.f32 %v4866, %v5122
      %v5139 = vperm.slane %v228, 3
      %v5140 = vmul.f32 %v5123, %v5139
      %v5141 = vmul.f32 %v5124, %v5139
      %v5142 = vmul.f32 %v5125, %v5139
      %v5143 = vmul.f32 %v5126, %v5139
      %v5144 = vmul.f32 %v5127, %v5139
      %v5145 = vmul.f32 %v5128, %v5139
      %v5146 = vmul.f32 %v5129, %v5139
      %v5147 = vmul.f32 %v5130, %v5139
      %v5148 = vmul.f32 %v5131, %v5139
      %v5149 = vmul.f32 %v5132, %v5139
      %v5150 = vmul.f32 %v5133, %v5139
      %v5151 = vmul.f32 %v5134, %v5139
      %v5152 = vmul.f32 %v5135, %v5139
      %v5153 = vmul.f32 %v5136, %v5139
      %v5154 = vmul.f32 %v5137, %v5139
      %v5155 = vmul.f32 %v5138, %v5139
      %s5156 = scalar_lea.vmem %s4, 96
      %v5157 = vld [vmem:[%s5156] sm:$0xff]
      %v5158 = vld [vmem:[%s5156 + $0x8] sm:$0xff]
      %v5159 = vld [vmem:[%s5156 + $0x10] sm:$0xff]
      %v5160 = vld [vmem:[%s5156 + $0x18] sm:$0xff]
      %v5162 = vsel %vm563, %v5140, 0
      %v5165 = vsel %vm563, %v5141, 0
      %v5168 = vsel %vm563, %v5142, 0
      %v5171 = vsel %vm563, %v5143, 0
      %v5174 = vsel %vm563, %v5144, 0
      %v5177 = vsel %vm563, %v5145, 0
      %v5180 = vsel %vm563, %v5146, 0
      %v5183 = vsel %vm563, %v5147, 0
      %v5186 = vsel %vm563, %v5148, 0
      %v5189 = vsel %vm563, %v5149, 0
      %v5192 = vsel %vm563, %v5150, 0
      %v5195 = vsel %vm563, %v5151, 0
      %v5198 = vsel %vm563, %v5152, 0
      %v5201 = vsel %vm563, %v5153, 0
      %v5204 = vsel %vm563, %v5154, 0
      %v5207 = vsel %vm563, %v5155, 0
      %5209 = vmatpush.msra.mxu0 0.0
      %5210 = vmatpush.msra.mxu0 0.0
      %5211 = vmatpush.msra.mxu0 0.0
      %5212 = vmatpush.msra.mxu0 0.0
      %5213 = vmatpush.msra.mxu0 0.0
      %5214 = vmatpush.msra.mxu0 0.0
      %5215 = vmatpush.msra.mxu0 0.0
      %5216 = vmatpush.msra.mxu0 0.0
      %5217 = vmatpush.msra.mxu0 0.0
      %5218 = vmatpush.msra.mxu0 0.0
      %5219 = vmatpush.msra.mxu0 0.0
      %5220 = vmatpush.msra.mxu0 0.0
      %5221 = vmatpush.msra.mxu0 %v5160
      %5222 = vmatpush.msra.mxu0 %v5159
      %5223 = vmatpush.msra.mxu0 %v5158
      %5224 = vmatpush.msra.mxu0 %v5157
      %5225 = vmatmul.f32.gmra.mxu0 %v5162
      %v5226 = vpop.f32.mrf.mxu0
      %v5227 = vadd.f32 0.0, %v5226
      %5228 = vmatmul.f32.gmra.mxu0 %v5165
      %v5229 = vpop.f32.mrf.mxu0
      %v5230 = vadd.f32 0.0, %v5229
      %5231 = vmatmul.f32.gmra.mxu0 %v5168
      %v5232 = vpop.f32.mrf.mxu0
      %v5233 = vadd.f32 0.0, %v5232
      %5234 = vmatmul.f32.gmra.mxu0 %v5171
      %v5235 = vpop.f32.mrf.mxu0
      %v5236 = vadd.f32 0.0, %v5235
      %5237 = vmatmul.f32.gmra.mxu0 %v5174
      %v5238 = vpop.f32.mrf.mxu0
      %v5239 = vadd.f32 0.0, %v5238
      %5240 = vmatmul.f32.gmra.mxu0 %v5177
      %v5241 = vpop.f32.mrf.mxu0
      %v5242 = vadd.f32 0.0, %v5241
      %5243 = vmatmul.f32.gmra.mxu0 %v5180
      %v5244 = vpop.f32.mrf.mxu0
      %v5245 = vadd.f32 0.0, %v5244
      %5246 = vmatmul.f32.gmra.mxu0 %v5183
      %v5247 = vpop.f32.mrf.mxu0
      %v5248 = vadd.f32 0.0, %v5247
      %5249 = vmatmul.f32.gmra.mxu0 %v5186
      %v5250 = vpop.f32.mrf.mxu0
      %v5251 = vadd.f32 0.0, %v5250
      %5252 = vmatmul.f32.gmra.mxu0 %v5189
      %v5253 = vpop.f32.mrf.mxu0
      %v5254 = vadd.f32 0.0, %v5253
      %5255 = vmatmul.f32.gmra.mxu0 %v5192
      %v5256 = vpop.f32.mrf.mxu0
      %v5257 = vadd.f32 0.0, %v5256
      %5258 = vmatmul.f32.gmra.mxu0 %v5195
      %v5259 = vpop.f32.mrf.mxu0
      %v5260 = vadd.f32 0.0, %v5259
      %5261 = vmatmul.f32.gmra.mxu0 %v5198
      %v5262 = vpop.f32.mrf.mxu0
      %v5263 = vadd.f32 0.0, %v5262
      %5264 = vmatmul.f32.gmra.mxu0 %v5201
      %v5265 = vpop.f32.mrf.mxu0
      %v5266 = vadd.f32 0.0, %v5265
      %5267 = vmatmul.f32.gmra.mxu0 %v5204
      %v5268 = vpop.f32.mrf.mxu0
      %v5269 = vadd.f32 0.0, %v5268
      %5270 = vmatmul.f32.gmra.mxu0 %v5207
      %v5271 = vpop.f32.mrf.mxu0
      %v5272 = vadd.f32 0.0, %v5271
      %5273 = vdwg.mxu0
      %s5274 = scalar_lea.vmem %s4, 128
      %v5275 = vld [vmem:[%s5274] sm:$0xff]
      %v5276 = vld [vmem:[%s5274 + $0x8] sm:$0xff]
      %v5277 = vld [vmem:[%s5274 + $0x10] sm:$0xff]
      %v5278 = vld [vmem:[%s5274 + $0x18] sm:$0xff]
      %5279 = vmatpush.msra.mxu0 0.0
      %5280 = vmatpush.msra.mxu0 0.0
      %5281 = vmatpush.msra.mxu0 0.0
      %5282 = vmatpush.msra.mxu0 0.0
      %5283 = vmatpush.msra.mxu0 0.0
      %5284 = vmatpush.msra.mxu0 0.0
      %5285 = vmatpush.msra.mxu0 0.0
      %5286 = vmatpush.msra.mxu0 0.0
      %5287 = vmatpush.msra.mxu0 0.0
      %5288 = vmatpush.msra.mxu0 0.0
      %5289 = vmatpush.msra.mxu0 0.0
      %5290 = vmatpush.msra.mxu0 0.0
      %5291 = vmatpush.msra.mxu0 %v5278
      %5292 = vmatpush.msra.mxu0 %v5277
      %5293 = vmatpush.msra.mxu0 %v5276
      %5294 = vmatpush.msra.mxu0 %v5275
      %5295 = vmatmul.f32.gmra.mxu0 %v5162
      %v5296 = vpop.f32.mrf.mxu0
      %v5297 = vadd.f32 0.0, %v5296
      %5298 = vmatmul.f32.gmra.mxu0 %v5165
      %v5299 = vpop.f32.mrf.mxu0
      %v5300 = vadd.f32 0.0, %v5299
      %5301 = vmatmul.f32.gmra.mxu0 %v5168
      %v5302 = vpop.f32.mrf.mxu0
      %v5303 = vadd.f32 0.0, %v5302
      %5304 = vmatmul.f32.gmra.mxu0 %v5171
      %v5305 = vpop.f32.mrf.mxu0
      %v5306 = vadd.f32 0.0, %v5305
      %5307 = vmatmul.f32.gmra.mxu0 %v5174
      %v5308 = vpop.f32.mrf.mxu0
      %v5309 = vadd.f32 0.0, %v5308
      %5310 = vmatmul.f32.gmra.mxu0 %v5177
      %v5311 = vpop.f32.mrf.mxu0
      %v5312 = vadd.f32 0.0, %v5311
      %5313 = vmatmul.f32.gmra.mxu0 %v5180
      %v5314 = vpop.f32.mrf.mxu0
      %v5315 = vadd.f32 0.0, %v5314
      %5316 = vmatmul.f32.gmra.mxu0 %v5183
      %v5317 = vpop.f32.mrf.mxu0
      %v5318 = vadd.f32 0.0, %v5317
      %5319 = vmatmul.f32.gmra.mxu0 %v5186
      %v5320 = vpop.f32.mrf.mxu0
      %v5321 = vadd.f32 0.0, %v5320
      %5322 = vmatmul.f32.gmra.mxu0 %v5189
      %v5323 = vpop.f32.mrf.mxu0
      %v5324 = vadd.f32 0.0, %v5323
      %5325 = vmatmul.f32.gmra.mxu0 %v5192
      %v5326 = vpop.f32.mrf.mxu0
      %v5327 = vadd.f32 0.0, %v5326
      %5328 = vmatmul.f32.gmra.mxu0 %v5195
      %v5329 = vpop.f32.mrf.mxu0
      %v5330 = vadd.f32 0.0, %v5329
      %5331 = vmatmul.f32.gmra.mxu0 %v5198
      %v5332 = vpop.f32.mrf.mxu0
      %v5333 = vadd.f32 0.0, %v5332
      %5334 = vmatmul.f32.gmra.mxu0 %v5201
      %v5335 = vpop.f32.mrf.mxu0
      %v5336 = vadd.f32 0.0, %v5335
      %5337 = vmatmul.f32.gmra.mxu0 %v5204
      %v5338 = vpop.f32.mrf.mxu0
      %v5339 = vadd.f32 0.0, %v5338
      %5340 = vmatmul.f32.gmra.mxu0 %v5207
      %v5341 = vpop.f32.mrf.mxu0
      %v5342 = vadd.f32 0.0, %v5341
      %5343 = vdwg.mxu0
      %v5344 = vsub.f32 0.0, %v5227
      %v5345 = vsub.f32 0.0, %v5230
      %v5346 = vsub.f32 0.0, %v5233
      %v5347 = vsub.f32 0.0, %v5236
      %v5348 = vsub.f32 0.0, %v5239
      %v5349 = vsub.f32 0.0, %v5242
      %v5350 = vsub.f32 0.0, %v5245
      %v5351 = vsub.f32 0.0, %v5248
      %v5352 = vsub.f32 0.0, %v5251
      %v5353 = vsub.f32 0.0, %v5254
      %v5354 = vsub.f32 0.0, %v5257
      %v5355 = vsub.f32 0.0, %v5260
      %v5356 = vsub.f32 0.0, %v5263
      %v5357 = vsub.f32 0.0, %v5266
      %v5358 = vsub.f32 0.0, %v5269
      %v5359 = vsub.f32 0.0, %v5272
      %v5360 = vmul.f32 %v5344, 1.442695
      %v5361 = vpow.pop %v5360
      %v5362 = vmul.f32 %v5345, 1.442695
      %v5363 = vpow.pop %v5362
      %v5364 = vmul.f32 %v5346, 1.442695
      %v5365 = vpow.pop %v5364
      %v5366 = vmul.f32 %v5347, 1.442695
      %v5367 = vpow.pop %v5366
      %v5368 = vmul.f32 %v5348, 1.442695
      %v5369 = vpow.pop %v5368
      %v5370 = vmul.f32 %v5349, 1.442695
      %v5371 = vpow.pop %v5370
      %v5372 = vmul.f32 %v5350, 1.442695
      %v5373 = vpow.pop %v5372
      %v5374 = vmul.f32 %v5351, 1.442695
      %v5375 = vpow.pop %v5374
      %v5376 = vmul.f32 %v5352, 1.442695
      %v5377 = vpow.pop %v5376
      %v5378 = vmul.f32 %v5353, 1.442695
      %v5379 = vpow.pop %v5378
      %v5380 = vmul.f32 %v5354, 1.442695
      %v5381 = vpow.pop %v5380
      %v5382 = vmul.f32 %v5355, 1.442695
      %v5383 = vpow.pop %v5382
      %v5384 = vmul.f32 %v5356, 1.442695
      %v5385 = vpow.pop %v5384
      %v5386 = vmul.f32 %v5357, 1.442695
      %v5387 = vpow.pop %v5386
      %v5388 = vmul.f32 %v5358, 1.442695
      %v5389 = vpow.pop %v5388
      %v5390 = vmul.f32 %v5359, 1.442695
      %v5391 = vpow.pop %v5390
      %v5392 = vadd.f32 %v5361, 1.0
      %v5393 = vadd.f32 %v5363, 1.0
      %v5394 = vadd.f32 %v5365, 1.0
      %v5395 = vadd.f32 %v5367, 1.0
      %v5396 = vadd.f32 %v5369, 1.0
      %v5397 = vadd.f32 %v5371, 1.0
      %v5398 = vadd.f32 %v5373, 1.0
      %v5399 = vadd.f32 %v5375, 1.0
      %v5400 = vadd.f32 %v5377, 1.0
      %v5401 = vadd.f32 %v5379, 1.0
      %v5402 = vadd.f32 %v5381, 1.0
      %v5403 = vadd.f32 %v5383, 1.0
      %v5404 = vadd.f32 %v5385, 1.0
      %v5405 = vadd.f32 %v5387, 1.0
      %v5406 = vadd.f32 %v5389, 1.0
      %v5407 = vadd.f32 %v5391, 1.0
      %v5408 = vrcp.pop %v5392
      %v5409 = vrcp.pop %v5393
      %v5410 = vrcp.pop %v5394
      %v5411 = vrcp.pop %v5395
      %v5412 = vrcp.pop %v5396
      %v5413 = vrcp.pop %v5397
      %v5414 = vrcp.pop %v5398
      %v5415 = vrcp.pop %v5399
      %v5416 = vrcp.pop %v5400
      %v5417 = vrcp.pop %v5401
      %v5418 = vrcp.pop %v5402
      %v5419 = vrcp.pop %v5403
      %v5420 = vrcp.pop %v5404
      %v5421 = vrcp.pop %v5405
      %v5422 = vrcp.pop %v5406
      %v5423 = vrcp.pop %v5407
      %v5424 = vmul.f32 %v5227, %v5408
      %v5425 = vmul.f32 %v5230, %v5409
      %v5426 = vmul.f32 %v5233, %v5410
      %v5427 = vmul.f32 %v5236, %v5411
      %v5428 = vmul.f32 %v5239, %v5412
      %v5429 = vmul.f32 %v5242, %v5413
      %v5430 = vmul.f32 %v5245, %v5414
      %v5431 = vmul.f32 %v5248, %v5415
      %v5432 = vmul.f32 %v5251, %v5416
      %v5433 = vmul.f32 %v5254, %v5417
      %v5434 = vmul.f32 %v5257, %v5418
      %v5435 = vmul.f32 %v5260, %v5419
      %v5436 = vmul.f32 %v5263, %v5420
      %v5437 = vmul.f32 %v5266, %v5421
      %v5438 = vmul.f32 %v5269, %v5422
      %v5439 = vmul.f32 %v5272, %v5423
      %v5440 = vmul.f32 %v5424, %v5297
      %v5441 = vmul.f32 %v5425, %v5300
      %v5442 = vmul.f32 %v5426, %v5303
      %v5443 = vmul.f32 %v5427, %v5306
      %v5444 = vmul.f32 %v5428, %v5309
      %v5445 = vmul.f32 %v5429, %v5312
      %v5446 = vmul.f32 %v5430, %v5315
      %v5447 = vmul.f32 %v5431, %v5318
      %v5448 = vmul.f32 %v5432, %v5321
      %v5449 = vmul.f32 %v5433, %v5324
      %v5450 = vmul.f32 %v5434, %v5327
      %v5451 = vmul.f32 %v5435, %v5330
      %v5452 = vmul.f32 %v5436, %v5333
      %v5453 = vmul.f32 %v5437, %v5336
      %v5454 = vmul.f32 %v5438, %v5339
      %v5455 = vmul.f32 %v5439, %v5342
      %s5456 = scalar_lea.vmem %s4, 160
      %v5457 = vld [vmem:[%s5456] sm:$0xff]
      %v5458 = vld [vmem:[%s5456 + $0x8] sm:$0xff]
      %v5459 = vld [vmem:[%s5456 + $0x10] sm:$0xff]
      %v5460 = vld [vmem:[%s5456 + $0x18] sm:$0xff]
      %v5462 = vsel %vm335, %v5440, 0
      %v5465 = vsel %vm335, %v5441, 0
      %v5468 = vsel %vm335, %v5442, 0
      %v5471 = vsel %vm335, %v5443, 0
      %v5474 = vsel %vm335, %v5444, 0
      %v5477 = vsel %vm335, %v5445, 0
      %v5480 = vsel %vm335, %v5446, 0
      %v5483 = vsel %vm335, %v5447, 0
      %v5486 = vsel %vm335, %v5448, 0
      %v5489 = vsel %vm335, %v5449, 0
      %v5492 = vsel %vm335, %v5450, 0
      %v5495 = vsel %vm335, %v5451, 0
      %v5498 = vsel %vm335, %v5452, 0
      %v5501 = vsel %vm335, %v5453, 0
      %v5504 = vsel %vm335, %v5454, 0
      %v5507 = vsel %vm335, %v5455, 0
      %v5510 = vsel %vm335, %v5457, 0
      %v5513 = vsel %vm335, %v5458, 0
      %v5516 = vsel %vm335, %v5459, 0
      %v5519 = vsel %vm335, %v5460, 0
      %5521 = vmatpush.xpose.msra.mxu0 0.0
      %5522 = vmatpush.xpose.msra.mxu0 0.0
      %5523 = vmatpush.xpose.msra.mxu0 0.0
      %5524 = vmatpush.xpose.msra.mxu0 0.0
      %5525 = vmatpush.xpose.msra.mxu0 0.0
      %5526 = vmatpush.xpose.msra.mxu0 0.0
      %5527 = vmatpush.xpose.msra.mxu0 0.0
      %5528 = vmatpush.xpose.msra.mxu0 0.0
      %5529 = vmatpush.xpose.msra.mxu0 0.0
      %5530 = vmatpush.xpose.msra.mxu0 0.0
      %5531 = vmatpush.xpose.msra.mxu0 0.0
      %5532 = vmatpush.xpose.msra.mxu0 0.0
      %5533 = vmatpush.xpose.msra.mxu0 %v5519
      %5534 = vmatpush.xpose.msra.mxu0 %v5516
      %5535 = vmatpush.xpose.msra.mxu0 %v5513
      %5536 = vmatpush.xpose.msra.mxu0 %v5510
      %5537 = vmatmul.f32.gmra.mxu0 %v5462
      %v5538 = vpop.f32.mrf.mxu0
      %v5539 = vadd.f32 0.0, %v5538
      %5540 = vmatmul.f32.gmra.mxu0 %v5465
      %v5541 = vpop.f32.mrf.mxu0
      %v5542 = vadd.f32 0.0, %v5541
      %5543 = vmatmul.f32.gmra.mxu0 %v5468
      %v5544 = vpop.f32.mrf.mxu0
      %v5545 = vadd.f32 0.0, %v5544
      %5546 = vmatmul.f32.gmra.mxu0 %v5471
      %v5547 = vpop.f32.mrf.mxu0
      %v5548 = vadd.f32 0.0, %v5547
      %5549 = vmatmul.f32.gmra.mxu0 %v5474
      %v5550 = vpop.f32.mrf.mxu0
      %v5551 = vadd.f32 0.0, %v5550
      %5552 = vmatmul.f32.gmra.mxu0 %v5477
      %v5553 = vpop.f32.mrf.mxu0
      %v5554 = vadd.f32 0.0, %v5553
      %5555 = vmatmul.f32.gmra.mxu0 %v5480
      %v5556 = vpop.f32.mrf.mxu0
      %v5557 = vadd.f32 0.0, %v5556
      %5558 = vmatmul.f32.gmra.mxu0 %v5483
      %v5559 = vpop.f32.mrf.mxu0
      %v5560 = vadd.f32 0.0, %v5559
      %5561 = vmatmul.f32.gmra.mxu0 %v5486
      %v5562 = vpop.f32.mrf.mxu0
      %v5563 = vadd.f32 0.0, %v5562
      %5564 = vmatmul.f32.gmra.mxu0 %v5489
      %v5565 = vpop.f32.mrf.mxu0
      %v5566 = vadd.f32 0.0, %v5565
      %5567 = vmatmul.f32.gmra.mxu0 %v5492
      %v5568 = vpop.f32.mrf.mxu0
      %v5569 = vadd.f32 0.0, %v5568
      %5570 = vmatmul.f32.gmra.mxu0 %v5495
      %v5571 = vpop.f32.mrf.mxu0
      %v5572 = vadd.f32 0.0, %v5571
      %5573 = vmatmul.f32.gmra.mxu0 %v5498
      %v5574 = vpop.f32.mrf.mxu0
      %v5575 = vadd.f32 0.0, %v5574
      %5576 = vmatmul.f32.gmra.mxu0 %v5501
      %v5577 = vpop.f32.mrf.mxu0
      %v5578 = vadd.f32 0.0, %v5577
      %5579 = vmatmul.f32.gmra.mxu0 %v5504
      %v5580 = vpop.f32.mrf.mxu0
      %v5581 = vadd.f32 0.0, %v5580
      %5582 = vmatmul.f32.gmra.mxu0 %v5507
      %v5583 = vpop.f32.mrf.mxu0
      %v5584 = vadd.f32 0.0, %v5583
      %5585 = vdwg.mxu0
      %v5586 = vadd.f32 %v4851, %v5539
      %v5587 = vadd.f32 %v4852, %v5542
      %v5588 = vadd.f32 %v4853, %v5545
      %v5589 = vadd.f32 %v4854, %v5548
      %v5590 = vadd.f32 %v4855, %v5551
      %v5591 = vadd.f32 %v4856, %v5554
      %v5592 = vadd.f32 %v4857, %v5557
      %v5593 = vadd.f32 %v4858, %v5560
      %v5594 = vadd.f32 %v4859, %v5563
      %v5595 = vadd.f32 %v4860, %v5566
      %v5596 = vadd.f32 %v4861, %v5569
      %v5597 = vadd.f32 %v4862, %v5572
      %v5598 = vadd.f32 %v4863, %v5575
      %v5599 = vadd.f32 %v4864, %v5578
      %v5600 = vadd.f32 %v4865, %v5581
      %v5601 = vadd.f32 %v4866, %v5584
      %v5602 = vmul.f32 %v5586, %v5586
      %v5603 = vmul.f32 %v5587, %v5587
      %v5604 = vmul.f32 %v5588, %v5588
      %v5605 = vmul.f32 %v5589, %v5589
      %v5606 = vmul.f32 %v5590, %v5590
      %v5607 = vmul.f32 %v5591, %v5591
      %v5608 = vmul.f32 %v5592, %v5592
      %v5609 = vmul.f32 %v5593, %v5593
      %v5610 = vmul.f32 %v5594, %v5594
      %v5611 = vmul.f32 %v5595, %v5595
      %v5612 = vmul.f32 %v5596, %v5596
      %v5613 = vmul.f32 %v5597, %v5597
      %v5614 = vmul.f32 %v5598, %v5598
      %v5615 = vmul.f32 %v5599, %v5599
      %v5616 = vmul.f32 %v5600, %v5600
      %v5617 = vmul.f32 %v5601, %v5601
      %v5618 = vsel %vm563, %v5602, 0.0
      %5619 = vadd.xlane.f32.xlu0 %v5618
      %v5620 = vpop.xlane.xlu0 %5619
      %v5621 = vsel %vm563, %v5603, 0.0
      %5622 = vadd.xlane.f32.xlu0 %v5621
      %v5623 = vpop.xlane.xlu0 %5622
      %v5624 = vsel %vm563, %v5604, 0.0
      %5625 = vadd.xlane.f32.xlu0 %v5624
      %v5626 = vpop.xlane.xlu0 %5625
      %v5627 = vsel %vm563, %v5605, 0.0
      %5628 = vadd.xlane.f32.xlu0 %v5627
      %v5629 = vpop.xlane.xlu0 %5628
      %v5630 = vsel %vm563, %v5606, 0.0
      %5631 = vadd.xlane.f32.xlu0 %v5630
      %v5632 = vpop.xlane.xlu0 %5631
      %v5633 = vsel %vm563, %v5607, 0.0
      %5634 = vadd.xlane.f32.xlu0 %v5633
      %v5635 = vpop.xlane.xlu0 %5634
      %v5636 = vsel %vm563, %v5608, 0.0
      %5637 = vadd.xlane.f32.xlu0 %v5636
      %v5638 = vpop.xlane.xlu0 %5637
      %v5639 = vsel %vm563, %v5609, 0.0
      %5640 = vadd.xlane.f32.xlu0 %v5639
      %v5641 = vpop.xlane.xlu0 %5640
      %v5642 = vsel %vm563, %v5610, 0.0
      %5643 = vadd.xlane.f32.xlu0 %v5642
      %v5644 = vpop.xlane.xlu0 %5643
      %v5645 = vsel %vm563, %v5611, 0.0
      %5646 = vadd.xlane.f32.xlu0 %v5645
      %v5647 = vpop.xlane.xlu0 %5646
      %v5648 = vsel %vm563, %v5612, 0.0
      %5649 = vadd.xlane.f32.xlu0 %v5648
      %v5650 = vpop.xlane.xlu0 %5649
      %v5651 = vsel %vm563, %v5613, 0.0
      %5652 = vadd.xlane.f32.xlu0 %v5651
      %v5653 = vpop.xlane.xlu0 %5652
      %v5654 = vsel %vm563, %v5614, 0.0
      %5655 = vadd.xlane.f32.xlu0 %v5654
      %v5656 = vpop.xlane.xlu0 %5655
      %v5657 = vsel %vm563, %v5615, 0.0
      %5658 = vadd.xlane.f32.xlu0 %v5657
      %v5659 = vpop.xlane.xlu0 %5658
      %v5660 = vsel %vm563, %v5616, 0.0
      %5661 = vadd.xlane.f32.xlu0 %v5660
      %v5662 = vpop.xlane.xlu0 %5661
      %v5663 = vsel %vm563, %v5617, 0.0
      %5664 = vadd.xlane.f32.xlu0 %v5663
      %v5665 = vpop.xlane.xlu0 %5664
      %v5666 = vmul.f32 %v5620, %v618
      %v5667 = vmul.f32 %v5623, %v618
      %v5668 = vmul.f32 %v5626, %v618
      %v5669 = vmul.f32 %v5629, %v618
      %v5670 = vmul.f32 %v5632, %v618
      %v5671 = vmul.f32 %v5635, %v618
      %v5672 = vmul.f32 %v5638, %v618
      %v5673 = vmul.f32 %v5641, %v618
      %v5674 = vmul.f32 %v5644, %v618
      %v5675 = vmul.f32 %v5647, %v618
      %v5676 = vmul.f32 %v5650, %v618
      %v5677 = vmul.f32 %v5653, %v618
      %v5678 = vmul.f32 %v5656, %v618
      %v5679 = vmul.f32 %v5659, %v618
      %v5680 = vmul.f32 %v5662, %v618
      %v5681 = vmul.f32 %v5665, %v618
      %v5682 = vadd.f32 %v5666, 1e-06
      %v5683 = vadd.f32 %v5667, 1e-06
      %v5684 = vadd.f32 %v5668, 1e-06
      %v5685 = vadd.f32 %v5669, 1e-06
      %v5686 = vadd.f32 %v5670, 1e-06
      %v5687 = vadd.f32 %v5671, 1e-06
      %v5688 = vadd.f32 %v5672, 1e-06
      %v5689 = vadd.f32 %v5673, 1e-06
      %v5690 = vadd.f32 %v5674, 1e-06
      %v5691 = vadd.f32 %v5675, 1e-06
      %v5692 = vadd.f32 %v5676, 1e-06
      %v5693 = vadd.f32 %v5677, 1e-06
      %v5694 = vadd.f32 %v5678, 1e-06
      %v5695 = vadd.f32 %v5679, 1e-06
      %v5696 = vadd.f32 %v5680, 1e-06
      %v5697 = vadd.f32 %v5681, 1e-06
      %v5698 = vrsqrt.pop %v5682
      %v5699 = vmul.f32 %v5698, %v5682
      %v5700 = vmul.f32 %v5699, %v5698
      %v5701 = vmul.f32 0.5, %v5700
      %v5702 = vsub.f32 1.5, %v5701
      %v5703 = vmul.f32 %v5698, %v5702
      %vm5704 = vweird.f32 %v5682
      %vm5705 = vweird.f32 %v5698
      %vm5706 = vmor %vm5704, %vm5705
      %v5707 = vsel %vm5706, %v5698, %v5703
      %v5708 = vrsqrt.pop %v5683
      %v5709 = vmul.f32 %v5708, %v5683
      %v5710 = vmul.f32 %v5709, %v5708
      %v5711 = vmul.f32 0.5, %v5710
      %v5712 = vsub.f32 1.5, %v5711
      %v5713 = vmul.f32 %v5708, %v5712
      %vm5714 = vweird.f32 %v5683
      %vm5715 = vweird.f32 %v5708
      %vm5716 = vmor %vm5714, %vm5715
      %v5717 = vsel %vm5716, %v5708, %v5713
      %v5718 = vrsqrt.pop %v5684
      %v5719 = vmul.f32 %v5718, %v5684
      %v5720 = vmul.f32 %v5719, %v5718
      %v5721 = vmul.f32 0.5, %v5720
      %v5722 = vsub.f32 1.5, %v5721
      %v5723 = vmul.f32 %v5718, %v5722
      %vm5724 = vweird.f32 %v5684
      %vm5725 = vweird.f32 %v5718
      %vm5726 = vmor %vm5724, %vm5725
      %v5727 = vsel %vm5726, %v5718, %v5723
      %v5728 = vrsqrt.pop %v5685
      %v5729 = vmul.f32 %v5728, %v5685
      %v5730 = vmul.f32 %v5729, %v5728
      %v5731 = vmul.f32 0.5, %v5730
      %v5732 = vsub.f32 1.5, %v5731
      %v5733 = vmul.f32 %v5728, %v5732
      %vm5734 = vweird.f32 %v5685
      %vm5735 = vweird.f32 %v5728
      %vm5736 = vmor %vm5734, %vm5735
      %v5737 = vsel %vm5736, %v5728, %v5733
      %v5738 = vrsqrt.pop %v5686
      %v5739 = vmul.f32 %v5738, %v5686
      %v5740 = vmul.f32 %v5739, %v5738
      %v5741 = vmul.f32 0.5, %v5740
      %v5742 = vsub.f32 1.5, %v5741
      %v5743 = vmul.f32 %v5738, %v5742
      %vm5744 = vweird.f32 %v5686
      %vm5745 = vweird.f32 %v5738
      %vm5746 = vmor %vm5744, %vm5745
      %v5747 = vsel %vm5746, %v5738, %v5743
      %v5748 = vrsqrt.pop %v5687
      %v5749 = vmul.f32 %v5748, %v5687
      %v5750 = vmul.f32 %v5749, %v5748
      %v5751 = vmul.f32 0.5, %v5750
      %v5752 = vsub.f32 1.5, %v5751
      %v5753 = vmul.f32 %v5748, %v5752
      %vm5754 = vweird.f32 %v5687
      %vm5755 = vweird.f32 %v5748
      %vm5756 = vmor %vm5754, %vm5755
      %v5757 = vsel %vm5756, %v5748, %v5753
      %v5758 = vrsqrt.pop %v5688
      %v5759 = vmul.f32 %v5758, %v5688
      %v5760 = vmul.f32 %v5759, %v5758
      %v5761 = vmul.f32 0.5, %v5760
      %v5762 = vsub.f32 1.5, %v5761
      %v5763 = vmul.f32 %v5758, %v5762
      %vm5764 = vweird.f32 %v5688
      %vm5765 = vweird.f32 %v5758
      %vm5766 = vmor %vm5764, %vm5765
      %v5767 = vsel %vm5766, %v5758, %v5763
      %v5768 = vrsqrt.pop %v5689
      %v5769 = vmul.f32 %v5768, %v5689
      %v5770 = vmul.f32 %v5769, %v5768
      %v5771 = vmul.f32 0.5, %v5770
      %v5772 = vsub.f32 1.5, %v5771
      %v5773 = vmul.f32 %v5768, %v5772
      %vm5774 = vweird.f32 %v5689
      %vm5775 = vweird.f32 %v5768
      %vm5776 = vmor %vm5774, %vm5775
      %v5777 = vsel %vm5776, %v5768, %v5773
      %v5778 = vrsqrt.pop %v5690
      %v5779 = vmul.f32 %v5778, %v5690
      %v5780 = vmul.f32 %v5779, %v5778
      %v5781 = vmul.f32 0.5, %v5780
      %v5782 = vsub.f32 1.5, %v5781
      %v5783 = vmul.f32 %v5778, %v5782
      %vm5784 = vweird.f32 %v5690
      %vm5785 = vweird.f32 %v5778
      %vm5786 = vmor %vm5784, %vm5785
      %v5787 = vsel %vm5786, %v5778, %v5783
      %v5788 = vrsqrt.pop %v5691
      %v5789 = vmul.f32 %v5788, %v5691
      %v5790 = vmul.f32 %v5789, %v5788
      %v5791 = vmul.f32 0.5, %v5790
      %v5792 = vsub.f32 1.5, %v5791
      %v5793 = vmul.f32 %v5788, %v5792
      %vm5794 = vweird.f32 %v5691
      %vm5795 = vweird.f32 %v5788
      %vm5796 = vmor %vm5794, %vm5795
      %v5797 = vsel %vm5796, %v5788, %v5793
      %v5798 = vrsqrt.pop %v5692
      %v5799 = vmul.f32 %v5798, %v5692
      %v5800 = vmul.f32 %v5799, %v5798
      %v5801 = vmul.f32 0.5, %v5800
      %v5802 = vsub.f32 1.5, %v5801
      %v5803 = vmul.f32 %v5798, %v5802
      %vm5804 = vweird.f32 %v5692
      %vm5805 = vweird.f32 %v5798
      %vm5806 = vmor %vm5804, %vm5805
      %v5807 = vsel %vm5806, %v5798, %v5803
      %v5808 = vrsqrt.pop %v5693
      %v5809 = vmul.f32 %v5808, %v5693
      %v5810 = vmul.f32 %v5809, %v5808
      %v5811 = vmul.f32 0.5, %v5810
      %v5812 = vsub.f32 1.5, %v5811
      %v5813 = vmul.f32 %v5808, %v5812
      %vm5814 = vweird.f32 %v5693
      %vm5815 = vweird.f32 %v5808
      %vm5816 = vmor %vm5814, %vm5815
      %v5817 = vsel %vm5816, %v5808, %v5813
      %v5818 = vrsqrt.pop %v5694
      %v5819 = vmul.f32 %v5818, %v5694
      %v5820 = vmul.f32 %v5819, %v5818
      %v5821 = vmul.f32 0.5, %v5820
      %v5822 = vsub.f32 1.5, %v5821
      %v5823 = vmul.f32 %v5818, %v5822
      %vm5824 = vweird.f32 %v5694
      %vm5825 = vweird.f32 %v5818
      %vm5826 = vmor %vm5824, %vm5825
      %v5827 = vsel %vm5826, %v5818, %v5823
      %v5828 = vrsqrt.pop %v5695
      %v5829 = vmul.f32 %v5828, %v5695
      %v5830 = vmul.f32 %v5829, %v5828
      %v5831 = vmul.f32 0.5, %v5830
      %v5832 = vsub.f32 1.5, %v5831
      %v5833 = vmul.f32 %v5828, %v5832
      %vm5834 = vweird.f32 %v5695
      %vm5835 = vweird.f32 %v5828
      %vm5836 = vmor %vm5834, %vm5835
      %v5837 = vsel %vm5836, %v5828, %v5833
      %v5838 = vrsqrt.pop %v5696
      %v5839 = vmul.f32 %v5838, %v5696
      %v5840 = vmul.f32 %v5839, %v5838
      %v5841 = vmul.f32 0.5, %v5840
      %v5842 = vsub.f32 1.5, %v5841
      %v5843 = vmul.f32 %v5838, %v5842
      %vm5844 = vweird.f32 %v5696
      %vm5845 = vweird.f32 %v5838
      %vm5846 = vmor %vm5844, %vm5845
      %v5847 = vsel %vm5846, %v5838, %v5843
      %v5848 = vrsqrt.pop %v5697
      %v5849 = vmul.f32 %v5848, %v5697
      %v5850 = vmul.f32 %v5849, %v5848
      %v5851 = vmul.f32 0.5, %v5850
      %v5852 = vsub.f32 1.5, %v5851
      %v5853 = vmul.f32 %v5848, %v5852
      %vm5854 = vweird.f32 %v5697
      %vm5855 = vweird.f32 %v5848
      %vm5856 = vmor %vm5854, %vm5855
      %v5857 = vsel %vm5856, %v5848, %v5853
      %v5858 = vmul.f32 %v5586, %v5707
      %v5859 = vmul.f32 %v5587, %v5717
      %v5860 = vmul.f32 %v5588, %v5727
      %v5861 = vmul.f32 %v5589, %v5737
      %v5862 = vmul.f32 %v5590, %v5747
      %v5863 = vmul.f32 %v5591, %v5757
      %v5864 = vmul.f32 %v5592, %v5767
      %v5865 = vmul.f32 %v5593, %v5777
      %v5866 = vmul.f32 %v5594, %v5787
      %v5867 = vmul.f32 %v5595, %v5797
      %v5868 = vmul.f32 %v5596, %v5807
      %v5869 = vmul.f32 %v5597, %v5817
      %v5870 = vmul.f32 %v5598, %v5827
      %v5871 = vmul.f32 %v5599, %v5837
      %v5872 = vmul.f32 %v5600, %v5847
      %v5873 = vmul.f32 %v5601, %v5857
      %v5874 = vperm.slane %v228, 4
      %v5875 = vmul.f32 %v5858, %v5874
      %v5876 = vmul.f32 %v5859, %v5874
      %v5877 = vmul.f32 %v5860, %v5874
      %v5878 = vmul.f32 %v5861, %v5874
      %v5879 = vmul.f32 %v5862, %v5874
      %v5880 = vmul.f32 %v5863, %v5874
      %v5881 = vmul.f32 %v5864, %v5874
      %v5882 = vmul.f32 %v5865, %v5874
      %v5883 = vmul.f32 %v5866, %v5874
      %v5884 = vmul.f32 %v5867, %v5874
      %v5885 = vmul.f32 %v5868, %v5874
      %v5886 = vmul.f32 %v5869, %v5874
      %v5887 = vmul.f32 %v5870, %v5874
      %v5888 = vmul.f32 %v5871, %v5874
      %v5889 = vmul.f32 %v5872, %v5874
      %v5890 = vmul.f32 %v5873, %v5874
      %vm5891 = vcmp.eq.s32.totalorder %v482, %v450
      %vm5892 = vcmp.eq.s32.totalorder %v482, %v451
      %v5893 = vsel %vm5891, 0.125, 0.0
      %v5894 = vsel %vm5892, 0.125, 0.0
      %v5895 = vadd.f32 %v3062, %v5875
      %v5896 = vadd.f32 %v3063, %v5876
      %v5897 = vadd.f32 %v3064, %v5877
      %v5898 = vadd.f32 %v3065, %v5878
      %v5899 = vadd.f32 %v3066, %v5879
      %v5900 = vadd.f32 %v3067, %v5880
      %v5901 = vadd.f32 %v3068, %v5881
      %v5902 = vadd.f32 %v3069, %v5882
      %v5903 = vadd.f32 %v3070, %v5883
      %v5904 = vadd.f32 %v3071, %v5884
      %v5905 = vadd.f32 %v3072, %v5885
      %v5906 = vadd.f32 %v3073, %v5886
      %v5907 = vadd.f32 %v3074, %v5887
      %v5908 = vadd.f32 %v3075, %v5888
      %v5909 = vadd.f32 %v3076, %v5889
      %v5910 = vadd.f32 %v3077, %v5890
      %5911 = vmatpush.msra.mxu0 %v5910
      %5912 = vmatpush.msra.mxu0 %v5909
      %5913 = vmatpush.msra.mxu0 %v5908
      %5914 = vmatpush.msra.mxu0 %v5907
      %5915 = vmatpush.msra.mxu0 %v5906
      %5916 = vmatpush.msra.mxu0 %v5905
      %5917 = vmatpush.msra.mxu0 %v5904
      %5918 = vmatpush.msra.mxu0 %v5903
      %5919 = vmatpush.msra.mxu0 %v5902
      %5920 = vmatpush.msra.mxu0 %v5901
      %5921 = vmatpush.msra.mxu0 %v5900
      %5922 = vmatpush.msra.mxu0 %v5899
      %5923 = vmatpush.msra.mxu0 %v5898
      %5924 = vmatpush.msra.mxu0 %v5897
      %5925 = vmatpush.msra.mxu0 %v5896
      %5926 = vmatpush.msra.mxu0 %v5895
      %5927 = vmatmul.f32.gmra.mxu0 %v5893
      %v5928 = vpop.f32.mrf.mxu0
      %v5929 = vadd.f32 0.0, %v5928
      %5930 = vmatmul.f32.gmra.mxu0 %v5894
      %v5931 = vpop.f32.mrf.mxu0
      %v5932 = vadd.f32 0.0, %v5931
      %5933 = vdwg.mxu0
      %5934 = vst.msk [vmem:[%s226] sm:$0xff] %vm563, %v5929
      %5935 = vst.msk [vmem:[%s226 + $0x8] sm:$0xff] %vm563, %v5932
      %s5936 = smul.u32 2, %s16
      %p5937 = scmp.lt.s32.totalorder %s5936, 7
      %s5938 = scalar_select %p5937, %s5936, 7
      %s5939 = smul.addr %s5938, 8
      %s5940 = scalar_lea.vmem %s5, %s5939
      // Predicated region
      $region41: #{embed_forward.1} parent=39 // pred_check
        %p5941 = pneg %p144
      $region42: #{embed_forward.1} parent=39 // pred_check_branch
        %5943 = sbr.rel (%p5941) target = $region44
      $region43: #{embed_forward.1} parent=39 // pred_region
        %s5944 = smul.u32 2, %s16
      $region44: #{embed_forward.1} parent=39 // pred_fallthru
        _
    $region40: #{embed_forward.1} parent=5 // pred_fallthru
      _
    %p5945 = scmp.le.s32.totalorder 2, %s11
    // Predicated region
    $region45: #{embed_forward.1} parent=5 // pred_check
      %p5946 = pneg %p5945
    $region46: #{embed_forward.1} parent=5 // pred_check_branch
      %5948 = sbr.rel (%p5946) target = $region48
    $region47: #{embed_forward.1} parent=5 // pred_region
      %s5949 = ssub.s32 %s11, 2
      // Predicated region
      $region49: #{embed_forward.1} parent=47 // pred_check
        %p5950 = pneg %p150
      $region50: #{embed_forward.1} parent=47 // pred_check_branch
        %5952 = sbr.rel (%p5950) target = $region52
      $region51: #{embed_forward.1} parent=47 // pred_region
        %s5953 = smul.u32 2, %s17
        %p5954 = scmp.lt.s32.totalorder %s5953, 7
        %s5955 = scalar_select %p5954, %s5953, 7
        %s5956 = smul.addr %s5955, 8
        %s5957 = scalar_lea.vmem %s5, %s5956
      $region52: #{embed_forward.1} parent=47 // pred_fallthru
        _
    $region48: #{embed_forward.1} parent=5 // pred_fallthru
      _
  $region6: #{embed_forward.1} parent=0 // loop_footer
    %s15 = sadd.s32 1, %s11
  $region7: #{embed_forward.1} parent=0 // loop_footer_branch
    %10 = sbr.rel target = $region3
  $region8: #{embed_forward.1} parent=0 // loop_exit
    _

</llo_original>
